<compile_context>
chip_gen: v7x
topology: tpu7x:2x2x1
jax: 0.10.0
libtpu: 0.0.40
codegen_flags: <defaults>
</compile_context>

<pallas_src>
import functools

import jax
import jax.numpy as jnp
from jax.experimental import pallas as pl
from jax.experimental.pallas import tpu as pltpu

NEG_SLOPE = 0.01      # nn.LeakyReLU default
BN_EPS = 1e-5         # nn.BatchNorm1d default


def _leaky_relu(h):
    return jnp.where(h > 0, h, NEG_SLOPE * h)


def _fold_bn(W, b, s, sh):
    # (xW + b)*s + sh  ==  x(W*s) + (b*s + sh)   (s, sh broadcast per column)
    return W * s, b * s + sh


def init_params(key, input_dim, latent_dim, hidden_dims):
    """Deterministic synthetic parameters matching the nn.Module's shapes."""

    def linear(k, fan_in, fan_out):
        k1, k2 = jax.random.split(k)
        bound = 1.0 / float(fan_in) ** 0.5
        W = jax.random.uniform(k1, (fan_in, fan_out), jnp.float32, -bound, bound)
        b = jax.random.uniform(k2, (1, fan_out), jnp.float32, -bound, bound)
        return W, b

    def batchnorm_folded(k, dim):
        # Eval-mode BN: non-trivial gamma/beta/running stats folded to scale/shift.
        k1, k2, k3, k4 = jax.random.split(k, 4)
        gamma = 1.0 + 0.1 * jax.random.normal(k1, (1, dim), jnp.float32)
        beta = 0.1 * jax.random.normal(k2, (1, dim), jnp.float32)
        rm = 0.1 * jax.random.normal(k3, (1, dim), jnp.float32)
        rv = 1.0 + 0.1 * jax.random.uniform(k4, (1, dim), jnp.float32)
        scale = gamma / jnp.sqrt(rv + BN_EPS)
        shift = beta - rm * scale
        return scale, shift

    params = {"encoder": [], "decoder": []}
    keys = jax.random.split(key, 64)
    ki = 0

    prev = input_dim
    for dim in hidden_dims:
        W, b = linear(keys[ki], prev, dim); ki += 1
        s, sh = batchnorm_folded(keys[ki], dim); ki += 1
        params["encoder"].append((W, b, s, sh))
        prev = dim

    params["mu_w"], params["mu_b"] = linear(keys[ki], prev, latent_dim); ki += 1
    params["lv_w"], params["lv_b"] = linear(keys[ki], prev, latent_dim); ki += 1

    prev = latent_dim
    for dim in reversed(hidden_dims):
        W, b = linear(keys[ki], prev, dim); ki += 1
        s, sh = batchnorm_folded(keys[ki], dim); ki += 1
        params["decoder"].append((W, b, s, sh))
        prev = dim

    params["out_w"], params["out_b"] = linear(keys[ki], prev, input_dim); ki += 1
    return params


# ---------------------------------------------------------------------------
# Kernel
# ---------------------------------------------------------------------------

def _vae_kernel(xe_ref, w_ref, b_ref, hw_ref, hb_ref, mulv_ref, xrec_ref, *,
                n_enc, n_dec, P, PL, PX):
    """One batch tile: encoder -> fused (mu|log_var) -> reparam -> decoder."""
    f32 = jnp.float32
    bf16 = jnp.bfloat16

    xe = xe_ref[...]                       # (tm, P) bf16 : [ eps | x | 0 ]
    h = xe
    li = 0

    # Encoder: [Linear(+folded BN) -> LeakyReLU -> Dropout(eval = id)] * n_enc
    for _ in range(n_enc):
        acc = jnp.dot(h, w_ref[li], preferred_element_type=f32) + b_ref[li]
        h = _leaky_relu(acc).astype(bf16)
        li += 1

    # Fused latent heads: single 2*PL-wide MXU pass -> [ mu | log_var ].
    mulv = jnp.dot(h, hw_ref[...], preferred_element_type=f32) + hb_ref[...]
    mulv_ref[...] = mulv                   # early, lane-dense, unmasked store

    mu = mulv[:, :PL]
    log_var = mulv[:, PL:]

    # Reparameterize: z = mu + eps * exp(0.5 * log_var).
    # xe lanes [0:latent_dim] hold eps; the x lanes (>= latent_dim) leak into
    # z's padded lanes but hit zero rows of the first decoder weight, so they
    # never propagate.
    eps = xe[:, :PL].astype(f32)
    z = mu + eps * jnp.exp(0.5 * log_var)  # (tm, PL) f32

    # Decoder hidden layers (first layer contracts only PL rows).
    h = z.astype(bf16)
    k = PL
    for _ in range(n_dec):
        acc = jnp.dot(h, w_ref[li, :k, :], preferred_element_type=f32) + b_ref[li]
        h = _leaky_relu(acc).astype(bf16)
        k = P
        li += 1

    # Final reconstruction layer (no BN / activation), only PX output columns.
    xrec_ref[...] = (
        jnp.dot(h, w_ref[li, :k, :PX], preferred_element_type=f32)
        + b_ref[li, :, :PX]
    )


# ---------------------------------------------------------------------------
# Wrapper
# ---------------------------------------------------------------------------

def tabular_vae_forward(x, eps, params, *, tm=256):
    """Returns (x_reconstructed, mu, log_var) — same as TabularVAE.forward (eval)."""
    enc_layers = params["encoder"]
    dec_layers = params["decoder"]
    n_enc, n_dec = len(enc_layers), len(dec_layers)

    B, input_dim = x.shape
    latent_dim = params["mu_b"].shape[-1]
    hidden = [W.shape[1] for (W, _, _, _) in enc_layers]

    # Common padded width.  input_dim + latent_dim is included so the packed
    # [eps | x] input slab always fits in P lanes.
    P = 128 * pl.cdiv(max([input_dim, latent_dim, input_dim + latent_dim] + hidden), 128)
    PL = 128 * pl.cdiv(latent_dim, 128)   # per-half width of the fused latent head
    PX = 128 * pl.cdiv(input_dim, 128)    # reconstruction output width

    dt_w = jnp.bfloat16                   # MXU-operand dtype for weights/activations

    def pad_w(W, rows, cols, roff=0, coff=0):
        out = jnp.zeros((rows, cols), jnp.float32)
        out = out.at[roff:roff + W.shape[0], coff:coff + W.shape[1]].set(
            W.astype(jnp.float32))
        return out.astype(dt_w)

    def pad_b(b, cols, coff=0):
        out = jnp.zeros((1, cols), jnp.float32)
        return out.at[:, coff:coff + b.shape[-1]].set(
            b.reshape(1, -1).astype(jnp.float32))

    # ---- Pack encoder / decoder / output-layer weights into uniform slabs ----
    ws, bs = [], []
    roff = latent_dim                     # x lives at lanes [latent_dim : latent_dim+input_dim]
    for (W, b, s, sh) in enc_layers:
        Wf, bf = _fold_bn(W, b, s, sh)
        ws.append(pad_w(Wf, P, P, roff=roff)); bs.append(pad_b(bf, P))
        roff = 0

    # Fused latent heads: [W_mu | W_lv] -> (P, 2*PL), biases -> (1, 2*PL), f32 bias.
    head_w = jnp.zeros((P, 2 * PL), jnp.float32)
    head_w = head_w.at[roff:roff + params["mu_w"].shape[0], 0:latent_dim].set(params["mu_w"])
    head_w = head_w.at[roff:roff + params["lv_w"].shape[0], PL:PL + latent_dim].set(params["lv_w"])
    head_w = head_w.astype(dt_w)
    head_b = jnp.zeros((1, 2 * PL), jnp.float32)
    head_b = head_b.at[:, 0:latent_dim].set(params["mu_b"].reshape(1, -1))
    head_b = head_b.at[:, PL:PL + latent_dim].set(params["lv_b"].reshape(1, -1))

    for (W, b, s, sh) in dec_layers:
        Wf, bf = _fold_bn(W, b, s, sh)
        ws.append(pad_w(Wf, P, P)); bs.append(pad_b(bf, P))
    ws.append(pad_w(params["out_w"], P, P)); bs.append(pad_b(params["out_b"], P))

    n_mat = len(ws)                       # n_enc + n_dec + 1
    w_all = jnp.stack(ws)                 # (n_mat, P, P)  bf16
    b_all = jnp.stack(bs)                 # (n_mat, 1, P)  f32   <-- bug fix (was 4-D)

    # ---- Pack x and eps into one bf16 input slab:  [ eps | x | 0 ] ----------
    Bp = tm * pl.cdiv(B, tm)
    xe = jnp.zeros((Bp, P), jnp.float32)
    xe = xe.at[:B, :latent_dim].set(eps)
    xe = xe.at[:B, latent_dim:latent_dim + input_dim].set(x)
    xe = xe.astype(dt_w)

    kernel = functools.partial(_vae_kernel, n_enc=n_enc, n_dec=n_dec,
                               P=P, PL=PL, PX=PX)

    mulv, xrec = pl.pallas_call(
        kernel,
        out_shape=(
            jax.ShapeDtypeStruct((Bp, 2 * PL), jnp.float32),   # [ mu | log_var ]
            jax.ShapeDtypeStruct((Bp, PX), jnp.float32),       # x_reconstructed
        ),
        grid=(Bp // tm,),
        in_specs=[
            pl.BlockSpec((tm, P), lambda i: (i, 0)),                     # packed x|eps tile
            pl.BlockSpec((n_mat, P, P), lambda i: (0, 0, 0),
                         pipeline_mode=pl.Buffered(1)),                  # weight slab (resident)
            pl.BlockSpec((n_mat, 1, P), lambda i: (0, 0, 0),
                         pipeline_mode=pl.Buffered(1)),                  # bias slab   (resident)
            pl.BlockSpec((P, 2 * PL), lambda i: (0, 0),
                         pipeline_mode=pl.Buffered(1)),                  # fused head W
            pl.BlockSpec((1, 2 * PL), lambda i: (0, 0),
                         pipeline_mode=pl.Buffered(1)),                  # fused head b
        ],
        out_specs=(
            pl.BlockSpec((tm, 2 * PL), lambda i: (i, 0)),
            pl.BlockSpec((tm, PX), lambda i: (i, 0)),
        ),
        compiler_params=pltpu.CompilerParams(
            dimension_semantics=("parallel",),
        ),
    )(xe, w_all, b_all, head_w, head_b)

    mu = mulv[:B, :latent_dim]
    log_var = mulv[:B, PL:PL + latent_dim]
    x_reconstructed = xrec[:B, :input_dim]
    return x_reconstructed, mu, log_var


# ---------------------------------------------------------------------------
# Pure-JAX reference (f32, unfolded, mirrors the nn.Module eval-mode forward)
# ---------------------------------------------------------------------------

def reference_forward(x, eps, params):
    h = x
    for W, b, s, sh in params["encoder"]:
        h = _leaky_relu((h @ W + b) * s + sh)
    mu = h @ params["mu_w"] + params["mu_b"]
    log_var = h @ params["lv_w"] + params["lv_b"]
    z = mu + eps * jnp.exp(0.5 * log_var)
    h = z
    for W, b, s, sh in params["decoder"]:
        h = _leaky_relu((h @ W + b) * s + sh)
    xrec = h @ params["out_w"] + params["out_b"]
    return xrec, mu, log_var


if __name__ == "__main__":
    # Small feature dims consistent with the module; batch chosen so the grid
    # has 2 tiles of tm=256 rows (keeps both v7x TensorCores busy).
    batch = 512
    input_dim = 16
    latent_dim = 32
    hidden_dims = [64, 128, 64]
    tm = 256

    key = jax.random.PRNGKey(0)
    kx, keps = jax.random.split(key)
    x = jax.random.normal(kx, (batch, input_dim), jnp.float32)
    # reparameterize()'s randn_like noise, generated deterministically host-side.
    eps = jax.random.normal(keps, (batch, latent_dim), jnp.float32)

    params = init_params(jax.random.PRNGKey(42), input_dim, latent_dim, hidden_dims)

    xrec, mu, log_var = tabular_vae_forward(x, eps, params, tm=tm)
    jax.block_until_ready((xrec, mu, log_var))

    # Sanity check against the f32 reference (tolerances loosened for bf16 MXU).
    xrec_r, mu_r, lv_r = reference_forward(x, eps, params)
    assert xrec.shape == (batch, input_dim)
    assert mu.shape == (batch, latent_dim)
    assert log_var.shape == (batch, latent_dim)
    assert jnp.allclose(mu, mu_r, atol=3e-2, rtol=3e-2)
    assert jnp.allclose(log_var, lv_r, atol=3e-2, rtol=3e-2)
    assert jnp.allclose(xrec, xrec_r, atol=3e-2, rtol=3e-2)

    print("KERNEL_OK")
</pallas_src>

<mosaic_0001>
module attributes {stable_mosaic.version = 11 : i64} {
  func.func @_vae_kernel(%arg0: i32, %arg1: memref<256x128xbf16, #tpu.memory_space<vmem>>, %arg2: memref<7x128x128xbf16, #tpu.memory_space<vmem>>, %arg3: memref<7x1x128xf32, #tpu.memory_space<vmem>>, %arg4: memref<128x256xbf16, #tpu.memory_space<vmem>>, %arg5: memref<1x256xf32, #tpu.memory_space<vmem>>, %arg6: memref<256x256xf32, #tpu.memory_space<vmem>>, %arg7: memref<256x128xf32, #tpu.memory_space<vmem>>) attributes {dimension_semantics = [#tpu.dimension_semantics<parallel>], iteration_bounds = array<i64: 2>, scalar_prefetch = 0 : i64, scratch_operands = 0 : i64, tpu.core_type = #tpu.core_type<tc>, window_params = [{transform_indices = @transform_0, window_bounds = array<i64: 256, 128>}, {pipeline_mode = #tpu.pipeline_mode<synchronous>, transform_indices = @transform_1, window_bounds = array<i64: 7, 128, 128>}, {pipeline_mode = #tpu.pipeline_mode<synchronous>, transform_indices = @transform_2, window_bounds = array<i64: 7, 1, 128>}, {pipeline_mode = #tpu.pipeline_mode<synchronous>, transform_indices = @transform_3, window_bounds = array<i64: 128, 256>}, {pipeline_mode = #tpu.pipeline_mode<synchronous>, transform_indices = @transform_4, window_bounds = array<i64: 1, 256>}, {transform_indices = @transform_5, window_bounds = array<i64: 256, 256>}, {transform_indices = @transform_6, window_bounds = array<i64: 256, 128>}]} {
    %c0 = arith.constant 0 : index
    %c0_0 = arith.constant 0 : index
    %0 = vector.load %arg1[%c0, %c0_0] : memref<256x128xbf16, #tpu.memory_space<vmem>>, vector<256x128xbf16>
    %c0_1 = arith.constant 0 : index
    %c0_2 = arith.constant 0 : index
    %c0_3 = arith.constant 0 : index
    %1 = vector.load %arg2[%c0_1, %c0_2, %c0_3] : memref<7x128x128xbf16, #tpu.memory_space<vmem>>, vector<1x128x128xbf16>
    %2 = vector.shape_cast %1 : vector<1x128x128xbf16> to vector<128x128xbf16>
    %cst = arith.constant dense<0.000000e+00> : vector<256x128xf32>
    %3 = tpu.matmul %0, %2, %cst {dimension_numbers = #tpu.dot_dimension_numbers<[1], [0], [0], [1], [0, 0, 1, 1], [], []>} : vector<256x128xbf16>, vector<128x128xbf16>, vector<256x128xf32> -> vector<256x128xf32>
    %c0_4 = arith.constant 0 : index
    %c0_5 = arith.constant 0 : index
    %c0_6 = arith.constant 0 : index
    %4 = vector.load %arg3[%c0_4, %c0_5, %c0_6] : memref<7x1x128xf32, #tpu.memory_space<vmem>>, vector<1x1x128xf32>
    %5 = vector.shape_cast %4 : vector<1x1x128xf32> to vector<1x128xf32>
    %6 = vector.broadcast %5 : vector<1x128xf32> to vector<256x128xf32>
    %7 = arith.addf %3, %6 : vector<256x128xf32>
    %cst_7 = arith.constant 0.000000e+00 : f32
    %8 = vector.broadcast %cst_7 : f32 to vector<256x128xf32>
    %9 = arith.cmpf ogt, %7, %8 : vector<256x128xf32>
    %cst_8 = arith.constant 0.00999999977 : f32
    %10 = vector.broadcast %cst_8 : f32 to vector<256x128xf32>
    %11 = arith.mulf %10, %7 : vector<256x128xf32>
    %12 = arith.select %9, %7, %11 : vector<256x128xi1>, vector<256x128xf32>
    %13 = arith.truncf %12 : vector<256x128xf32> to vector<256x128xbf16>
    %c1 = arith.constant 1 : index
    %c0_9 = arith.constant 0 : index
    %c0_10 = arith.constant 0 : index
    %14 = vector.load %arg2[%c1, %c0_9, %c0_10] : memref<7x128x128xbf16, #tpu.memory_space<vmem>>, vector<1x128x128xbf16>
    %15 = vector.shape_cast %14 : vector<1x128x128xbf16> to vector<128x128xbf16>
    %cst_11 = arith.constant dense<0.000000e+00> : vector<256x128xf32>
    %16 = tpu.matmul %13, %15, %cst_11 {dimension_numbers = #tpu.dot_dimension_numbers<[1], [0], [0], [1], [0, 0, 1, 1], [], []>} : vector<256x128xbf16>, vector<128x128xbf16>, vector<256x128xf32> -> vector<256x128xf32>
    %c1_12 = arith.constant 1 : index
    %c0_13 = arith.constant 0 : index
    %c0_14 = arith.constant 0 : index
    %17 = vector.load %arg3[%c1_12, %c0_13, %c0_14] : memref<7x1x128xf32, #tpu.memory_space<vmem>>, vector<1x1x128xf32>
    %18 = vector.shape_cast %17 : vector<1x1x128xf32> to vector<1x128xf32>
    %19 = vector.broadcast %18 : vector<1x128xf32> to vector<256x128xf32>
    %20 = arith.addf %16, %19 : vector<256x128xf32>
    %cst_15 = arith.constant 0.000000e+00 : f32
    %21 = vector.broadcast %cst_15 : f32 to vector<256x128xf32>
    %22 = arith.cmpf ogt, %20, %21 : vector<256x128xf32>
    %cst_16 = arith.constant 0.00999999977 : f32
    %23 = vector.broadcast %cst_16 : f32 to vector<256x128xf32>
    %24 = arith.mulf %23, %20 : vector<256x128xf32>
    %25 = arith.select %22, %20, %24 : vector<256x128xi1>, vector<256x128xf32>
    %26 = arith.truncf %25 : vector<256x128xf32> to vector<256x128xbf16>
    %c2 = arith.constant 2 : index
    %c0_17 = arith.constant 0 : index
    %c0_18 = arith.constant 0 : index
    %27 = vector.load %arg2[%c2, %c0_17, %c0_18] : memref<7x128x128xbf16, #tpu.memory_space<vmem>>, vector<1x128x128xbf16>
    %28 = vector.shape_cast %27 : vector<1x128x128xbf16> to vector<128x128xbf16>
    %cst_19 = arith.constant dense<0.000000e+00> : vector<256x128xf32>
    %29 = tpu.matmul %26, %28, %cst_19 {dimension_numbers = #tpu.dot_dimension_numbers<[1], [0], [0], [1], [0, 0, 1, 1], [], []>} : vector<256x128xbf16>, vector<128x128xbf16>, vector<256x128xf32> -> vector<256x128xf32>
    %c2_20 = arith.constant 2 : index
    %c0_21 = arith.constant 0 : index
    %c0_22 = arith.constant 0 : index
    %30 = vector.load %arg3[%c2_20, %c0_21, %c0_22] : memref<7x1x128xf32, #tpu.memory_space<vmem>>, vector<1x1x128xf32>
    %31 = vector.shape_cast %30 : vector<1x1x128xf32> to vector<1x128xf32>
    %32 = vector.broadcast %31 : vector<1x128xf32> to vector<256x128xf32>
    %33 = arith.addf %29, %32 : vector<256x128xf32>
    %cst_23 = arith.constant 0.000000e+00 : f32
    %34 = vector.broadcast %cst_23 : f32 to vector<256x128xf32>
    %35 = arith.cmpf ogt, %33, %34 : vector<256x128xf32>
    %cst_24 = arith.constant 0.00999999977 : f32
    %36 = vector.broadcast %cst_24 : f32 to vector<256x128xf32>
    %37 = arith.mulf %36, %33 : vector<256x128xf32>
    %38 = arith.select %35, %33, %37 : vector<256x128xi1>, vector<256x128xf32>
    %39 = arith.truncf %38 : vector<256x128xf32> to vector<256x128xbf16>
    %c0_25 = arith.constant 0 : index
    %c0_26 = arith.constant 0 : index
    %40 = vector.load %arg4[%c0_25, %c0_26] : memref<128x256xbf16, #tpu.memory_space<vmem>>, vector<128x256xbf16>
    %cst_27 = arith.constant dense<0.000000e+00> : vector<256x256xf32>
    %41 = tpu.matmul %39, %40, %cst_27 {dimension_numbers = #tpu.dot_dimension_numbers<[1], [0], [0], [1], [0, 0, 1, 1], [], []>} : vector<256x128xbf16>, vector<128x256xbf16>, vector<256x256xf32> -> vector<256x256xf32>
    %c0_28 = arith.constant 0 : index
    %c0_29 = arith.constant 0 : index
    %42 = vector.load %arg5[%c0_28, %c0_29] : memref<1x256xf32, #tpu.memory_space<vmem>>, vector<1x256xf32>
    %43 = vector.broadcast %42 : vector<1x256xf32> to vector<256x256xf32>
    %44 = arith.addf %41, %43 : vector<256x256xf32>
    %c0_30 = arith.constant 0 : index
    %c0_31 = arith.constant 0 : index
    %45 = vector.load %arg6[%c0_30, %c0_31] : memref<256x256xf32, #tpu.memory_space<vmem>>, vector<256x256xf32>
    tpu.vector_store %arg6[%c0_30, %c0_31], %44 {strides = array<i32>} : memref<256x256xf32, #tpu.memory_space<vmem>>, vector<256x256xf32>,
    %46 = vector.extract_strided_slice %44 {offsets = [0, 0], sizes = [256, 128], strides = [1, 1]} : vector<256x256xf32> to vector<256x128xf32>
    %47 = vector.extract_strided_slice %44 {offsets = [0, 128], sizes = [256, 128], strides = [1, 1]} : vector<256x256xf32> to vector<256x128xf32>
    %48 = arith.extf %0 : vector<256x128xbf16> to vector<256x128xf32>
    %cst_32 = arith.constant 5.000000e-01 : f32
    %49 = vector.broadcast %cst_32 : f32 to vector<256x128xf32>
    %50 = arith.mulf %49, %47 : vector<256x128xf32>
    %51 = math.exp %50 : vector<256x128xf32>
    %52 = arith.mulf %48, %51 : vector<256x128xf32>
    %53 = arith.addf %46, %52 : vector<256x128xf32>
    %54 = arith.truncf %53 : vector<256x128xf32> to vector<256x128xbf16>
    %c3 = arith.constant 3 : index
    %c0_33 = arith.constant 0 : index
    %c0_34 = arith.constant 0 : index
    %55 = vector.load %arg2[%c3, %c0_33, %c0_34] : memref<7x128x128xbf16, #tpu.memory_space<vmem>>, vector<1x128x128xbf16>
    %56 = vector.shape_cast %55 : vector<1x128x128xbf16> to vector<128x128xbf16>
    %cst_35 = arith.constant dense<0.000000e+00> : vector<256x128xf32>
    %57 = tpu.matmul %54, %56, %cst_35 {dimension_numbers = #tpu.dot_dimension_numbers<[1], [0], [0], [1], [0, 0, 1, 1], [], []>} : vector<256x128xbf16>, vector<128x128xbf16>, vector<256x128xf32> -> vector<256x128xf32>
    %c3_36 = arith.constant 3 : index
    %c0_37 = arith.constant 0 : index
    %c0_38 = arith.constant 0 : index
    %58 = vector.load %arg3[%c3_36, %c0_37, %c0_38] : memref<7x1x128xf32, #tpu.memory_space<vmem>>, vector<1x1x128xf32>
    %59 = vector.shape_cast %58 : vector<1x1x128xf32> to vector<1x128xf32>
    %60 = vector.broadcast %59 : vector<1x128xf32> to vector<256x128xf32>
    %61 = arith.addf %57, %60 : vector<256x128xf32>
    %cst_39 = arith.constant 0.000000e+00 : f32
    %62 = vector.broadcast %cst_39 : f32 to vector<256x128xf32>
    %63 = arith.cmpf ogt, %61, %62 : vector<256x128xf32>
    %cst_40 = arith.constant 0.00999999977 : f32
    %64 = vector.broadcast %cst_40 : f32 to vector<256x128xf32>
    %65 = arith.mulf %64, %61 : vector<256x128xf32>
    %66 = arith.select %63, %61, %65 : vector<256x128xi1>, vector<256x128xf32>
    %67 = arith.truncf %66 : vector<256x128xf32> to vector<256x128xbf16>
    %c4 = arith.constant 4 : index
    %c0_41 = arith.constant 0 : index
    %c0_42 = arith.constant 0 : index
    %68 = vector.load %arg2[%c4, %c0_41, %c0_42] : memref<7x128x128xbf16, #tpu.memory_space<vmem>>, vector<1x128x128xbf16>
    %69 = vector.shape_cast %68 : vector<1x128x128xbf16> to vector<128x128xbf16>
    %cst_43 = arith.constant dense<0.000000e+00> : vector<256x128xf32>
    %70 = tpu.matmul %67, %69, %cst_43 {dimension_numbers = #tpu.dot_dimension_numbers<[1], [0], [0], [1], [0, 0, 1, 1], [], []>} : vector<256x128xbf16>, vector<128x128xbf16>, vector<256x128xf32> -> vector<256x128xf32>
    %c4_44 = arith.constant 4 : index
    %c0_45 = arith.constant 0 : index
    %c0_46 = arith.constant 0 : index
    %71 = vector.load %arg3[%c4_44, %c0_45, %c0_46] : memref<7x1x128xf32, #tpu.memory_space<vmem>>, vector<1x1x128xf32>
    %72 = vector.shape_cast %71 : vector<1x1x128xf32> to vector<1x128xf32>
    %73 = vector.broadcast %72 : vector<1x128xf32> to vector<256x128xf32>
    %74 = arith.addf %70, %73 : vector<256x128xf32>
    %cst_47 = arith.constant 0.000000e+00 : f32
    %75 = vector.broadcast %cst_47 : f32 to vector<256x128xf32>
    %76 = arith.cmpf ogt, %74, %75 : vector<256x128xf32>
    %cst_48 = arith.constant 0.00999999977 : f32
    %77 = vector.broadcast %cst_48 : f32 to vector<256x128xf32>
    %78 = arith.mulf %77, %74 : vector<256x128xf32>
    %79 = arith.select %76, %74, %78 : vector<256x128xi1>, vector<256x128xf32>
    %80 = arith.truncf %79 : vector<256x128xf32> to vector<256x128xbf16>
    %c5 = arith.constant 5 : index
    %c0_49 = arith.constant 0 : index
    %c0_50 = arith.constant 0 : index
    %81 = vector.load %arg2[%c5, %c0_49, %c0_50] : memref<7x128x128xbf16, #tpu.memory_space<vmem>>, vector<1x128x128xbf16>
    %82 = vector.shape_cast %81 : vector<1x128x128xbf16> to vector<128x128xbf16>
    %cst_51 = arith.constant dense<0.000000e+00> : vector<256x128xf32>
    %83 = tpu.matmul %80, %82, %cst_51 {dimension_numbers = #tpu.dot_dimension_numbers<[1], [0], [0], [1], [0, 0, 1, 1], [], []>} : vector<256x128xbf16>, vector<128x128xbf16>, vector<256x128xf32> -> vector<256x128xf32>
    %c5_52 = arith.constant 5 : index
    %c0_53 = arith.constant 0 : index
    %c0_54 = arith.constant 0 : index
    %84 = vector.load %arg3[%c5_52, %c0_53, %c0_54] : memref<7x1x128xf32, #tpu.memory_space<vmem>>, vector<1x1x128xf32>
    %85 = vector.shape_cast %84 : vector<1x1x128xf32> to vector<1x128xf32>
    %86 = vector.broadcast %85 : vector<1x128xf32> to vector<256x128xf32>
    %87 = arith.addf %83, %86 : vector<256x128xf32>
    %cst_55 = arith.constant 0.000000e+00 : f32
    %88 = vector.broadcast %cst_55 : f32 to vector<256x128xf32>
    %89 = arith.cmpf ogt, %87, %88 : vector<256x128xf32>
    %cst_56 = arith.constant 0.00999999977 : f32
    %90 = vector.broadcast %cst_56 : f32 to vector<256x128xf32>
    %91 = arith.mulf %90, %87 : vector<256x128xf32>
    %92 = arith.select %89, %87, %91 : vector<256x128xi1>, vector<256x128xf32>
    %93 = arith.truncf %92 : vector<256x128xf32> to vector<256x128xbf16>
    %c6 = arith.constant 6 : index
    %c0_57 = arith.constant 0 : index
    %c0_58 = arith.constant 0 : index
    %94 = vector.load %arg2[%c6, %c0_57, %c0_58] : memref<7x128x128xbf16, #tpu.memory_space<vmem>>, vector<1x128x128xbf16>
    %95 = vector.shape_cast %94 : vector<1x128x128xbf16> to vector<128x128xbf16>
    %cst_59 = arith.constant dense<0.000000e+00> : vector<256x128xf32>
    %96 = tpu.matmul %93, %95, %cst_59 {dimension_numbers = #tpu.dot_dimension_numbers<[1], [0], [0], [1], [0, 0, 1, 1], [], []>} : vector<256x128xbf16>, vector<128x128xbf16>, vector<256x128xf32> -> vector<256x128xf32>
    %c6_60 = arith.constant 6 : index
    %c0_61 = arith.constant 0 : index
    %c0_62 = arith.constant 0 : index
    %97 = vector.load %arg3[%c6_60, %c0_61, %c0_62] : memref<7x1x128xf32, #tpu.memory_space<vmem>>, vector<1x1x128xf32>
    %98 = vector.shape_cast %97 : vector<1x1x128xf32> to vector<1x128xf32>
    %99 = vector.broadcast %98 : vector<1x128xf32> to vector<256x128xf32>
    %100 = arith.addf %96, %99 : vector<256x128xf32>
    %c0_63 = arith.constant 0 : index
    %c0_64 = arith.constant 0 : index
    %101 = vector.load %arg7[%c0_63, %c0_64] : memref<256x128xf32, #tpu.memory_space<vmem>>, vector<256x128xf32>
    tpu.vector_store %arg7[%c0_63, %c0_64], %100 {strides = array<i32>} : memref<256x128xf32, #tpu.memory_space<vmem>>, vector<256x128xf32>,
    return
  }
  func.func @transform_0(%arg0: i32) -> (i32, i32) {
    %c0_i32 = arith.constant 0 : i32
    %c0_i32_0 = arith.constant 0 : i32
    return %arg0, %c0_i32 : i32, i32
  }
  func.func @transform_1(%arg0: i32) -> (i32, i32, i32) {
    %c0_i32 = arith.constant 0 : i32
    %c0_i32_0 = arith.constant 0 : i32
    %c0_i32_1 = arith.constant 0 : i32
    %c0_i32_2 = arith.constant 0 : i32
    return %c0_i32, %c0_i32_0, %c0_i32_1 : i32, i32, i32
  }
  func.func @transform_2(%arg0: i32) -> (i32, i32, i32) {
    %c0_i32 = arith.constant 0 : i32
    %c0_i32_0 = arith.constant 0 : i32
    %c0_i32_1 = arith.constant 0 : i32
    %c0_i32_2 = arith.constant 0 : i32
    return %c0_i32, %c0_i32_0, %c0_i32_1 : i32, i32, i32
  }
  func.func @transform_3(%arg0: i32) -> (i32, i32) {
    %c0_i32 = arith.constant 0 : i32
    %c0_i32_0 = arith.constant 0 : i32
    %c0_i32_1 = arith.constant 0 : i32
    return %c0_i32, %c0_i32_0 : i32, i32
  }
  func.func @transform_4(%arg0: i32) -> (i32, i32) {
    %c0_i32 = arith.constant 0 : i32
    %c0_i32_0 = arith.constant 0 : i32
    %c0_i32_1 = arith.constant 0 : i32
    return %c0_i32, %c0_i32_0 : i32, i32
  }
  func.func @transform_5(%arg0: i32) -> (i32, i32) {
    %c0_i32 = arith.constant 0 : i32
    %c0_i32_0 = arith.constant 0 : i32
    return %arg0, %c0_i32 : i32, i32
  }
  func.func @transform_6(%arg0: i32) -> (i32, i32) {
    %c0_i32 = arith.constant 0 : i32
    %c0_i32_0 = arith.constant 0 : i32
    return %arg0, %c0_i32 : i32, i32
  }
}

</mosaic_0001>

<llo_original>
// kernel: tpu_custom_call.1
$region0: #{tpu_custom_call.1}
  #allocation0 [shape = 'u32[]', space=smem, size = 0x4, offset = 0x4, fixed_abs, tag = 'smem constant byte address 0x4 - core index']
  #allocation1 [shape = 'u32[144,128]{1,0:T(1,128)}', space=vmem, size = 0x12000, scoped, tag = 'internal scratch']
  %s0 = inlined_call_operand.hbm [shape: bf16[512,128], index: 0, kind: input, shape index: {}]
  %s1 = inlined_call_operand.hbm [shape: bf16[7,128,128], index: 1, kind: input, shape index: {}]
  %s2 = inlined_call_operand.vmem [shape: f32[7,1,128], index: 2, kind: input, shape index: {}]
  %s3 = inlined_call_operand.hbm [shape: bf16[128,256], index: 3, kind: input, shape index: {}]
  %s4 = inlined_call_operand.vmem [shape: f32[1,256], index: 4, kind: input, shape index: {}]
  %s5 = inlined_call_operand.hbm [shape: f32[512,256], index: 5, kind: output, shape index: {0}]
  %s6 = inlined_call_operand.hbm [shape: f32[512,128], index: 6, kind: output, shape index: {1}]
  %7 = xla_tuple %s5, %s6
  %s8 = sld [smem:[#allocation0]]
  $region73: #{tpu_custom_call.1} parent=0
    _
  %s10 = ssub.s32 1, %s8
  %s11 = scalar_select 0, %s10, %s8
  $region1: #{tpu_custom_call.1} parent=0
    #allocation2 [shape = 'u8[131072]{0}', space=vmem, size = 0x20000, scoped, tag = 'input window, operand 0']
    #allocation3 [shape = 's32[2]{0}', space=sflag, size = 0x8, scoped, tag = 'scoped memory for tpu_custom_call.1']
    #allocation4 [shape = 's32[2]{0}', space=sflag, size = 0x8, scoped, tag = 'scoped memory for tpu_custom_call.1']
    #allocation5 [shape = 'u8[229376]{0}', space=vmem, size = 0x38000, scoped, tag = 'input window, operand 1, single buffered']
    #allocation6 [shape = 's32[1]{0}', space=sflag, size = 0x4, scoped, tag = 'scoped memory for tpu_custom_call.1']
    #allocation7 [shape = 'u8[65536]{0}', space=vmem, size = 0x10000, scoped, tag = 'input window, operand 3, single buffered']
    #allocation8 [shape = 'u8[524288]{0}', space=vmem, size = 0x80000, scoped, tag = 'output window, operand 0']
    #allocation9 [shape = 'u8[262144]{0}', space=vmem, size = 0x40000, scoped, tag = 'output window, operand 1']
    #allocation10 [shape = 's32[2]{0}', space=sflag, size = 0x8, scoped, tag = 'scoped memory for tpu_custom_call.1']
    %12 = vsyncpa [#allocation3], 0
    %s13 = scalar_lea.sflag [#allocation3], 1
    %14 = vsyncpa %s13, 0
    %15 = vsyncpa [#allocation6], 0
    %16 = vsyncpa [#allocation4], 0
    %s17 = scalar_lea.sflag [#allocation4], 1
    %18 = vsyncpa %s17, 0
    %19 = vsyncpa [#allocation10], 0
    %s20 = scalar_lea.sflag [#allocation10], 1
    %21 = vsyncpa %s20, 0
    loop: start=0, step=1, limit=4
    $region2: #{tpu_custom_call.1} parent=1 // loop_pre_header
      _
    $region3: #{tpu_custom_call.1} parent=1 // loop_header
      %s23 = sphi 0, %s27
      %p24 = scmp.ge.s32.totalorder %s23, 4
      %s33 = sphi 0, %s35
      %s36 = sphi 0, %s33
      %s37 = sphi 0, %s36
      %s53 = sphi 0, %s37
      %s57 = sphi 0, %s57
      %s59 = sphi 0, %s57
      %s60 = sphi 0, %s59
      %s74 = sphi 0, %s60
      %s78 = sphi 0, %s78
      %s80 = sphi 0, %s78
      %s81 = sphi 0, %s80
      %s95 = sphi 0, %s81
      %s99 = sphi 0, %s99
      %s101 = sphi 0, %s99
      %s102 = sphi 0, %s101
      %s116 = sphi 0, %s102
      %s120 = sphi 0, %s120
      %s122 = sphi 0, %s120
      %s123 = sphi 0, %s122
      %s137 = sphi 0, %s123
      %s143 = sphi 0, %s145
      %s146 = sphi 0, %s143
      %s147 = sphi 0, %s146
      %s163 = sphi 0, %s147
      %s169 = sphi 0, %s171
      %s172 = sphi 0, %s169
      %s173 = sphi 0, %s172
      %s189 = sphi 0, %s173
    $region4: #{tpu_custom_call.1} parent=1 // loop_header_branch
      %26 = sbr.rel (%p24) target = $region8
    $region5: #{tpu_custom_call.1} parent=1 // loop_body
      %s28 = ssub.s32 %s23, 1
      %s29 = ssub.s32 %s23, 2
      %s30 = sadd.s32 %s23, 1
      %s31 = ssub.s32 %s23, %s30
      %p32 = scmp.eq.s32.totalorder %s31, 0
      %s34 = sadd.s32 %s33, 1
      %s35 = scalar_select %p32, %s33, %s34
      %p38 = pneg %p32
      %p39 = scmp.eq.s32.totalorder %s23, 1
      %p40 = por %p38, %p39
      %p41 = scmp.ne.s32.totalorder %s33, %s36
      %p42 = scmp.eq.s32.totalorder %s23, 0
      %p43 = por %p41, %p42
      %p44 = scmp.ne.s32.totalorder %s33, %s36
      %p45 = scmp.eq.s32.totalorder %s28, 1
      %p46 = por %p44, %p45
      %p47 = scmp.ne.s32.totalorder %s36, %s37
      %p48 = scmp.eq.s32.totalorder %s28, 0
      %p49 = por %p47, %p48
      %p50 = scmp.ne.s32.totalorder %s36, %s37
      %p51 = scmp.eq.s32.totalorder %s29, 1
      %p52 = por %p50, %p51
      %p54 = scmp.ne.s32.totalorder %s37, %s53
      %p55 = scmp.eq.s32.totalorder %s29, 0
      %p56 = por %p54, %p55
      %s58 = sadd.s32 %s57, 1
      %p61 = scmp.eq.s32.totalorder %s23, 1
      %p62 = scmp.ne.s32.totalorder %s57, %s59
      %p63 = scmp.eq.s32.totalorder %s23, 0
      %p64 = por %p62, %p63
      %p65 = scmp.ne.s32.totalorder %s57, %s59
      %p66 = scmp.eq.s32.totalorder %s28, 1
      %p67 = por %p65, %p66
      %p68 = scmp.ne.s32.totalorder %s59, %s60
      %p69 = scmp.eq.s32.totalorder %s28, 0
      %p70 = por %p68, %p69
      %p71 = scmp.ne.s32.totalorder %s59, %s60
      %p72 = scmp.eq.s32.totalorder %s29, 1
      %p73 = por %p71, %p72
      %p75 = scmp.ne.s32.totalorder %s60, %s74
      %p76 = scmp.eq.s32.totalorder %s29, 0
      %p77 = por %p75, %p76
      %s79 = sadd.s32 %s78, 1
      %p82 = scmp.eq.s32.totalorder %s23, 1
      %p83 = scmp.ne.s32.totalorder %s78, %s80
      %p84 = scmp.eq.s32.totalorder %s23, 0
      %p85 = por %p83, %p84
      %p86 = scmp.ne.s32.totalorder %s78, %s80
      %p87 = scmp.eq.s32.totalorder %s28, 1
      %p88 = por %p86, %p87
      %p89 = scmp.ne.s32.totalorder %s80, %s81
      %p90 = scmp.eq.s32.totalorder %s28, 0
      %p91 = por %p89, %p90
      %p92 = scmp.ne.s32.totalorder %s80, %s81
      %p93 = scmp.eq.s32.totalorder %s29, 1
      %p94 = por %p92, %p93
      %p96 = scmp.ne.s32.totalorder %s81, %s95
      %p97 = scmp.eq.s32.totalorder %s29, 0
      %p98 = por %p96, %p97
      %s100 = sadd.s32 %s99, 1
      %p103 = scmp.eq.s32.totalorder %s23, 1
      %p104 = scmp.ne.s32.totalorder %s99, %s101
      %p105 = scmp.eq.s32.totalorder %s23, 0
      %p106 = por %p104, %p105
      %p107 = scmp.ne.s32.totalorder %s99, %s101
      %p108 = scmp.eq.s32.totalorder %s28, 1
      %p109 = por %p107, %p108
      %p110 = scmp.ne.s32.totalorder %s101, %s102
      %p111 = scmp.eq.s32.totalorder %s28, 0
      %p112 = por %p110, %p111
      %p113 = scmp.ne.s32.totalorder %s101, %s102
      %p114 = scmp.eq.s32.totalorder %s29, 1
      %p115 = por %p113, %p114
      %p117 = scmp.ne.s32.totalorder %s102, %s116
      %p118 = scmp.eq.s32.totalorder %s29, 0
      %p119 = por %p117, %p118
      %s121 = sadd.s32 %s120, 1
      %p124 = scmp.eq.s32.totalorder %s23, 1
      %p125 = scmp.ne.s32.totalorder %s120, %s122
      %p126 = scmp.eq.s32.totalorder %s23, 0
      %p127 = por %p125, %p126
      %p128 = scmp.ne.s32.totalorder %s120, %s122
      %p129 = scmp.eq.s32.totalorder %s28, 1
      %p130 = por %p128, %p129
      %p131 = scmp.ne.s32.totalorder %s122, %s123
      %p132 = scmp.eq.s32.totalorder %s28, 0
      %p133 = por %p131, %p132
      %p134 = scmp.ne.s32.totalorder %s122, %s123
      %p135 = scmp.eq.s32.totalorder %s29, 1
      %p136 = por %p134, %p135
      %p138 = scmp.ne.s32.totalorder %s123, %s137
      %p139 = scmp.eq.s32.totalorder %s29, 0
      %p140 = por %p138, %p139
      %s141 = ssub.s32 %s23, %s30
      %p142 = scmp.eq.s32.totalorder %s141, 0
      %s144 = sadd.s32 %s143, 1
      %s145 = scalar_select %p142, %s143, %s144
      %p148 = pneg %p142
      %p149 = scmp.eq.s32.totalorder %s23, 1
      %p150 = por %p148, %p149
      %p151 = scmp.ne.s32.totalorder %s143, %s146
      %p152 = scmp.eq.s32.totalorder %s23, 0
      %p153 = por %p151, %p152
      %p154 = scmp.ne.s32.totalorder %s143, %s146
      %p155 = scmp.eq.s32.totalorder %s28, 1
      %p156 = por %p154, %p155
      %p157 = scmp.ne.s32.totalorder %s146, %s147
      %p158 = scmp.eq.s32.totalorder %s28, 0
      %p159 = por %p157, %p158
      %p160 = scmp.ne.s32.totalorder %s146, %s147
      %p161 = scmp.eq.s32.totalorder %s29, 1
      %p162 = por %p160, %p161
      %p164 = scmp.ne.s32.totalorder %s147, %s163
      %p165 = scmp.eq.s32.totalorder %s29, 0
      %p166 = por %p164, %p165
      %s167 = ssub.s32 %s23, %s30
      %p168 = scmp.eq.s32.totalorder %s167, 0
      %s170 = sadd.s32 %s169, 1
      %s171 = scalar_select %p168, %s169, %s170
      %p174 = pneg %p168
      %p175 = scmp.eq.s32.totalorder %s23, 1
      %p176 = por %p174, %p175
      %p177 = scmp.ne.s32.totalorder %s169, %s172
      %p178 = scmp.eq.s32.totalorder %s23, 0
      %p179 = por %p177, %p178
      %p180 = scmp.ne.s32.totalorder %s169, %s172
      %p181 = scmp.eq.s32.totalorder %s28, 1
      %p182 = por %p180, %p181
      %p183 = scmp.ne.s32.totalorder %s172, %s173
      %p184 = scmp.eq.s32.totalorder %s28, 0
      %p185 = por %p183, %p184
      %p186 = scmp.ne.s32.totalorder %s172, %s173
      %p187 = scmp.eq.s32.totalorder %s29, 1
      %p188 = por %p186, %p187
      %p190 = scmp.ne.s32.totalorder %s173, %s189
      %p191 = scmp.eq.s32.totalorder %s29, 0
      %p192 = por %p190, %p191
      %p193 = scmp.le.s32.totalorder 1, %s23
      %p194 = scmp.lt.s32.totalorder %s23, 3
      %p195 = pnand %p193, %p194
      %p196 = pneg %p195
      // Predicated region
      $region9: #{tpu_custom_call.1} parent=5 // pred_check
        _
      $region10: #{tpu_custom_call.1} parent=5 // pred_check_branch
        %198 = sbr.rel (%p195) target = $region12
      $region11: #{tpu_custom_call.1} parent=5 // pred_region
        %s199 = ssub.s32 %s23, 1
        // Predicated region
        $region13: #{tpu_custom_call.1} parent=11 // pred_check
          %p200 = pneg %p70
        $region14: #{tpu_custom_call.1} parent=11 // pred_check_branch
          %202 = sbr.rel (%p200) target = $region16
        $region15: #{tpu_custom_call.1} parent=11 // pred_region
          %s204 = ssub.s32 7168, 7168
          %205 = vsyncadd [#allocation6], %s204
          %s206 = sshll.u32 [#allocation5], 4
          %s207 = int_to_ptr.vmem [resolvable:$true] %s206
          %212 = dma.hbm_to_vmem [thread:$0]  %s1, 7168, %s207, [#allocation6], 64, 64, 4
        $region16: #{tpu_custom_call.1} parent=11 // pred_fallthru
          _
        // Predicated region
        $region17: #{tpu_custom_call.1} parent=11 // pred_check
          %p213 = pneg %p91
        $region18: #{tpu_custom_call.1} parent=11 // pred_check_branch
          %215 = sbr.rel (%p213) target = $region20
        $region19: #{tpu_custom_call.1} parent=11 // pred_region
          _
        $region20: #{tpu_custom_call.1} parent=11 // pred_fallthru
          _
        // Predicated region
        $region21: #{tpu_custom_call.1} parent=11 // pred_check
          %p216 = pneg %p112
        $region22: #{tpu_custom_call.1} parent=11 // pred_check_branch
          %218 = sbr.rel (%p216) target = $region24
        $region23: #{tpu_custom_call.1} parent=11 // pred_region
          %s220 = ssub.s32 2048, 2048
          %221 = vsyncadd [#allocation6], %s220
          %s222 = sshll.u32 [#allocation7], 4
          %s223 = int_to_ptr.vmem [resolvable:$true] %s222
          %228 = dma.hbm_to_vmem [thread:$0]  %s3, 2048, %s223, [#allocation6], 128, 128, 8
        $region24: #{tpu_custom_call.1} parent=11 // pred_fallthru
          _
        // Predicated region
        $region25: #{tpu_custom_call.1} parent=11 // pred_check
          %p229 = pneg %p133
        $region26: #{tpu_custom_call.1} parent=11 // pred_check_branch
          %231 = sbr.rel (%p229) target = $region28
        $region27: #{tpu_custom_call.1} parent=11 // pred_region
          _
        $region28: #{tpu_custom_call.1} parent=11 // pred_fallthru
          _
      $region12: #{tpu_custom_call.1} parent=5 // pred_fallthru
        _
      %p232 = scmp.lt.s32.totalorder %s23, 2
      // Predicated region
      $region29: #{tpu_custom_call.1} parent=5 // pred_check
        %p233 = pneg %p232
      $region30: #{tpu_custom_call.1} parent=5 // pred_check_branch
        %235 = sbr.rel (%p233) target = $region32
      $region31: #{tpu_custom_call.1} parent=5 // pred_region
        // Predicated region
        $region33: #{tpu_custom_call.1} parent=31 // pred_check
          %p236 = pneg %p43
        $region34: #{tpu_custom_call.1} parent=31 // pred_check_branch
          %238 = sbr.rel (%p236) target = $region36
        $region35: #{tpu_custom_call.1} parent=31 // pred_region
          %s239 = sand.u32 %s33, 1
          %s240 = scalar_lea.sflag [#allocation3], %s239
          %s241 = sand.u32 %s33, 1
          %s242 = smul.addr %s241, 128
          %s243 = scalar_lea.vmem [#allocation2], %s242
          %s244 = smul.u32 32, %s23
          %s246 = ssub.s32 2048, 2048
          %247 = vsyncadd %s240, %s246
          %s248 = smul.addr %s244, 64
          %s249 = scalar_lea.hbm %s0, %s248
          %s250 = sshll.u32 %s243, 4
          %s251 = int_to_ptr.vmem [resolvable:$true] %s250
          %256 = dma.hbm_to_vmem [thread:$0]  %s249, 2048, %s251, %s240, 64, 64, 4
        $region36: #{tpu_custom_call.1} parent=31 // pred_fallthru
          _
      $region32: #{tpu_custom_call.1} parent=5 // pred_fallthru
        _
      %p257 = scmp.le.s32.totalorder 1, %s23
      %p258 = scmp.lt.s32.totalorder %s23, 3
      %p259 = pnand %p257, %p258
      %p260 = pneg %p259
      // Predicated region
      $region37: #{tpu_custom_call.1} parent=5 // pred_check
        _
      $region38: #{tpu_custom_call.1} parent=5 // pred_check_branch
        %262 = sbr.rel (%p259) target = $region40
      $region39: #{tpu_custom_call.1} parent=5 // pred_region
        %s263 = ssub.s32 %s23, 1
        %s264 = sand.u32 %s36, 1
        %s265 = scalar_lea.sflag [#allocation3], %s264
        %s266 = sand.u32 %s36, 1
        %s267 = smul.addr %s266, 128
        %s268 = scalar_lea.vmem [#allocation2], %s267
        // Predicated region
        $region41: #{tpu_custom_call.1} parent=39 // pred_check
          %p269 = pneg %p49
        $region42: #{tpu_custom_call.1} parent=39 // pred_check_branch
          %271 = sbr.rel (%p269) target = $region44
        $region43: #{tpu_custom_call.1} parent=39 // pred_region
          %272 = dma.done %s265, 2048
        $region44: #{tpu_custom_call.1} parent=39 // pred_fallthru
          _
        // Predicated region
        $region45: #{tpu_custom_call.1} parent=39 // pred_check
          %p273 = pneg %p70
        $region46: #{tpu_custom_call.1} parent=39 // pred_check_branch
          %275 = sbr.rel (%p273) target = $region48
        $region47: #{tpu_custom_call.1} parent=39 // pred_region
          %276 = dma.done [#allocation6], 7168
        $region48: #{tpu_custom_call.1} parent=39 // pred_fallthru
          _
        // Predicated region
        $region49: #{tpu_custom_call.1} parent=39 // pred_check
          %p277 = pneg %p112
        $region50: #{tpu_custom_call.1} parent=39 // pred_check_branch
          %279 = sbr.rel (%p277) target = $region52
        $region51: #{tpu_custom_call.1} parent=39 // pred_region
          %280 = dma.done [#allocation6], 2048
        $region52: #{tpu_custom_call.1} parent=39 // pred_fallthru
          _
        %s281 = sand.u32 %s36, 1
        %s282 = scalar_lea.sflag [#allocation3], %s281
        %s283 = sand.u32 %s36, 1
        %s284 = smul.addr %s283, 128
        %s285 = scalar_lea.vmem [#allocation2], %s284
        %p286 = pneg %p49
        %p287 = pneg %p46
        %p288 = pneg %p70
        %p289 = pneg %p67
        %p290 = pneg %p91
        %p291 = pneg %p88
        %p292 = pneg %p112
        %p293 = pneg %p109
        %p294 = pneg %p133
        %p295 = pneg %p130
        %p296 = pneg %p159
        %p297 = pneg %p156
        %s298 = sand.u32 %s146, 1
        %s299 = scalar_lea.sflag [#allocation4], %s298
        %s300 = sand.u32 %s146, 1
        %s301 = smul.addr %s300, 512
        %s302 = scalar_lea.vmem [#allocation8], %s301
        %p303 = pneg %p185
        %p304 = pneg %p182
        %s305 = sand.u32 %s172, 1
        %s306 = scalar_lea.sflag [#allocation10], %s305
        %s307 = sand.u32 %s172, 1
        %s308 = smul.addr %s307, 256
        %s309 = scalar_lea.vmem [#allocation9], %s308
        %s310 = smul.u32 32, %s28
        %s311 = smul.u32 32, %s28
        %s312 = smul.u32 32, %s28
        %v314 = vld [vmem:[%s268] sm:$0xf]
        %v315 = vld [vmem:[%s268 + $0x4] sm:$0xf]
        %v316 = vld [vmem:[%s268 + $0x8] sm:$0xf]
        %v317 = vld [vmem:[%s268 + $0xc] sm:$0xf]
        %v318 = vld [vmem:[%s268 + $0x10] sm:$0xf]
        %v319 = vld [vmem:[%s268 + $0x14] sm:$0xf]
        %v320 = vld [vmem:[%s268 + $0x18] sm:$0xf]
        %v321 = vld [vmem:[%s268 + $0x1c] sm:$0xf]
        %v322 = vld [vmem:[%s268 + $0x20] sm:$0xf]
        %v323 = vld [vmem:[%s268 + $0x24] sm:$0xf]
        %v324 = vld [vmem:[%s268 + $0x28] sm:$0xf]
        %v325 = vld [vmem:[%s268 + $0x2c] sm:$0xf]
        %v326 = vld [vmem:[%s268 + $0x30] sm:$0xf]
        %v327 = vld [vmem:[%s268 + $0x34] sm:$0xf]
        %v328 = vld [vmem:[%s268 + $0x38] sm:$0xf]
        %v329 = vld [vmem:[%s268 + $0x3c] sm:$0xf]
        %v330 = vld [vmem:[%s268 + $0x40] sm:$0xf]
        %v331 = vld [vmem:[%s268 + $0x44] sm:$0xf]
        %v332 = vld [vmem:[%s268 + $0x48] sm:$0xf]
        %v333 = vld [vmem:[%s268 + $0x4c] sm:$0xf]
        %v334 = vld [vmem:[%s268 + $0x50] sm:$0xf]
        %v335 = vld [vmem:[%s268 + $0x54] sm:$0xf]
        %v336 = vld [vmem:[%s268 + $0x58] sm:$0xf]
        %v337 = vld [vmem:[%s268 + $0x5c] sm:$0xf]
        %v338 = vld [vmem:[%s268 + $0x60] sm:$0xf]
        %v339 = vld [vmem:[%s268 + $0x64] sm:$0xf]
        %v340 = vld [vmem:[%s268 + $0x68] sm:$0xf]
        %v341 = vld [vmem:[%s268 + $0x6c] sm:$0xf]
        %v342 = vld [vmem:[%s268 + $0x70] sm:$0xf]
        %v343 = vld [vmem:[%s268 + $0x74] sm:$0xf]
        %v344 = vld [vmem:[%s268 + $0x78] sm:$0xf]
        %v345 = vld [vmem:[%s268 + $0x7c] sm:$0xf]
        %v346 = vld [vmem:[#allocation5] sm:$0xf]
        %v347 = vld [vmem:[#allocation5 + $0x4] sm:$0xf]
        %v348 = vld [vmem:[#allocation5 + $0x8] sm:$0xf]
        %v349 = vld [vmem:[#allocation5 + $0xc] sm:$0xf]
        %v350 = vld [vmem:[#allocation5 + $0x10] sm:$0xf]
        %v351 = vld [vmem:[#allocation5 + $0x14] sm:$0xf]
        %v352 = vld [vmem:[#allocation5 + $0x18] sm:$0xf]
        %v353 = vld [vmem:[#allocation5 + $0x1c] sm:$0xf]
        %v354 = vld [vmem:[#allocation5 + $0x20] sm:$0xf]
        %v355 = vld [vmem:[#allocation5 + $0x24] sm:$0xf]
        %v356 = vld [vmem:[#allocation5 + $0x28] sm:$0xf]
        %v357 = vld [vmem:[#allocation5 + $0x2c] sm:$0xf]
        %v358 = vld [vmem:[#allocation5 + $0x30] sm:$0xf]
        %v359 = vld [vmem:[#allocation5 + $0x34] sm:$0xf]
        %v360 = vld [vmem:[#allocation5 + $0x38] sm:$0xf]
        %v361 = vld [vmem:[#allocation5 + $0x3c] sm:$0xf]
        %v362 = vld [vmem:[%s2] sm:$0x1]
        %v364 = vlaneseq
        %v365 = vshrl.u32 %v364, 7
        %v366 = vsub.s32 0, %v365
        %v367 = vrot.slane %v362, %v366
        %v401 = vunpack.c.l.b16 %v314
        %v402 = vunpack.c.l.b16 %v315
        %v403 = vunpack.c.l.b16 %v316
        %v404 = vunpack.c.l.b16 %v317
        %v405 = vunpack.c.l.b16 %v318
        %v406 = vunpack.c.l.b16 %v319
        %v407 = vunpack.c.l.b16 %v320
        %v408 = vunpack.c.l.b16 %v321
        %v409 = vunpack.c.l.b16 %v322
        %v410 = vunpack.c.l.b16 %v323
        %v411 = vunpack.c.l.b16 %v324
        %v412 = vunpack.c.l.b16 %v325
        %v413 = vunpack.c.l.b16 %v326
        %v414 = vunpack.c.l.b16 %v327
        %v415 = vunpack.c.l.b16 %v328
        %v416 = vunpack.c.l.b16 %v329
        %v417 = vunpack.c.l.b16 %v330
        %v418 = vunpack.c.l.b16 %v331
        %v419 = vunpack.c.l.b16 %v332
        %v420 = vunpack.c.l.b16 %v333
        %v421 = vunpack.c.l.b16 %v334
        %v422 = vunpack.c.l.b16 %v335
        %v423 = vunpack.c.l.b16 %v336
        %v424 = vunpack.c.l.b16 %v337
        %v425 = vunpack.c.l.b16 %v338
        %v426 = vunpack.c.l.b16 %v339
        %v427 = vunpack.c.l.b16 %v340
        %v428 = vunpack.c.l.b16 %v341
        %v429 = vunpack.c.l.b16 %v342
        %v430 = vunpack.c.l.b16 %v343
        %v431 = vunpack.c.l.b16 %v344
        %v432 = vunpack.c.l.b16 %v345
        %v433 = vpack.c.b16 %v402, %v401
        %v434 = vpack.c.b16 %v404, %v403
        %v435 = vpack.c.b16 %v406, %v405
        %v436 = vpack.c.b16 %v408, %v407
        %v437 = vpack.c.b16 %v410, %v409
        %v438 = vpack.c.b16 %v412, %v411
        %v439 = vpack.c.b16 %v414, %v413
        %v440 = vpack.c.b16 %v416, %v415
        %v441 = vpack.c.b16 %v418, %v417
        %v442 = vpack.c.b16 %v420, %v419
        %v443 = vpack.c.b16 %v422, %v421
        %v444 = vpack.c.b16 %v424, %v423
        %v445 = vpack.c.b16 %v426, %v425
        %v446 = vpack.c.b16 %v428, %v427
        %v447 = vpack.c.b16 %v430, %v429
        %v448 = vpack.c.b16 %v432, %v431
        %v481 = vunpack.c.l.b16 %v346
        %v482 = vunpack.c.l.b16 %v347
        %v483 = vunpack.c.l.b16 %v348
        %v484 = vunpack.c.l.b16 %v349
        %v485 = vunpack.c.l.b16 %v350
        %v486 = vunpack.c.l.b16 %v351
        %v487 = vunpack.c.l.b16 %v352
        %v488 = vunpack.c.l.b16 %v353
        %v489 = vunpack.c.l.b16 %v354
        %v490 = vunpack.c.l.b16 %v355
        %v491 = vunpack.c.l.b16 %v356
        %v492 = vunpack.c.l.b16 %v357
        %v493 = vunpack.c.l.b16 %v358
        %v494 = vunpack.c.l.b16 %v359
        %v495 = vunpack.c.l.b16 %v360
        %v496 = vunpack.c.l.b16 %v361
        %v497 = vpack.c.b16 %v482, %v481
        %v498 = vpack.c.b16 %v484, %v483
        %v499 = vpack.c.b16 %v486, %v485
        %v500 = vpack.c.b16 %v488, %v487
        %v501 = vpack.c.b16 %v490, %v489
        %v502 = vpack.c.b16 %v492, %v491
        %v503 = vpack.c.b16 %v494, %v493
        %v504 = vpack.c.b16 %v496, %v495
        %513 = vmatprep.subr.bf16.mxu0 0
        %514 = vmatpush1.bf16.msra.mxu0 %v497
        %515 = vmatprep.subr.bf16.mxu0 0
        %516 = vmatpush1.bf16.msra.mxu0 %v498
        %517 = vmatprep.subr.bf16.mxu0 0
        %518 = vmatpush1.bf16.msra.mxu0 %v499
        %519 = vmatprep.subr.bf16.mxu0 0
        %520 = vmatpush1.bf16.msra.mxu0 %v500
        %521 = vmatprep.subr.bf16.mxu0 0
        %522 = vmatpush1.bf16.msra.mxu0 %v501
        %523 = vmatprep.subr.bf16.mxu0 0
        %524 = vmatpush1.bf16.msra.mxu0 %v502
        %525 = vmatprep.subr.bf16.mxu0 0
        %526 = vmatpush1.bf16.msra.mxu0 %v503
        %527 = vmatprep.subr.bf16.mxu0 0
        %528 = vmatpush1.bf16.msra.mxu0 %v504
        %529 = vmatprep.subr.bf16.mxu0 0
        %530 = vmatpush1.bf16.msra.mxu0 0
        %531 = vmatprep.subr.bf16.mxu0 0
        %532 = vmatpush1.bf16.msra.mxu0 0
        %533 = vmatprep.subr.bf16.mxu0 0
        %534 = vmatpush1.bf16.msra.mxu0 0
        %535 = vmatprep.subr.bf16.mxu0 0
        %536 = vmatpush1.bf16.msra.mxu0 0
        %537 = vmatprep.subr.bf16.mxu0 0
        %538 = vmatpush1.bf16.msra.mxu0 0
        %539 = vmatprep.subr.bf16.mxu0 0
        %540 = vmatpush1.bf16.msra.mxu0 0
        %541 = vmatprep.subr.bf16.mxu0 0
        %542 = vmatpush1.bf16.msra.mxu0 0
        %543 = vmatprep.subr.bf16.mxu0 0
        %544 = vmatpush1.bf16.msra.mxu0 0
        %545 = vmatprep.mubr.bf16.mxu0 0
        %546 = vmatmul.mubr.bf16.gmra.mrb[0].mxu0 %v433
        %v547 = vpop.f32.mrb[0].mxu0
        %v548 = vadd.f32 %v367, %v547
        %v549 = vpop.f32.mrb[0].mxu0
        %v550 = vpop.f32.mrb[0].mxu0
        %v551 = vadd.f32 %v367, %v550
        %v552 = vpop.f32.mrb[0].mxu0
        %553 = vmatprep.mubr.bf16.mxu0 0
        %554 = vmatmul.mubr.bf16.gmra.mrb[0].mxu0 %v434
        %v555 = vpop.f32.mrb[0].mxu0
        %v556 = vadd.f32 %v367, %v555
        %v557 = vpop.f32.mrb[0].mxu0
        %v558 = vpop.f32.mrb[0].mxu0
        %v559 = vadd.f32 %v367, %v558
        %v560 = vpop.f32.mrb[0].mxu0
        %561 = vmatprep.mubr.bf16.mxu0 0
        %562 = vmatmul.mubr.bf16.gmra.mrb[0].mxu0 %v435
        %v563 = vpop.f32.mrb[0].mxu0
        %v564 = vadd.f32 %v367, %v563
        %v565 = vpop.f32.mrb[0].mxu0
        %v566 = vpop.f32.mrb[0].mxu0
        %v567 = vadd.f32 %v367, %v566
        %v568 = vpop.f32.mrb[0].mxu0
        %569 = vmatprep.mubr.bf16.mxu0 0
        %570 = vmatmul.mubr.bf16.gmra.mrb[0].mxu0 %v436
        %v571 = vpop.f32.mrb[0].mxu0
        %v572 = vadd.f32 %v367, %v571
        %v573 = vpop.f32.mrb[0].mxu0
        %v574 = vpop.f32.mrb[0].mxu0
        %v575 = vadd.f32 %v367, %v574
        %v576 = vpop.f32.mrb[0].mxu0
        %577 = vmatprep.mubr.bf16.mxu0 0
        %578 = vmatmul.mubr.bf16.gmra.mrb[0].mxu0 %v437
        %v579 = vpop.f32.mrb[0].mxu0
        %v580 = vadd.f32 %v367, %v579
        %v581 = vpop.f32.mrb[0].mxu0
        %v582 = vpop.f32.mrb[0].mxu0
        %v583 = vadd.f32 %v367, %v582
        %v584 = vpop.f32.mrb[0].mxu0
        %585 = vmatprep.mubr.bf16.mxu0 0
        %586 = vmatmul.mubr.bf16.gmra.mrb[0].mxu0 %v438
        %v587 = vpop.f32.mrb[0].mxu0
        %v588 = vadd.f32 %v367, %v587
        %v589 = vpop.f32.mrb[0].mxu0
        %v590 = vpop.f32.mrb[0].mxu0
        %v591 = vadd.f32 %v367, %v590
        %v592 = vpop.f32.mrb[0].mxu0
        %593 = vmatprep.mubr.bf16.mxu0 0
        %594 = vmatmul.mubr.bf16.gmra.mrb[0].mxu0 %v439
        %v595 = vpop.f32.mrb[0].mxu0
        %v596 = vadd.f32 %v367, %v595
        %v597 = vpop.f32.mrb[0].mxu0
        %v598 = vpop.f32.mrb[0].mxu0
        %v599 = vadd.f32 %v367, %v598
        %v600 = vpop.f32.mrb[0].mxu0
        %601 = vmatprep.mubr.bf16.mxu0 0
        %602 = vmatmul.mubr.bf16.gmra.mrb[0].mxu0 %v440
        %v603 = vpop.f32.mrb[0].mxu0
        %v604 = vadd.f32 %v367, %v603
        %v605 = vpop.f32.mrb[0].mxu0
        %v606 = vpop.f32.mrb[0].mxu0
        %v607 = vadd.f32 %v367, %v606
        %v608 = vpop.f32.mrb[0].mxu0
        %609 = vmatprep.mubr.bf16.mxu0 0
        %610 = vmatmul.mubr.bf16.gmra.mrb[0].mxu0 %v441
        %v611 = vpop.f32.mrb[0].mxu0
        %v612 = vadd.f32 %v367, %v611
        %v613 = vpop.f32.mrb[0].mxu0
        %v614 = vpop.f32.mrb[0].mxu0
        %v615 = vadd.f32 %v367, %v614
        %v616 = vpop.f32.mrb[0].mxu0
        %617 = vmatprep.mubr.bf16.mxu0 0
        %618 = vmatmul.mubr.bf16.gmra.mrb[0].mxu0 %v442
        %v619 = vpop.f32.mrb[0].mxu0
        %v620 = vadd.f32 %v367, %v619
        %v621 = vpop.f32.mrb[0].mxu0
        %v622 = vpop.f32.mrb[0].mxu0
        %v623 = vadd.f32 %v367, %v622
        %v624 = vpop.f32.mrb[0].mxu0
        %625 = vmatprep.mubr.bf16.mxu0 0
        %626 = vmatmul.mubr.bf16.gmra.mrb[0].mxu0 %v443
        %v627 = vpop.f32.mrb[0].mxu0
        %v628 = vadd.f32 %v367, %v627
        %v629 = vpop.f32.mrb[0].mxu0
        %v630 = vpop.f32.mrb[0].mxu0
        %v631 = vadd.f32 %v367, %v630
        %v632 = vpop.f32.mrb[0].mxu0
        %633 = vmatprep.mubr.bf16.mxu0 0
        %634 = vmatmul.mubr.bf16.gmra.mrb[0].mxu0 %v444
        %v635 = vpop.f32.mrb[0].mxu0
        %v636 = vadd.f32 %v367, %v635
        %v637 = vpop.f32.mrb[0].mxu0
        %v638 = vpop.f32.mrb[0].mxu0
        %v639 = vadd.f32 %v367, %v638
        %v640 = vpop.f32.mrb[0].mxu0
        %641 = vmatprep.mubr.bf16.mxu0 0
        %642 = vmatmul.mubr.bf16.gmra.mrb[0].mxu0 %v445
        %v643 = vpop.f32.mrb[0].mxu0
        %v644 = vadd.f32 %v367, %v643
        %v645 = vpop.f32.mrb[0].mxu0
        %v646 = vpop.f32.mrb[0].mxu0
        %v647 = vadd.f32 %v367, %v646
        %v648 = vpop.f32.mrb[0].mxu0
        %649 = vmatprep.mubr.bf16.mxu0 0
        %650 = vmatmul.mubr.bf16.gmra.mrb[0].mxu0 %v446
        %v651 = vpop.f32.mrb[0].mxu0
        %v652 = vadd.f32 %v367, %v651
        %v653 = vpop.f32.mrb[0].mxu0
        %v654 = vpop.f32.mrb[0].mxu0
        %v655 = vadd.f32 %v367, %v654
        %v656 = vpop.f32.mrb[0].mxu0
        %657 = vmatprep.mubr.bf16.mxu0 0
        %658 = vmatmul.mubr.bf16.gmra.mrb[0].mxu0 %v447
        %v659 = vpop.f32.mrb[0].mxu0
        %v660 = vadd.f32 %v367, %v659
        %v661 = vpop.f32.mrb[0].mxu0
        %v662 = vpop.f32.mrb[0].mxu0
        %v663 = vadd.f32 %v367, %v662
        %v664 = vpop.f32.mrb[0].mxu0
        %665 = vmatprep.mubr.bf16.mxu0 0
        %666 = vmatmul.mubr.bf16.gmra.mrb[0].mxu0 %v448
        %v667 = vpop.f32.mrb[0].mxu0
        %v668 = vadd.f32 %v367, %v667
        %v669 = vpop.f32.mrb[0].mxu0
        %v670 = vpop.f32.mrb[0].mxu0
        %v671 = vadd.f32 %v367, %v670
        %v672 = vpop.f32.mrb[0].mxu0
        %673 = vdwg.mxu0
        %vm674 = vcmp.gt.f32.partialorder %v548, 0.0
        %vm675 = vcmp.gt.f32.partialorder %v551, 0.0
        %vm676 = vcmp.gt.f32.partialorder %v556, 0.0
        %vm677 = vcmp.gt.f32.partialorder %v559, 0.0
        %vm678 = vcmp.gt.f32.partialorder %v564, 0.0
        %vm679 = vcmp.gt.f32.partialorder %v567, 0.0
        %vm680 = vcmp.gt.f32.partialorder %v572, 0.0
        %vm681 = vcmp.gt.f32.partialorder %v575, 0.0
        %vm682 = vcmp.gt.f32.partialorder %v580, 0.0
        %vm683 = vcmp.gt.f32.partialorder %v583, 0.0
        %vm684 = vcmp.gt.f32.partialorder %v588, 0.0
        %vm685 = vcmp.gt.f32.partialorder %v591, 0.0
        %vm686 = vcmp.gt.f32.partialorder %v596, 0.0
        %vm687 = vcmp.gt.f32.partialorder %v599, 0.0
        %vm688 = vcmp.gt.f32.partialorder %v604, 0.0
        %vm689 = vcmp.gt.f32.partialorder %v607, 0.0
        %vm690 = vcmp.gt.f32.partialorder %v612, 0.0
        %vm691 = vcmp.gt.f32.partialorder %v615, 0.0
        %vm692 = vcmp.gt.f32.partialorder %v620, 0.0
        %vm693 = vcmp.gt.f32.partialorder %v623, 0.0
        %vm694 = vcmp.gt.f32.partialorder %v628, 0.0
        %vm695 = vcmp.gt.f32.partialorder %v631, 0.0
        %vm696 = vcmp.gt.f32.partialorder %v636, 0.0
        %vm697 = vcmp.gt.f32.partialorder %v639, 0.0
        %vm698 = vcmp.gt.f32.partialorder %v644, 0.0
        %vm699 = vcmp.gt.f32.partialorder %v647, 0.0
        %vm700 = vcmp.gt.f32.partialorder %v652, 0.0
        %vm701 = vcmp.gt.f32.partialorder %v655, 0.0
        %vm702 = vcmp.gt.f32.partialorder %v660, 0.0
        %vm703 = vcmp.gt.f32.partialorder %v663, 0.0
        %vm704 = vcmp.gt.f32.partialorder %v668, 0.0
        %vm705 = vcmp.gt.f32.partialorder %v671, 0.0
        %v706 = vmul.f32 %v548, 0.01
        %v707 = vmul.f32 %v551, 0.01
        %v708 = vmul.f32 %v556, 0.01
        %v709 = vmul.f32 %v559, 0.01
        %v710 = vmul.f32 %v564, 0.01
        %v711 = vmul.f32 %v567, 0.01
        %v712 = vmul.f32 %v572, 0.01
        %v713 = vmul.f32 %v575, 0.01
        %v714 = vmul.f32 %v580, 0.01
        %v715 = vmul.f32 %v583, 0.01
        %v716 = vmul.f32 %v588, 0.01
        %v717 = vmul.f32 %v591, 0.01
        %v718 = vmul.f32 %v596, 0.01
        %v719 = vmul.f32 %v599, 0.01
        %v720 = vmul.f32 %v604, 0.01
        %v721 = vmul.f32 %v607, 0.01
        %v722 = vmul.f32 %v612, 0.01
        %v723 = vmul.f32 %v615, 0.01
        %v724 = vmul.f32 %v620, 0.01
        %v725 = vmul.f32 %v623, 0.01
        %v726 = vmul.f32 %v628, 0.01
        %v727 = vmul.f32 %v631, 0.01
        %v728 = vmul.f32 %v636, 0.01
        %v729 = vmul.f32 %v639, 0.01
        %v730 = vmul.f32 %v644, 0.01
        %v731 = vmul.f32 %v647, 0.01
        %v732 = vmul.f32 %v652, 0.01
        %v733 = vmul.f32 %v655, 0.01
        %v734 = vmul.f32 %v660, 0.01
        %v735 = vmul.f32 %v663, 0.01
        %v736 = vmul.f32 %v668, 0.01
        %v737 = vmul.f32 %v671, 0.01
        %v738 = vsel %vm674, %v548, %v706
        %v739 = vsel %vm675, %v551, %v707
        %v740 = vsel %vm676, %v556, %v708
        %v741 = vsel %vm677, %v559, %v709
        %v742 = vsel %vm678, %v564, %v710
        %v743 = vsel %vm679, %v567, %v711
        %v744 = vsel %vm680, %v572, %v712
        %v745 = vsel %vm681, %v575, %v713
        %v746 = vsel %vm682, %v580, %v714
        %v747 = vsel %vm683, %v583, %v715
        %v748 = vsel %vm684, %v588, %v716
        %v749 = vsel %vm685, %v591, %v717
        %v750 = vsel %vm686, %v596, %v718
        %v751 = vsel %vm687, %v599, %v719
        %v752 = vsel %vm688, %v604, %v720
        %v753 = vsel %vm689, %v607, %v721
        %v754 = vsel %vm690, %v612, %v722
        %v755 = vsel %vm691, %v615, %v723
        %v756 = vsel %vm692, %v620, %v724
        %v757 = vsel %vm693, %v623, %v725
        %v758 = vsel %vm694, %v628, %v726
        %v759 = vsel %vm695, %v631, %v727
        %v760 = vsel %vm696, %v636, %v728
        %v761 = vsel %vm697, %v639, %v729
        %v762 = vsel %vm698, %v644, %v730
        %v763 = vsel %vm699, %v647, %v731
        %v764 = vsel %vm700, %v652, %v732
        %v765 = vsel %vm701, %v655, %v733
        %v766 = vsel %vm702, %v660, %v734
        %v767 = vsel %vm703, %v663, %v735
        %v768 = vsel %vm704, %v668, %v736
        %v769 = vsel %vm705, %v671, %v737
        %v770 = vpack.c.bf16 %v739, %v738
        %v771 = vpack.c.bf16 %v741, %v740
        %v772 = vpack.c.bf16 %v743, %v742
        %v773 = vpack.c.bf16 %v745, %v744
        %v774 = vpack.c.bf16 %v747, %v746
        %v775 = vpack.c.bf16 %v749, %v748
        %v776 = vpack.c.bf16 %v751, %v750
        %v777 = vpack.c.bf16 %v753, %v752
        %v778 = vpack.c.bf16 %v755, %v754
        %v779 = vpack.c.bf16 %v757, %v756
        %v780 = vpack.c.bf16 %v759, %v758
        %v781 = vpack.c.bf16 %v761, %v760
        %v782 = vpack.c.bf16 %v763, %v762
        %v783 = vpack.c.bf16 %v765, %v764
        %v784 = vpack.c.bf16 %v767, %v766
        %v785 = vpack.c.bf16 %v769, %v768
        %s786 = scalar_lea.vmem [#allocation5], 64
        %v787 = vld [vmem:[%s786] sm:$0xf]
        %v788 = vld [vmem:[%s786 + $0x4] sm:$0xf]
        %v789 = vld [vmem:[%s786 + $0x8] sm:$0xf]
        %v790 = vld [vmem:[%s786 + $0xc] sm:$0xf]
        %v791 = vld [vmem:[%s786 + $0x10] sm:$0xf]
        %v792 = vld [vmem:[%s786 + $0x14] sm:$0xf]
        %v793 = vld [vmem:[%s786 + $0x18] sm:$0xf]
        %v794 = vld [vmem:[%s786 + $0x1c] sm:$0xf]
        %v795 = vld [vmem:[%s786 + $0x20] sm:$0xf]
        %v796 = vld [vmem:[%s786 + $0x24] sm:$0xf]
        %v797 = vld [vmem:[%s786 + $0x28] sm:$0xf]
        %v798 = vld [vmem:[%s786 + $0x2c] sm:$0xf]
        %v799 = vld [vmem:[%s786 + $0x30] sm:$0xf]
        %v800 = vld [vmem:[%s786 + $0x34] sm:$0xf]
        %v801 = vld [vmem:[%s786 + $0x38] sm:$0xf]
        %v802 = vld [vmem:[%s786 + $0x3c] sm:$0xf]
        %s803 = scalar_lea.vmem %s2, 1
        %v804 = vld [vmem:[%s803] sm:$0x1]
        %v806 = vlaneseq
        %v807 = vshrl.u32 %v806, 7
        %v808 = vsub.s32 0, %v807
        %v809 = vrot.slane %v804, %v808
        %v827 = vunpack.c.l.b16 %v787
        %v828 = vunpack.c.l.b16 %v788
        %v829 = vunpack.c.l.b16 %v789
        %v830 = vunpack.c.l.b16 %v790
        %v831 = vunpack.c.l.b16 %v791
        %v832 = vunpack.c.l.b16 %v792
        %v833 = vunpack.c.l.b16 %v793
        %v834 = vunpack.c.l.b16 %v794
        %v835 = vunpack.c.l.b16 %v795
        %v836 = vunpack.c.l.b16 %v796
        %v837 = vunpack.c.l.b16 %v797
        %v838 = vunpack.c.l.b16 %v798
        %v839 = vunpack.c.l.b16 %v799
        %v840 = vunpack.c.l.b16 %v800
        %v841 = vunpack.c.l.b16 %v801
        %v842 = vunpack.c.l.b16 %v802
        %v843 = vpack.c.b16 %v828, %v827
        %v844 = vpack.c.b16 %v830, %v829
        %v845 = vpack.c.b16 %v832, %v831
        %v846 = vpack.c.b16 %v834, %v833
        %v847 = vpack.c.b16 %v836, %v835
        %v848 = vpack.c.b16 %v838, %v837
        %v849 = vpack.c.b16 %v840, %v839
        %v850 = vpack.c.b16 %v842, %v841
        %859 = vmatprep.subr.bf16.mxu0 0
        %860 = vmatpush1.bf16.msra.mxu0 %v843
        %861 = vmatprep.subr.bf16.mxu0 0
        %862 = vmatpush1.bf16.msra.mxu0 %v844
        %863 = vmatprep.subr.bf16.mxu0 0
        %864 = vmatpush1.bf16.msra.mxu0 %v845
        %865 = vmatprep.subr.bf16.mxu0 0
        %866 = vmatpush1.bf16.msra.mxu0 %v846
        %867 = vmatprep.subr.bf16.mxu0 0
        %868 = vmatpush1.bf16.msra.mxu0 %v847
        %869 = vmatprep.subr.bf16.mxu0 0
        %870 = vmatpush1.bf16.msra.mxu0 %v848
        %871 = vmatprep.subr.bf16.mxu0 0
        %872 = vmatpush1.bf16.msra.mxu0 %v849
        %873 = vmatprep.subr.bf16.mxu0 0
        %874 = vmatpush1.bf16.msra.mxu0 %v850
        %875 = vmatprep.subr.bf16.mxu0 0
        %876 = vmatpush1.bf16.msra.mxu0 0
        %877 = vmatprep.subr.bf16.mxu0 0
        %878 = vmatpush1.bf16.msra.mxu0 0
        %879 = vmatprep.subr.bf16.mxu0 0
        %880 = vmatpush1.bf16.msra.mxu0 0
        %881 = vmatprep.subr.bf16.mxu0 0
        %882 = vmatpush1.bf16.msra.mxu0 0
        %883 = vmatprep.subr.bf16.mxu0 0
        %884 = vmatpush1.bf16.msra.mxu0 0
        %885 = vmatprep.subr.bf16.mxu0 0
        %886 = vmatpush1.bf16.msra.mxu0 0
        %887 = vmatprep.subr.bf16.mxu0 0
        %888 = vmatpush1.bf16.msra.mxu0 0
        %889 = vmatprep.subr.bf16.mxu0 0
        %890 = vmatpush1.bf16.msra.mxu0 0
        %891 = vmatprep.mubr.bf16.mxu0 0
        %892 = vmatmul.mubr.bf16.gmra.mrb[0].mxu0 %v770
        %v893 = vpop.f32.mrb[0].mxu0
        %v894 = vadd.f32 %v809, %v893
        %v895 = vpop.f32.mrb[0].mxu0
        %v896 = vpop.f32.mrb[0].mxu0
        %v897 = vadd.f32 %v809, %v896
        %v898 = vpop.f32.mrb[0].mxu0
        %899 = vmatprep.mubr.bf16.mxu0 0
        %900 = vmatmul.mubr.bf16.gmra.mrb[0].mxu0 %v771
        %v901 = vpop.f32.mrb[0].mxu0
        %v902 = vadd.f32 %v809, %v901
        %v903 = vpop.f32.mrb[0].mxu0
        %v904 = vpop.f32.mrb[0].mxu0
        %v905 = vadd.f32 %v809, %v904
        %v906 = vpop.f32.mrb[0].mxu0
        %907 = vmatprep.mubr.bf16.mxu0 0
        %908 = vmatmul.mubr.bf16.gmra.mrb[0].mxu0 %v772
        %v909 = vpop.f32.mrb[0].mxu0
        %v910 = vadd.f32 %v809, %v909
        %v911 = vpop.f32.mrb[0].mxu0
        %v912 = vpop.f32.mrb[0].mxu0
        %v913 = vadd.f32 %v809, %v912
        %v914 = vpop.f32.mrb[0].mxu0
        %915 = vmatprep.mubr.bf16.mxu0 0
        %916 = vmatmul.mubr.bf16.gmra.mrb[0].mxu0 %v773
        %v917 = vpop.f32.mrb[0].mxu0
        %v918 = vadd.f32 %v809, %v917
        %v919 = vpop.f32.mrb[0].mxu0
        %v920 = vpop.f32.mrb[0].mxu0
        %v921 = vadd.f32 %v809, %v920
        %v922 = vpop.f32.mrb[0].mxu0
        %923 = vmatprep.mubr.bf16.mxu0 0
        %924 = vmatmul.mubr.bf16.gmra.mrb[0].mxu0 %v774
        %v925 = vpop.f32.mrb[0].mxu0
        %v926 = vadd.f32 %v809, %v925
        %v927 = vpop.f32.mrb[0].mxu0
        %v928 = vpop.f32.mrb[0].mxu0
        %v929 = vadd.f32 %v809, %v928
        %v930 = vpop.f32.mrb[0].mxu0
        %931 = vmatprep.mubr.bf16.mxu0 0
        %932 = vmatmul.mubr.bf16.gmra.mrb[0].mxu0 %v775
        %v933 = vpop.f32.mrb[0].mxu0
        %v934 = vadd.f32 %v809, %v933
        %v935 = vpop.f32.mrb[0].mxu0
        %v936 = vpop.f32.mrb[0].mxu0
        %v937 = vadd.f32 %v809, %v936
        %v938 = vpop.f32.mrb[0].mxu0
        %939 = vmatprep.mubr.bf16.mxu0 0
        %940 = vmatmul.mubr.bf16.gmra.mrb[0].mxu0 %v776
        %v941 = vpop.f32.mrb[0].mxu0
        %v942 = vadd.f32 %v809, %v941
        %v943 = vpop.f32.mrb[0].mxu0
        %v944 = vpop.f32.mrb[0].mxu0
        %v945 = vadd.f32 %v809, %v944
        %v946 = vpop.f32.mrb[0].mxu0
        %947 = vmatprep.mubr.bf16.mxu0 0
        %948 = vmatmul.mubr.bf16.gmra.mrb[0].mxu0 %v777
        %v949 = vpop.f32.mrb[0].mxu0
        %v950 = vadd.f32 %v809, %v949
        %v951 = vpop.f32.mrb[0].mxu0
        %v952 = vpop.f32.mrb[0].mxu0
        %v953 = vadd.f32 %v809, %v952
        %v954 = vpop.f32.mrb[0].mxu0
        %955 = vmatprep.mubr.bf16.mxu0 0
        %956 = vmatmul.mubr.bf16.gmra.mrb[0].mxu0 %v778
        %v957 = vpop.f32.mrb[0].mxu0
        %v958 = vadd.f32 %v809, %v957
        %v959 = vpop.f32.mrb[0].mxu0
        %v960 = vpop.f32.mrb[0].mxu0
        %v961 = vadd.f32 %v809, %v960
        %v962 = vpop.f32.mrb[0].mxu0
        %963 = vmatprep.mubr.bf16.mxu0 0
        %964 = vmatmul.mubr.bf16.gmra.mrb[0].mxu0 %v779
        %v965 = vpop.f32.mrb[0].mxu0
        %v966 = vadd.f32 %v809, %v965
        %v967 = vpop.f32.mrb[0].mxu0
        %v968 = vpop.f32.mrb[0].mxu0
        %v969 = vadd.f32 %v809, %v968
        %v970 = vpop.f32.mrb[0].mxu0
        %971 = vmatprep.mubr.bf16.mxu0 0
        %972 = vmatmul.mubr.bf16.gmra.mrb[0].mxu0 %v780
        %v973 = vpop.f32.mrb[0].mxu0
        %v974 = vadd.f32 %v809, %v973
        %v975 = vpop.f32.mrb[0].mxu0
        %v976 = vpop.f32.mrb[0].mxu0
        %v977 = vadd.f32 %v809, %v976
        %v978 = vpop.f32.mrb[0].mxu0
        %979 = vmatprep.mubr.bf16.mxu0 0
        %980 = vmatmul.mubr.bf16.gmra.mrb[0].mxu0 %v781
        %v981 = vpop.f32.mrb[0].mxu0
        %v982 = vadd.f32 %v809, %v981
        %v983 = vpop.f32.mrb[0].mxu0
        %v984 = vpop.f32.mrb[0].mxu0
        %v985 = vadd.f32 %v809, %v984
        %v986 = vpop.f32.mrb[0].mxu0
        %987 = vmatprep.mubr.bf16.mxu0 0
        %988 = vmatmul.mubr.bf16.gmra.mrb[0].mxu0 %v782
        %v989 = vpop.f32.mrb[0].mxu0
        %v990 = vadd.f32 %v809, %v989
        %v991 = vpop.f32.mrb[0].mxu0
        %v992 = vpop.f32.mrb[0].mxu0
        %v993 = vadd.f32 %v809, %v992
        %v994 = vpop.f32.mrb[0].mxu0
        %995 = vmatprep.mubr.bf16.mxu0 0
        %996 = vmatmul.mubr.bf16.gmra.mrb[0].mxu0 %v783
        %v997 = vpop.f32.mrb[0].mxu0
        %v998 = vadd.f32 %v809, %v997
        %v999 = vpop.f32.mrb[0].mxu0
        %v1000 = vpop.f32.mrb[0].mxu0
        %v1001 = vadd.f32 %v809, %v1000
        %v1002 = vpop.f32.mrb[0].mxu0
        %1003 = vmatprep.mubr.bf16.mxu0 0
        %1004 = vmatmul.mubr.bf16.gmra.mrb[0].mxu0 %v784
        %v1005 = vpop.f32.mrb[0].mxu0
        %v1006 = vadd.f32 %v809, %v1005
        %v1007 = vpop.f32.mrb[0].mxu0
        %v1008 = vpop.f32.mrb[0].mxu0
        %v1009 = vadd.f32 %v809, %v1008
        %v1010 = vpop.f32.mrb[0].mxu0
        %1011 = vmatprep.mubr.bf16.mxu0 0
        %1012 = vmatmul.mubr.bf16.gmra.mrb[0].mxu0 %v785
        %v1013 = vpop.f32.mrb[0].mxu0
        %v1014 = vadd.f32 %v809, %v1013
        %v1015 = vpop.f32.mrb[0].mxu0
        %v1016 = vpop.f32.mrb[0].mxu0
        %v1017 = vadd.f32 %v809, %v1016
        %v1018 = vpop.f32.mrb[0].mxu0
        %1019 = vdwg.mxu0
        %vm1020 = vcmp.gt.f32.partialorder %v894, 0.0
        %vm1021 = vcmp.gt.f32.partialorder %v897, 0.0
        %vm1022 = vcmp.gt.f32.partialorder %v902, 0.0
        %vm1023 = vcmp.gt.f32.partialorder %v905, 0.0
        %vm1024 = vcmp.gt.f32.partialorder %v910, 0.0
        %vm1025 = vcmp.gt.f32.partialorder %v913, 0.0
        %vm1026 = vcmp.gt.f32.partialorder %v918, 0.0
        %vm1027 = vcmp.gt.f32.partialorder %v921, 0.0
        %vm1028 = vcmp.gt.f32.partialorder %v926, 0.0
        %vm1029 = vcmp.gt.f32.partialorder %v929, 0.0
        %vm1030 = vcmp.gt.f32.partialorder %v934, 0.0
        %vm1031 = vcmp.gt.f32.partialorder %v937, 0.0
        %vm1032 = vcmp.gt.f32.partialorder %v942, 0.0
        %vm1033 = vcmp.gt.f32.partialorder %v945, 0.0
        %vm1034 = vcmp.gt.f32.partialorder %v950, 0.0
        %vm1035 = vcmp.gt.f32.partialorder %v953, 0.0
        %vm1036 = vcmp.gt.f32.partialorder %v958, 0.0
        %vm1037 = vcmp.gt.f32.partialorder %v961, 0.0
        %vm1038 = vcmp.gt.f32.partialorder %v966, 0.0
        %vm1039 = vcmp.gt.f32.partialorder %v969, 0.0
        %vm1040 = vcmp.gt.f32.partialorder %v974, 0.0
        %vm1041 = vcmp.gt.f32.partialorder %v977, 0.0
        %vm1042 = vcmp.gt.f32.partialorder %v982, 0.0
        %vm1043 = vcmp.gt.f32.partialorder %v985, 0.0
        %vm1044 = vcmp.gt.f32.partialorder %v990, 0.0
        %vm1045 = vcmp.gt.f32.partialorder %v993, 0.0
        %vm1046 = vcmp.gt.f32.partialorder %v998, 0.0
        %vm1047 = vcmp.gt.f32.partialorder %v1001, 0.0
        %vm1048 = vcmp.gt.f32.partialorder %v1006, 0.0
        %vm1049 = vcmp.gt.f32.partialorder %v1009, 0.0
        %vm1050 = vcmp.gt.f32.partialorder %v1014, 0.0
        %vm1051 = vcmp.gt.f32.partialorder %v1017, 0.0
        %v1052 = vmul.f32 %v894, 0.01
        %v1053 = vmul.f32 %v897, 0.01
        %v1054 = vmul.f32 %v902, 0.01
        %v1055 = vmul.f32 %v905, 0.01
        %v1056 = vmul.f32 %v910, 0.01
        %v1057 = vmul.f32 %v913, 0.01
        %v1058 = vmul.f32 %v918, 0.01
        %v1059 = vmul.f32 %v921, 0.01
        %v1060 = vmul.f32 %v926, 0.01
        %v1061 = vmul.f32 %v929, 0.01
        %v1062 = vmul.f32 %v934, 0.01
        %v1063 = vmul.f32 %v937, 0.01
        %v1064 = vmul.f32 %v942, 0.01
        %v1065 = vmul.f32 %v945, 0.01
        %v1066 = vmul.f32 %v950, 0.01
        %v1067 = vmul.f32 %v953, 0.01
        %v1068 = vmul.f32 %v958, 0.01
        %v1069 = vmul.f32 %v961, 0.01
        %v1070 = vmul.f32 %v966, 0.01
        %v1071 = vmul.f32 %v969, 0.01
        %v1072 = vmul.f32 %v974, 0.01
        %v1073 = vmul.f32 %v977, 0.01
        %v1074 = vmul.f32 %v982, 0.01
        %v1075 = vmul.f32 %v985, 0.01
        %v1076 = vmul.f32 %v990, 0.01
        %v1077 = vmul.f32 %v993, 0.01
        %v1078 = vmul.f32 %v998, 0.01
        %v1079 = vmul.f32 %v1001, 0.01
        %v1080 = vmul.f32 %v1006, 0.01
        %v1081 = vmul.f32 %v1009, 0.01
        %v1082 = vmul.f32 %v1014, 0.01
        %v1083 = vmul.f32 %v1017, 0.01
        %v1084 = vsel %vm1020, %v894, %v1052
        %v1085 = vsel %vm1021, %v897, %v1053
        %v1086 = vsel %vm1022, %v902, %v1054
        %v1087 = vsel %vm1023, %v905, %v1055
        %v1088 = vsel %vm1024, %v910, %v1056
        %v1089 = vsel %vm1025, %v913, %v1057
        %v1090 = vsel %vm1026, %v918, %v1058
        %v1091 = vsel %vm1027, %v921, %v1059
        %v1092 = vsel %vm1028, %v926, %v1060
        %v1093 = vsel %vm1029, %v929, %v1061
        %v1094 = vsel %vm1030, %v934, %v1062
        %v1095 = vsel %vm1031, %v937, %v1063
        %v1096 = vsel %vm1032, %v942, %v1064
        %v1097 = vsel %vm1033, %v945, %v1065
        %v1098 = vsel %vm1034, %v950, %v1066
        %v1099 = vsel %vm1035, %v953, %v1067
        %v1100 = vsel %vm1036, %v958, %v1068
        %v1101 = vsel %vm1037, %v961, %v1069
        %v1102 = vsel %vm1038, %v966, %v1070
        %v1103 = vsel %vm1039, %v969, %v1071
        %v1104 = vsel %vm1040, %v974, %v1072
        %v1105 = vsel %vm1041, %v977, %v1073
        %v1106 = vsel %vm1042, %v982, %v1074
        %v1107 = vsel %vm1043, %v985, %v1075
        %v1108 = vsel %vm1044, %v990, %v1076
        %v1109 = vsel %vm1045, %v993, %v1077
        %v1110 = vsel %vm1046, %v998, %v1078
        %v1111 = vsel %vm1047, %v1001, %v1079
        %v1112 = vsel %vm1048, %v1006, %v1080
        %v1113 = vsel %vm1049, %v1009, %v1081
        %v1114 = vsel %vm1050, %v1014, %v1082
        %v1115 = vsel %vm1051, %v1017, %v1083
        %v1116 = vpack.c.bf16 %v1085, %v1084
        %v1117 = vpack.c.bf16 %v1087, %v1086
        %v1118 = vpack.c.bf16 %v1089, %v1088
        %v1119 = vpack.c.bf16 %v1091, %v1090
        %v1120 = vpack.c.bf16 %v1093, %v1092
        %v1121 = vpack.c.bf16 %v1095, %v1094
        %v1122 = vpack.c.bf16 %v1097, %v1096
        %v1123 = vpack.c.bf16 %v1099, %v1098
        %v1124 = vpack.c.bf16 %v1101, %v1100
        %v1125 = vpack.c.bf16 %v1103, %v1102
        %v1126 = vpack.c.bf16 %v1105, %v1104
        %v1127 = vpack.c.bf16 %v1107, %v1106
        %v1128 = vpack.c.bf16 %v1109, %v1108
        %v1129 = vpack.c.bf16 %v1111, %v1110
        %v1130 = vpack.c.bf16 %v1113, %v1112
        %v1131 = vpack.c.bf16 %v1115, %v1114
        %s1132 = scalar_lea.vmem [#allocation5], 128
        %v1133 = vld [vmem:[%s1132] sm:$0xf]
        %v1134 = vld [vmem:[%s1132 + $0x4] sm:$0xf]
        %v1135 = vld [vmem:[%s1132 + $0x8] sm:$0xf]
        %v1136 = vld [vmem:[%s1132 + $0xc] sm:$0xf]
        %v1137 = vld [vmem:[%s1132 + $0x10] sm:$0xf]
        %v1138 = vld [vmem:[%s1132 + $0x14] sm:$0xf]
        %v1139 = vld [vmem:[%s1132 + $0x18] sm:$0xf]
        %v1140 = vld [vmem:[%s1132 + $0x1c] sm:$0xf]
        %v1141 = vld [vmem:[%s1132 + $0x20] sm:$0xf]
        %v1142 = vld [vmem:[%s1132 + $0x24] sm:$0xf]
        %v1143 = vld [vmem:[%s1132 + $0x28] sm:$0xf]
        %v1144 = vld [vmem:[%s1132 + $0x2c] sm:$0xf]
        %v1145 = vld [vmem:[%s1132 + $0x30] sm:$0xf]
        %v1146 = vld [vmem:[%s1132 + $0x34] sm:$0xf]
        %v1147 = vld [vmem:[%s1132 + $0x38] sm:$0xf]
        %v1148 = vld [vmem:[%s1132 + $0x3c] sm:$0xf]
        %s1149 = scalar_lea.vmem %s2, 2
        %v1150 = vld [vmem:[%s1149] sm:$0x1]
        %v1152 = vlaneseq
        %v1153 = vshrl.u32 %v1152, 7
        %v1154 = vsub.s32 0, %v1153
        %v1155 = vrot.slane %v1150, %v1154
        %v1173 = vunpack.c.l.b16 %v1133
        %v1174 = vunpack.c.l.b16 %v1134
        %v1175 = vunpack.c.l.b16 %v1135
        %v1176 = vunpack.c.l.b16 %v1136
        %v1177 = vunpack.c.l.b16 %v1137
        %v1178 = vunpack.c.l.b16 %v1138
        %v1179 = vunpack.c.l.b16 %v1139
        %v1180 = vunpack.c.l.b16 %v1140
        %v1181 = vunpack.c.l.b16 %v1141
        %v1182 = vunpack.c.l.b16 %v1142
        %v1183 = vunpack.c.l.b16 %v1143
        %v1184 = vunpack.c.l.b16 %v1144
        %v1185 = vunpack.c.l.b16 %v1145
        %v1186 = vunpack.c.l.b16 %v1146
        %v1187 = vunpack.c.l.b16 %v1147
        %v1188 = vunpack.c.l.b16 %v1148
        %v1189 = vpack.c.b16 %v1174, %v1173
        %v1190 = vpack.c.b16 %v1176, %v1175
        %v1191 = vpack.c.b16 %v1178, %v1177
        %v1192 = vpack.c.b16 %v1180, %v1179
        %v1193 = vpack.c.b16 %v1182, %v1181
        %v1194 = vpack.c.b16 %v1184, %v1183
        %v1195 = vpack.c.b16 %v1186, %v1185
        %v1196 = vpack.c.b16 %v1188, %v1187
        %1205 = vmatprep.subr.bf16.mxu0 0
        %1206 = vmatpush1.bf16.msra.mxu0 %v1189
        %1207 = vmatprep.subr.bf16.mxu0 0
        %1208 = vmatpush1.bf16.msra.mxu0 %v1190
        %1209 = vmatprep.subr.bf16.mxu0 0
        %1210 = vmatpush1.bf16.msra.mxu0 %v1191
        %1211 = vmatprep.subr.bf16.mxu0 0
        %1212 = vmatpush1.bf16.msra.mxu0 %v1192
        %1213 = vmatprep.subr.bf16.mxu0 0
        %1214 = vmatpush1.bf16.msra.mxu0 %v1193
        %1215 = vmatprep.subr.bf16.mxu0 0
        %1216 = vmatpush1.bf16.msra.mxu0 %v1194
        %1217 = vmatprep.subr.bf16.mxu0 0
        %1218 = vmatpush1.bf16.msra.mxu0 %v1195
        %1219 = vmatprep.subr.bf16.mxu0 0
        %1220 = vmatpush1.bf16.msra.mxu0 %v1196
        %1221 = vmatprep.subr.bf16.mxu0 0
        %1222 = vmatpush1.bf16.msra.mxu0 0
        %1223 = vmatprep.subr.bf16.mxu0 0
        %1224 = vmatpush1.bf16.msra.mxu0 0
        %1225 = vmatprep.subr.bf16.mxu0 0
        %1226 = vmatpush1.bf16.msra.mxu0 0
        %1227 = vmatprep.subr.bf16.mxu0 0
        %1228 = vmatpush1.bf16.msra.mxu0 0
        %1229 = vmatprep.subr.bf16.mxu0 0
        %1230 = vmatpush1.bf16.msra.mxu0 0
        %1231 = vmatprep.subr.bf16.mxu0 0
        %1232 = vmatpush1.bf16.msra.mxu0 0
        %1233 = vmatprep.subr.bf16.mxu0 0
        %1234 = vmatpush1.bf16.msra.mxu0 0
        %1235 = vmatprep.subr.bf16.mxu0 0
        %1236 = vmatpush1.bf16.msra.mxu0 0
        %1237 = vmatprep.mubr.bf16.mxu0 0
        %1238 = vmatmul.mubr.bf16.gmra.mrb[0].mxu0 %v1116
        %v1239 = vpop.f32.mrb[0].mxu0
        %v1240 = vadd.f32 %v1155, %v1239
        %v1241 = vpop.f32.mrb[0].mxu0
        %v1242 = vpop.f32.mrb[0].mxu0
        %v1243 = vadd.f32 %v1155, %v1242
        %v1244 = vpop.f32.mrb[0].mxu0
        %1245 = vmatprep.mubr.bf16.mxu0 0
        %1246 = vmatmul.mubr.bf16.gmra.mrb[0].mxu0 %v1117
        %v1247 = vpop.f32.mrb[0].mxu0
        %v1248 = vadd.f32 %v1155, %v1247
        %v1249 = vpop.f32.mrb[0].mxu0
        %v1250 = vpop.f32.mrb[0].mxu0
        %v1251 = vadd.f32 %v1155, %v1250
        %v1252 = vpop.f32.mrb[0].mxu0
        %1253 = vmatprep.mubr.bf16.mxu0 0
        %1254 = vmatmul.mubr.bf16.gmra.mrb[0].mxu0 %v1118
        %v1255 = vpop.f32.mrb[0].mxu0
        %v1256 = vadd.f32 %v1155, %v1255
        %v1257 = vpop.f32.mrb[0].mxu0
        %v1258 = vpop.f32.mrb[0].mxu0
        %v1259 = vadd.f32 %v1155, %v1258
        %v1260 = vpop.f32.mrb[0].mxu0
        %1261 = vmatprep.mubr.bf16.mxu0 0
        %1262 = vmatmul.mubr.bf16.gmra.mrb[0].mxu0 %v1119
        %v1263 = vpop.f32.mrb[0].mxu0
        %v1264 = vadd.f32 %v1155, %v1263
        %v1265 = vpop.f32.mrb[0].mxu0
        %v1266 = vpop.f32.mrb[0].mxu0
        %v1267 = vadd.f32 %v1155, %v1266
        %v1268 = vpop.f32.mrb[0].mxu0
        %1269 = vmatprep.mubr.bf16.mxu0 0
        %1270 = vmatmul.mubr.bf16.gmra.mrb[0].mxu0 %v1120
        %v1271 = vpop.f32.mrb[0].mxu0
        %v1272 = vadd.f32 %v1155, %v1271
        %v1273 = vpop.f32.mrb[0].mxu0
        %v1274 = vpop.f32.mrb[0].mxu0
        %v1275 = vadd.f32 %v1155, %v1274
        %v1276 = vpop.f32.mrb[0].mxu0
        %1277 = vmatprep.mubr.bf16.mxu0 0
        %1278 = vmatmul.mubr.bf16.gmra.mrb[0].mxu0 %v1121
        %v1279 = vpop.f32.mrb[0].mxu0
        %v1280 = vadd.f32 %v1155, %v1279
        %v1281 = vpop.f32.mrb[0].mxu0
        %v1282 = vpop.f32.mrb[0].mxu0
        %v1283 = vadd.f32 %v1155, %v1282
        %v1284 = vpop.f32.mrb[0].mxu0
        %1285 = vmatprep.mubr.bf16.mxu0 0
        %1286 = vmatmul.mubr.bf16.gmra.mrb[0].mxu0 %v1122
        %v1287 = vpop.f32.mrb[0].mxu0
        %v1288 = vadd.f32 %v1155, %v1287
        %v1289 = vpop.f32.mrb[0].mxu0
        %v1290 = vpop.f32.mrb[0].mxu0
        %v1291 = vadd.f32 %v1155, %v1290
        %v1292 = vpop.f32.mrb[0].mxu0
        %1293 = vmatprep.mubr.bf16.mxu0 0
        %1294 = vmatmul.mubr.bf16.gmra.mrb[0].mxu0 %v1123
        %v1295 = vpop.f32.mrb[0].mxu0
        %v1296 = vadd.f32 %v1155, %v1295
        %v1297 = vpop.f32.mrb[0].mxu0
        %v1298 = vpop.f32.mrb[0].mxu0
        %v1299 = vadd.f32 %v1155, %v1298
        %v1300 = vpop.f32.mrb[0].mxu0
        %1301 = vmatprep.mubr.bf16.mxu0 0
        %1302 = vmatmul.mubr.bf16.gmra.mrb[0].mxu0 %v1124
        %v1303 = vpop.f32.mrb[0].mxu0
        %v1304 = vadd.f32 %v1155, %v1303
        %v1305 = vpop.f32.mrb[0].mxu0
        %v1306 = vpop.f32.mrb[0].mxu0
        %v1307 = vadd.f32 %v1155, %v1306
        %v1308 = vpop.f32.mrb[0].mxu0
        %1309 = vmatprep.mubr.bf16.mxu0 0
        %1310 = vmatmul.mubr.bf16.gmra.mrb[0].mxu0 %v1125
        %v1311 = vpop.f32.mrb[0].mxu0
        %v1312 = vadd.f32 %v1155, %v1311
        %v1313 = vpop.f32.mrb[0].mxu0
        %v1314 = vpop.f32.mrb[0].mxu0
        %v1315 = vadd.f32 %v1155, %v1314
        %v1316 = vpop.f32.mrb[0].mxu0
        %1317 = vmatprep.mubr.bf16.mxu0 0
        %1318 = vmatmul.mubr.bf16.gmra.mrb[0].mxu0 %v1126
        %v1319 = vpop.f32.mrb[0].mxu0
        %v1320 = vadd.f32 %v1155, %v1319
        %v1321 = vpop.f32.mrb[0].mxu0
        %v1322 = vpop.f32.mrb[0].mxu0
        %v1323 = vadd.f32 %v1155, %v1322
        %v1324 = vpop.f32.mrb[0].mxu0
        %1325 = vmatprep.mubr.bf16.mxu0 0
        %1326 = vmatmul.mubr.bf16.gmra.mrb[0].mxu0 %v1127
        %v1327 = vpop.f32.mrb[0].mxu0
        %v1328 = vadd.f32 %v1155, %v1327
        %v1329 = vpop.f32.mrb[0].mxu0
        %v1330 = vpop.f32.mrb[0].mxu0
        %v1331 = vadd.f32 %v1155, %v1330
        %v1332 = vpop.f32.mrb[0].mxu0
        %1333 = vmatprep.mubr.bf16.mxu0 0
        %1334 = vmatmul.mubr.bf16.gmra.mrb[0].mxu0 %v1128
        %v1335 = vpop.f32.mrb[0].mxu0
        %v1336 = vadd.f32 %v1155, %v1335
        %v1337 = vpop.f32.mrb[0].mxu0
        %v1338 = vpop.f32.mrb[0].mxu0
        %v1339 = vadd.f32 %v1155, %v1338
        %v1340 = vpop.f32.mrb[0].mxu0
        %1341 = vmatprep.mubr.bf16.mxu0 0
        %1342 = vmatmul.mubr.bf16.gmra.mrb[0].mxu0 %v1129
        %v1343 = vpop.f32.mrb[0].mxu0
        %v1344 = vadd.f32 %v1155, %v1343
        %v1345 = vpop.f32.mrb[0].mxu0
        %v1346 = vpop.f32.mrb[0].mxu0
        %v1347 = vadd.f32 %v1155, %v1346
        %v1348 = vpop.f32.mrb[0].mxu0
        %1349 = vmatprep.mubr.bf16.mxu0 0
        %1350 = vmatmul.mubr.bf16.gmra.mrb[0].mxu0 %v1130
        %v1351 = vpop.f32.mrb[0].mxu0
        %v1352 = vadd.f32 %v1155, %v1351
        %v1353 = vpop.f32.mrb[0].mxu0
        %v1354 = vpop.f32.mrb[0].mxu0
        %v1355 = vadd.f32 %v1155, %v1354
        %v1356 = vpop.f32.mrb[0].mxu0
        %1357 = vmatprep.mubr.bf16.mxu0 0
        %1358 = vmatmul.mubr.bf16.gmra.mrb[0].mxu0 %v1131
        %v1359 = vpop.f32.mrb[0].mxu0
        %v1360 = vadd.f32 %v1155, %v1359
        %v1361 = vpop.f32.mrb[0].mxu0
        %v1362 = vpop.f32.mrb[0].mxu0
        %v1363 = vadd.f32 %v1155, %v1362
        %v1364 = vpop.f32.mrb[0].mxu0
        %1365 = vdwg.mxu0
        %vm1366 = vcmp.gt.f32.partialorder %v1240, 0.0
        %vm1367 = vcmp.gt.f32.partialorder %v1243, 0.0
        %vm1368 = vcmp.gt.f32.partialorder %v1248, 0.0
        %vm1369 = vcmp.gt.f32.partialorder %v1251, 0.0
        %vm1370 = vcmp.gt.f32.partialorder %v1256, 0.0
        %vm1371 = vcmp.gt.f32.partialorder %v1259, 0.0
        %vm1372 = vcmp.gt.f32.partialorder %v1264, 0.0
        %vm1373 = vcmp.gt.f32.partialorder %v1267, 0.0
        %vm1374 = vcmp.gt.f32.partialorder %v1272, 0.0
        %vm1375 = vcmp.gt.f32.partialorder %v1275, 0.0
        %vm1376 = vcmp.gt.f32.partialorder %v1280, 0.0
        %vm1377 = vcmp.gt.f32.partialorder %v1283, 0.0
        %vm1378 = vcmp.gt.f32.partialorder %v1288, 0.0
        %vm1379 = vcmp.gt.f32.partialorder %v1291, 0.0
        %vm1380 = vcmp.gt.f32.partialorder %v1296, 0.0
        %vm1381 = vcmp.gt.f32.partialorder %v1299, 0.0
        %vm1382 = vcmp.gt.f32.partialorder %v1304, 0.0
        %vm1383 = vcmp.gt.f32.partialorder %v1307, 0.0
        %vm1384 = vcmp.gt.f32.partialorder %v1312, 0.0
        %vm1385 = vcmp.gt.f32.partialorder %v1315, 0.0
        %vm1386 = vcmp.gt.f32.partialorder %v1320, 0.0
        %vm1387 = vcmp.gt.f32.partialorder %v1323, 0.0
        %vm1388 = vcmp.gt.f32.partialorder %v1328, 0.0
        %vm1389 = vcmp.gt.f32.partialorder %v1331, 0.0
        %vm1390 = vcmp.gt.f32.partialorder %v1336, 0.0
        %vm1391 = vcmp.gt.f32.partialorder %v1339, 0.0
        %vm1392 = vcmp.gt.f32.partialorder %v1344, 0.0
        %vm1393 = vcmp.gt.f32.partialorder %v1347, 0.0
        %vm1394 = vcmp.gt.f32.partialorder %v1352, 0.0
        %vm1395 = vcmp.gt.f32.partialorder %v1355, 0.0
        %vm1396 = vcmp.gt.f32.partialorder %v1360, 0.0
        %vm1397 = vcmp.gt.f32.partialorder %v1363, 0.0
        %v1398 = vmul.f32 %v1240, 0.01
        %v1399 = vmul.f32 %v1243, 0.01
        %v1400 = vmul.f32 %v1248, 0.01
        %v1401 = vmul.f32 %v1251, 0.01
        %v1402 = vmul.f32 %v1256, 0.01
        %v1403 = vmul.f32 %v1259, 0.01
        %v1404 = vmul.f32 %v1264, 0.01
        %v1405 = vmul.f32 %v1267, 0.01
        %v1406 = vmul.f32 %v1272, 0.01
        %v1407 = vmul.f32 %v1275, 0.01
        %v1408 = vmul.f32 %v1280, 0.01
        %v1409 = vmul.f32 %v1283, 0.01
        %v1410 = vmul.f32 %v1288, 0.01
        %v1411 = vmul.f32 %v1291, 0.01
        %v1412 = vmul.f32 %v1296, 0.01
        %v1413 = vmul.f32 %v1299, 0.01
        %v1414 = vmul.f32 %v1304, 0.01
        %v1415 = vmul.f32 %v1307, 0.01
        %v1416 = vmul.f32 %v1312, 0.01
        %v1417 = vmul.f32 %v1315, 0.01
        %v1418 = vmul.f32 %v1320, 0.01
        %v1419 = vmul.f32 %v1323, 0.01
        %v1420 = vmul.f32 %v1328, 0.01
        %v1421 = vmul.f32 %v1331, 0.01
        %v1422 = vmul.f32 %v1336, 0.01
        %v1423 = vmul.f32 %v1339, 0.01
        %v1424 = vmul.f32 %v1344, 0.01
        %v1425 = vmul.f32 %v1347, 0.01
        %v1426 = vmul.f32 %v1352, 0.01
        %v1427 = vmul.f32 %v1355, 0.01
        %v1428 = vmul.f32 %v1360, 0.01
        %v1429 = vmul.f32 %v1363, 0.01
        %v1430 = vsel %vm1366, %v1240, %v1398
        %v1431 = vsel %vm1367, %v1243, %v1399
        %v1432 = vsel %vm1368, %v1248, %v1400
        %v1433 = vsel %vm1369, %v1251, %v1401
        %v1434 = vsel %vm1370, %v1256, %v1402
        %v1435 = vsel %vm1371, %v1259, %v1403
        %v1436 = vsel %vm1372, %v1264, %v1404
        %v1437 = vsel %vm1373, %v1267, %v1405
        %v1438 = vsel %vm1374, %v1272, %v1406
        %v1439 = vsel %vm1375, %v1275, %v1407
        %v1440 = vsel %vm1376, %v1280, %v1408
        %v1441 = vsel %vm1377, %v1283, %v1409
        %v1442 = vsel %vm1378, %v1288, %v1410
        %v1443 = vsel %vm1379, %v1291, %v1411
        %v1444 = vsel %vm1380, %v1296, %v1412
        %v1445 = vsel %vm1381, %v1299, %v1413
        %v1446 = vsel %vm1382, %v1304, %v1414
        %v1447 = vsel %vm1383, %v1307, %v1415
        %v1448 = vsel %vm1384, %v1312, %v1416
        %v1449 = vsel %vm1385, %v1315, %v1417
        %v1450 = vsel %vm1386, %v1320, %v1418
        %v1451 = vsel %vm1387, %v1323, %v1419
        %v1452 = vsel %vm1388, %v1328, %v1420
        %v1453 = vsel %vm1389, %v1331, %v1421
        %v1454 = vsel %vm1390, %v1336, %v1422
        %v1455 = vsel %vm1391, %v1339, %v1423
        %v1456 = vsel %vm1392, %v1344, %v1424
        %v1457 = vsel %vm1393, %v1347, %v1425
        %v1458 = vsel %vm1394, %v1352, %v1426
        %v1459 = vsel %vm1395, %v1355, %v1427
        %v1460 = vsel %vm1396, %v1360, %v1428
        %v1461 = vsel %vm1397, %v1363, %v1429
        %v1462 = vpack.c.bf16 %v1431, %v1430
        %v1463 = vpack.c.bf16 %v1433, %v1432
        %v1464 = vpack.c.bf16 %v1435, %v1434
        %v1465 = vpack.c.bf16 %v1437, %v1436
        %v1466 = vpack.c.bf16 %v1439, %v1438
        %v1467 = vpack.c.bf16 %v1441, %v1440
        %v1468 = vpack.c.bf16 %v1443, %v1442
        %v1469 = vpack.c.bf16 %v1445, %v1444
        %v1470 = vpack.c.bf16 %v1447, %v1446
        %v1471 = vpack.c.bf16 %v1449, %v1448
        %v1472 = vpack.c.bf16 %v1451, %v1450
        %v1473 = vpack.c.bf16 %v1453, %v1452
        %v1474 = vpack.c.bf16 %v1455, %v1454
        %v1475 = vpack.c.bf16 %v1457, %v1456
        %v1476 = vpack.c.bf16 %v1459, %v1458
        %v1477 = vpack.c.bf16 %v1461, %v1460
        %v1478 = vld [vmem:[#allocation7] sm:$0xff]
        %v1479 = vld [vmem:[#allocation7 + $0x8] sm:$0xff]
        %v1480 = vld [vmem:[#allocation7 + $0x10] sm:$0xff]
        %v1481 = vld [vmem:[#allocation7 + $0x18] sm:$0xff]
        %v1482 = vld [vmem:[#allocation7 + $0x20] sm:$0xff]
        %v1483 = vld [vmem:[#allocation7 + $0x28] sm:$0xff]
        %v1484 = vld [vmem:[#allocation7 + $0x30] sm:$0xff]
        %v1485 = vld [vmem:[#allocation7 + $0x38] sm:$0xff]
        %v1486 = vld [vmem:[#allocation7 + $0x40] sm:$0xff]
        %v1487 = vld [vmem:[#allocation7 + $0x48] sm:$0xff]
        %v1488 = vld [vmem:[#allocation7 + $0x50] sm:$0xff]
        %v1489 = vld [vmem:[#allocation7 + $0x58] sm:$0xff]
        %v1490 = vld [vmem:[#allocation7 + $0x60] sm:$0xff]
        %v1491 = vld [vmem:[#allocation7 + $0x68] sm:$0xff]
        %v1492 = vld [vmem:[#allocation7 + $0x70] sm:$0xff]
        %v1493 = vld [vmem:[#allocation7 + $0x78] sm:$0xff]
        %v1494 = vld [vmem:[%s4] sm:$0x3]
        %v1496 = vlaneseq
        %v1497 = vshrl.u32 %v1496, 7
        %v1498 = vsub.s32 0, %v1497
        %v1499 = vrot.slane %v1494, %v1498
        %v1500 = vlaneseq
        %v1501 = vshrl.u32 %v1500, 7
        %v1502 = vsub.s32 1, %v1501
        %v1503 = vrot.slane %v1494, %v1502
        %v1522 = vunpack.c.l.b16 %v1478
        %v1523 = vunpack.c.h.b16 %v1478
        %v1524 = vunpack.c.l.b16 %v1479
        %v1525 = vunpack.c.h.b16 %v1479
        %v1526 = vunpack.c.l.b16 %v1480
        %v1527 = vunpack.c.h.b16 %v1480
        %v1528 = vunpack.c.l.b16 %v1481
        %v1529 = vunpack.c.h.b16 %v1481
        %v1530 = vunpack.c.l.b16 %v1482
        %v1531 = vunpack.c.h.b16 %v1482
        %v1532 = vunpack.c.l.b16 %v1483
        %v1533 = vunpack.c.h.b16 %v1483
        %v1534 = vunpack.c.l.b16 %v1484
        %v1535 = vunpack.c.h.b16 %v1484
        %v1536 = vunpack.c.l.b16 %v1485
        %v1537 = vunpack.c.h.b16 %v1485
        %v1538 = vunpack.c.l.b16 %v1486
        %v1539 = vunpack.c.h.b16 %v1486
        %v1540 = vunpack.c.l.b16 %v1487
        %v1541 = vunpack.c.h.b16 %v1487
        %v1542 = vunpack.c.l.b16 %v1488
        %v1543 = vunpack.c.h.b16 %v1488
        %v1544 = vunpack.c.l.b16 %v1489
        %v1545 = vunpack.c.h.b16 %v1489
        %v1546 = vunpack.c.l.b16 %v1490
        %v1547 = vunpack.c.h.b16 %v1490
        %v1548 = vunpack.c.l.b16 %v1491
        %v1549 = vunpack.c.h.b16 %v1491
        %v1550 = vunpack.c.l.b16 %v1492
        %v1551 = vunpack.c.h.b16 %v1492
        %v1552 = vunpack.c.l.b16 %v1493
        %v1553 = vunpack.c.h.b16 %v1493
        %v1554 = vpack.c.b16 %v1524, %v1522
        %v1555 = vpack.c.b16 %v1525, %v1523
        %v1556 = vpack.c.b16 %v1528, %v1526
        %v1557 = vpack.c.b16 %v1529, %v1527
        %v1558 = vpack.c.b16 %v1532, %v1530
        %v1559 = vpack.c.b16 %v1533, %v1531
        %v1560 = vpack.c.b16 %v1536, %v1534
        %v1561 = vpack.c.b16 %v1537, %v1535
        %v1562 = vpack.c.b16 %v1540, %v1538
        %v1563 = vpack.c.b16 %v1541, %v1539
        %v1564 = vpack.c.b16 %v1544, %v1542
        %v1565 = vpack.c.b16 %v1545, %v1543
        %v1566 = vpack.c.b16 %v1548, %v1546
        %v1567 = vpack.c.b16 %v1549, %v1547
        %v1568 = vpack.c.b16 %v1552, %v1550
        %v1569 = vpack.c.b16 %v1553, %v1551
        %1586 = vmatprep.subr.bf16.mxu0 %v1555
        %1587 = vmatpush1.bf16.msra.mxu0 %v1554
        %1588 = vmatprep.subr.bf16.mxu0 %v1557
        %1589 = vmatpush1.bf16.msra.mxu0 %v1556
        %1590 = vmatprep.subr.bf16.mxu0 %v1559
        %1591 = vmatpush1.bf16.msra.mxu0 %v1558
        %1592 = vmatprep.subr.bf16.mxu0 %v1561
        %1593 = vmatpush1.bf16.msra.mxu0 %v1560
        %1594 = vmatprep.subr.bf16.mxu0 %v1563
        %1595 = vmatpush1.bf16.msra.mxu0 %v1562
        %1596 = vmatprep.subr.bf16.mxu0 %v1565
        %1597 = vmatpush1.bf16.msra.mxu0 %v1564
        %1598 = vmatprep.subr.bf16.mxu0 %v1567
        %1599 = vmatpush1.bf16.msra.mxu0 %v1566
        %1600 = vmatprep.subr.bf16.mxu0 %v1569
        %1601 = vmatpush1.bf16.msra.mxu0 %v1568
        %1602 = vmatprep.subr.bf16.mxu0 0
        %1603 = vmatpush1.bf16.msra.mxu0 0
        %1604 = vmatprep.subr.bf16.mxu0 0
        %1605 = vmatpush1.bf16.msra.mxu0 0
        %1606 = vmatprep.subr.bf16.mxu0 0
        %1607 = vmatpush1.bf16.msra.mxu0 0
        %1608 = vmatprep.subr.bf16.mxu0 0
        %1609 = vmatpush1.bf16.msra.mxu0 0
        %1610 = vmatprep.subr.bf16.mxu0 0
        %1611 = vmatpush1.bf16.msra.mxu0 0
        %1612 = vmatprep.subr.bf16.mxu0 0
        %1613 = vmatpush1.bf16.msra.mxu0 0
        %1614 = vmatprep.subr.bf16.mxu0 0
        %1615 = vmatpush1.bf16.msra.mxu0 0
        %1616 = vmatprep.subr.bf16.mxu0 0
        %1617 = vmatpush1.bf16.msra.mxu0 0
        %1618 = vmatprep.mubr.bf16.mxu0 0
        %1619 = vmatmul.mubr.bf16.gmra.mrb[0].mxu0 %v1462
        %v1620 = vpop.f32.mrb[0].mxu0
        %v1621 = vadd.f32 %v1499, %v1620
        %v1622 = vpop.f32.mrb[0].mxu0
        %v1623 = vadd.f32 %v1503, %v1622
        %v1624 = vpop.f32.mrb[0].mxu0
        %v1625 = vadd.f32 %v1499, %v1624
        %v1626 = vpop.f32.mrb[0].mxu0
        %v1627 = vadd.f32 %v1503, %v1626
        %1628 = vmatprep.mubr.bf16.mxu0 0
        %1629 = vmatmul.mubr.bf16.gmra.mrb[0].mxu0 %v1463
        %v1630 = vpop.f32.mrb[0].mxu0
        %v1631 = vadd.f32 %v1499, %v1630
        %v1632 = vpop.f32.mrb[0].mxu0
        %v1633 = vadd.f32 %v1503, %v1632
        %v1634 = vpop.f32.mrb[0].mxu0
        %v1635 = vadd.f32 %v1499, %v1634
        %v1636 = vpop.f32.mrb[0].mxu0
        %v1637 = vadd.f32 %v1503, %v1636
        %1638 = vmatprep.mubr.bf16.mxu0 0
        %1639 = vmatmul.mubr.bf16.gmra.mrb[0].mxu0 %v1464
        %v1640 = vpop.f32.mrb[0].mxu0
        %v1641 = vadd.f32 %v1499, %v1640
        %v1642 = vpop.f32.mrb[0].mxu0
        %v1643 = vadd.f32 %v1503, %v1642
        %v1644 = vpop.f32.mrb[0].mxu0
        %v1645 = vadd.f32 %v1499, %v1644
        %v1646 = vpop.f32.mrb[0].mxu0
        %v1647 = vadd.f32 %v1503, %v1646
        %1648 = vmatprep.mubr.bf16.mxu0 0
        %1649 = vmatmul.mubr.bf16.gmra.mrb[0].mxu0 %v1465
        %v1650 = vpop.f32.mrb[0].mxu0
        %v1651 = vadd.f32 %v1499, %v1650
        %v1652 = vpop.f32.mrb[0].mxu0
        %v1653 = vadd.f32 %v1503, %v1652
        %v1654 = vpop.f32.mrb[0].mxu0
        %v1655 = vadd.f32 %v1499, %v1654
        %v1656 = vpop.f32.mrb[0].mxu0
        %v1657 = vadd.f32 %v1503, %v1656
        %1658 = vmatprep.mubr.bf16.mxu0 0
        %1659 = vmatmul.mubr.bf16.gmra.mrb[0].mxu0 %v1466
        %v1660 = vpop.f32.mrb[0].mxu0
        %v1661 = vadd.f32 %v1499, %v1660
        %v1662 = vpop.f32.mrb[0].mxu0
        %v1663 = vadd.f32 %v1503, %v1662
        %v1664 = vpop.f32.mrb[0].mxu0
        %v1665 = vadd.f32 %v1499, %v1664
        %v1666 = vpop.f32.mrb[0].mxu0
        %v1667 = vadd.f32 %v1503, %v1666
        %1668 = vmatprep.mubr.bf16.mxu0 0
        %1669 = vmatmul.mubr.bf16.gmra.mrb[0].mxu0 %v1467
        %v1670 = vpop.f32.mrb[0].mxu0
        %v1671 = vadd.f32 %v1499, %v1670
        %v1672 = vpop.f32.mrb[0].mxu0
        %v1673 = vadd.f32 %v1503, %v1672
        %v1674 = vpop.f32.mrb[0].mxu0
        %v1675 = vadd.f32 %v1499, %v1674
        %v1676 = vpop.f32.mrb[0].mxu0
        %v1677 = vadd.f32 %v1503, %v1676
        %1678 = vmatprep.mubr.bf16.mxu0 0
        %1679 = vmatmul.mubr.bf16.gmra.mrb[0].mxu0 %v1468
        %v1680 = vpop.f32.mrb[0].mxu0
        %v1681 = vadd.f32 %v1499, %v1680
        %v1682 = vpop.f32.mrb[0].mxu0
        %v1683 = vadd.f32 %v1503, %v1682
        %v1684 = vpop.f32.mrb[0].mxu0
        %v1685 = vadd.f32 %v1499, %v1684
        %v1686 = vpop.f32.mrb[0].mxu0
        %v1687 = vadd.f32 %v1503, %v1686
        %1688 = vmatprep.mubr.bf16.mxu0 0
        %1689 = vmatmul.mubr.bf16.gmra.mrb[0].mxu0 %v1469
        %v1690 = vpop.f32.mrb[0].mxu0
        %v1691 = vadd.f32 %v1499, %v1690
        %v1692 = vpop.f32.mrb[0].mxu0
        %v1693 = vadd.f32 %v1503, %v1692
        %v1694 = vpop.f32.mrb[0].mxu0
        %v1695 = vadd.f32 %v1499, %v1694
        %v1696 = vpop.f32.mrb[0].mxu0
        %v1697 = vadd.f32 %v1503, %v1696
        %1698 = vmatprep.mubr.bf16.mxu0 0
        %1699 = vmatmul.mubr.bf16.gmra.mrb[0].mxu0 %v1470
        %v1700 = vpop.f32.mrb[0].mxu0
        %v1701 = vadd.f32 %v1499, %v1700
        %v1702 = vpop.f32.mrb[0].mxu0
        %v1703 = vadd.f32 %v1503, %v1702
        %v1704 = vpop.f32.mrb[0].mxu0
        %v1705 = vadd.f32 %v1499, %v1704
        %v1706 = vpop.f32.mrb[0].mxu0
        %v1707 = vadd.f32 %v1503, %v1706
        %1708 = vmatprep.mubr.bf16.mxu0 0
        %1709 = vmatmul.mubr.bf16.gmra.mrb[0].mxu0 %v1471
        %v1710 = vpop.f32.mrb[0].mxu0
        %v1711 = vadd.f32 %v1499, %v1710
        %v1712 = vpop.f32.mrb[0].mxu0
        %v1713 = vadd.f32 %v1503, %v1712
        %v1714 = vpop.f32.mrb[0].mxu0
        %v1715 = vadd.f32 %v1499, %v1714
        %v1716 = vpop.f32.mrb[0].mxu0
        %v1717 = vadd.f32 %v1503, %v1716
        %1718 = vmatprep.mubr.bf16.mxu0 0
        %1719 = vmatmul.mubr.bf16.gmra.mrb[0].mxu0 %v1472
        %v1720 = vpop.f32.mrb[0].mxu0
        %v1721 = vadd.f32 %v1499, %v1720
        %v1722 = vpop.f32.mrb[0].mxu0
        %v1723 = vadd.f32 %v1503, %v1722
        %v1724 = vpop.f32.mrb[0].mxu0
        %v1725 = vadd.f32 %v1499, %v1724
        %v1726 = vpop.f32.mrb[0].mxu0
        %v1727 = vadd.f32 %v1503, %v1726
        %1728 = vmatprep.mubr.bf16.mxu0 0
        %1729 = vmatmul.mubr.bf16.gmra.mrb[0].mxu0 %v1473
        %v1730 = vpop.f32.mrb[0].mxu0
        %v1731 = vadd.f32 %v1499, %v1730
        %v1732 = vpop.f32.mrb[0].mxu0
        %v1733 = vadd.f32 %v1503, %v1732
        %v1734 = vpop.f32.mrb[0].mxu0
        %v1735 = vadd.f32 %v1499, %v1734
        %v1736 = vpop.f32.mrb[0].mxu0
        %v1737 = vadd.f32 %v1503, %v1736
        %1738 = vmatprep.mubr.bf16.mxu0 0
        %1739 = vmatmul.mubr.bf16.gmra.mrb[0].mxu0 %v1474
        %v1740 = vpop.f32.mrb[0].mxu0
        %v1741 = vadd.f32 %v1499, %v1740
        %v1742 = vpop.f32.mrb[0].mxu0
        %v1743 = vadd.f32 %v1503, %v1742
        %v1744 = vpop.f32.mrb[0].mxu0
        %v1745 = vadd.f32 %v1499, %v1744
        %v1746 = vpop.f32.mrb[0].mxu0
        %v1747 = vadd.f32 %v1503, %v1746
        %1748 = vmatprep.mubr.bf16.mxu0 0
        %1749 = vmatmul.mubr.bf16.gmra.mrb[0].mxu0 %v1475
        %v1750 = vpop.f32.mrb[0].mxu0
        %v1751 = vadd.f32 %v1499, %v1750
        %v1752 = vpop.f32.mrb[0].mxu0
        %v1753 = vadd.f32 %v1503, %v1752
        %v1754 = vpop.f32.mrb[0].mxu0
        %v1755 = vadd.f32 %v1499, %v1754
        %v1756 = vpop.f32.mrb[0].mxu0
        %v1757 = vadd.f32 %v1503, %v1756
        %1758 = vmatprep.mubr.bf16.mxu0 0
        %1759 = vmatmul.mubr.bf16.gmra.mrb[0].mxu0 %v1476
        %v1760 = vpop.f32.mrb[0].mxu0
        %v1761 = vadd.f32 %v1499, %v1760
        %v1762 = vpop.f32.mrb[0].mxu0
        %v1763 = vadd.f32 %v1503, %v1762
        %v1764 = vpop.f32.mrb[0].mxu0
        %v1765 = vadd.f32 %v1499, %v1764
        %v1766 = vpop.f32.mrb[0].mxu0
        %v1767 = vadd.f32 %v1503, %v1766
        %1768 = vmatprep.mubr.bf16.mxu0 0
        %1769 = vmatmul.mubr.bf16.gmra.mrb[0].mxu0 %v1477
        %v1770 = vpop.f32.mrb[0].mxu0
        %v1771 = vadd.f32 %v1499, %v1770
        %v1772 = vpop.f32.mrb[0].mxu0
        %v1773 = vadd.f32 %v1503, %v1772
        %v1774 = vpop.f32.mrb[0].mxu0
        %v1775 = vadd.f32 %v1499, %v1774
        %v1776 = vpop.f32.mrb[0].mxu0
        %v1777 = vadd.f32 %v1503, %v1776
        %1778 = vdwg.mxu0
        %1779 = vst [vmem:[%s302] sm:$0xff] %v1621
        %1780 = vst [vmem:[%s302 + $0x8] sm:$0xff] %v1623
        %1781 = vst [vmem:[%s302 + $0x10] sm:$0xff] %v1625
        %1782 = vst [vmem:[%s302 + $0x18] sm:$0xff] %v1627
        %1783 = vst [vmem:[%s302 + $0x20] sm:$0xff] %v1631
        %1784 = vst [vmem:[%s302 + $0x28] sm:$0xff] %v1633
        %1785 = vst [vmem:[%s302 + $0x30] sm:$0xff] %v1635
        %1786 = vst [vmem:[%s302 + $0x38] sm:$0xff] %v1637
        %1787 = vst [vmem:[%s302 + $0x40] sm:$0xff] %v1641
        %1788 = vst [vmem:[%s302 + $0x48] sm:$0xff] %v1643
        %1789 = vst [vmem:[%s302 + $0x50] sm:$0xff] %v1645
        %1790 = vst [vmem:[%s302 + $0x58] sm:$0xff] %v1647
        %1791 = vst [vmem:[%s302 + $0x60] sm:$0xff] %v1651
        %1792 = vst [vmem:[%s302 + $0x68] sm:$0xff] %v1653
        %1793 = vst [vmem:[%s302 + $0x70] sm:$0xff] %v1655
        %1794 = vst [vmem:[%s302 + $0x78] sm:$0xff] %v1657
        %1795 = vst [vmem:[%s302 + $0x80] sm:$0xff] %v1661
        %1796 = vst [vmem:[%s302 + $0x88] sm:$0xff] %v1663
        %1797 = vst [vmem:[%s302 + $0x90] sm:$0xff] %v1665
        %1798 = vst [vmem:[%s302 + $0x98] sm:$0xff] %v1667
        %1799 = vst [vmem:[%s302 + $0xa0] sm:$0xff] %v1671
        %1800 = vst [vmem:[%s302 + $0xa8] sm:$0xff] %v1673
        %1801 = vst [vmem:[%s302 + $0xb0] sm:$0xff] %v1675
        %1802 = vst [vmem:[%s302 + $0xb8] sm:$0xff] %v1677
        %1803 = vst [vmem:[%s302 + $0xc0] sm:$0xff] %v1681
        %1804 = vst [vmem:[%s302 + $0xc8] sm:$0xff] %v1683
        %1805 = vst [vmem:[%s302 + $0xd0] sm:$0xff] %v1685
        %1806 = vst [vmem:[%s302 + $0xd8] sm:$0xff] %v1687
        %1807 = vst [vmem:[%s302 + $0xe0] sm:$0xff] %v1691
        %1808 = vst [vmem:[%s302 + $0xe8] sm:$0xff] %v1693
        %1809 = vst [vmem:[%s302 + $0xf0] sm:$0xff] %v1695
        %1810 = vst [vmem:[%s302 + $0xf8] sm:$0xff] %v1697
        %1811 = vst [vmem:[%s302 + $0x100] sm:$0xff] %v1701
        %1812 = vst [vmem:[%s302 + $0x108] sm:$0xff] %v1703
        %1813 = vst [vmem:[%s302 + $0x110] sm:$0xff] %v1705
        %1814 = vst [vmem:[%s302 + $0x118] sm:$0xff] %v1707
        %1815 = vst [vmem:[%s302 + $0x120] sm:$0xff] %v1711
        %1816 = vst [vmem:[%s302 + $0x128] sm:$0xff] %v1713
        %1817 = vst [vmem:[%s302 + $0x130] sm:$0xff] %v1715
        %1818 = vst [vmem:[%s302 + $0x138] sm:$0xff] %v1717
        %1819 = vst [vmem:[%s302 + $0x140] sm:$0xff] %v1721
        %1820 = vst [vmem:[%s302 + $0x148] sm:$0xff] %v1723
        %1821 = vst [vmem:[%s302 + $0x150] sm:$0xff] %v1725
        %1822 = vst [vmem:[%s302 + $0x158] sm:$0xff] %v1727
        %1823 = vst [vmem:[%s302 + $0x160] sm:$0xff] %v1731
        %1824 = vst [vmem:[%s302 + $0x168] sm:$0xff] %v1733
        %1825 = vst [vmem:[%s302 + $0x170] sm:$0xff] %v1735
        %1826 = vst [vmem:[%s302 + $0x178] sm:$0xff] %v1737
        %1827 = vst [vmem:[%s302 + $0x180] sm:$0xff] %v1741
        %1828 = vst [vmem:[%s302 + $0x188] sm:$0xff] %v1743
        %1829 = vst [vmem:[%s302 + $0x190] sm:$0xff] %v1745
        %1830 = vst [vmem:[%s302 + $0x198] sm:$0xff] %v1747
        %1831 = vst [vmem:[%s302 + $0x1a0] sm:$0xff] %v1751
        %1832 = vst [vmem:[%s302 + $0x1a8] sm:$0xff] %v1753
        %1833 = vst [vmem:[%s302 + $0x1b0] sm:$0xff] %v1755
        %1834 = vst [vmem:[%s302 + $0x1b8] sm:$0xff] %v1757
        %1835 = vst [vmem:[%s302 + $0x1c0] sm:$0xff] %v1761
        %1836 = vst [vmem:[%s302 + $0x1c8] sm:$0xff] %v1763
        %1837 = vst [vmem:[%s302 + $0x1d0] sm:$0xff] %v1765
        %1838 = vst [vmem:[%s302 + $0x1d8] sm:$0xff] %v1767
        %1839 = vst [vmem:[%s302 + $0x1e0] sm:$0xff] %v1771
        %1840 = vst [vmem:[%s302 + $0x1e8] sm:$0xff] %v1773
        %1841 = vst [vmem:[%s302 + $0x1f0] sm:$0xff] %v1775
        %1842 = vst [vmem:[%s302 + $0x1f8] sm:$0xff] %v1777
        %v1843 = vunpack.c.l.bf16 %v314
        %v1844 = vunpack.c.l.bf16 %v315
        %v1845 = vunpack.c.l.bf16 %v316
        %v1846 = vunpack.c.l.bf16 %v317
        %v1847 = vunpack.c.l.bf16 %v318
        %v1848 = vunpack.c.l.bf16 %v319
        %v1849 = vunpack.c.l.bf16 %v320
        %v1850 = vunpack.c.l.bf16 %v321
        %v1851 = vunpack.c.l.bf16 %v322
        %v1852 = vunpack.c.l.bf16 %v323
        %v1853 = vunpack.c.l.bf16 %v324
        %v1854 = vunpack.c.l.bf16 %v325
        %v1855 = vunpack.c.l.bf16 %v326
        %v1856 = vunpack.c.l.bf16 %v327
        %v1857 = vunpack.c.l.bf16 %v328
        %v1858 = vunpack.c.l.bf16 %v329
        %v1859 = vunpack.c.l.bf16 %v330
        %v1860 = vunpack.c.l.bf16 %v331
        %v1861 = vunpack.c.l.bf16 %v332
        %v1862 = vunpack.c.l.bf16 %v333
        %v1863 = vunpack.c.l.bf16 %v334
        %v1864 = vunpack.c.l.bf16 %v335
        %v1865 = vunpack.c.l.bf16 %v336
        %v1866 = vunpack.c.l.bf16 %v337
        %v1867 = vunpack.c.l.bf16 %v338
        %v1868 = vunpack.c.l.bf16 %v339
        %v1869 = vunpack.c.l.bf16 %v340
        %v1870 = vunpack.c.l.bf16 %v341
        %v1871 = vunpack.c.l.bf16 %v342
        %v1872 = vunpack.c.l.bf16 %v343
        %v1873 = vunpack.c.l.bf16 %v344
        %v1874 = vunpack.c.l.bf16 %v345
        %v1875 = vmul.f32 %v1623, 0.5
        %v1876 = vmul.f32 %v1627, 0.5
        %v1877 = vmul.f32 %v1633, 0.5
        %v1878 = vmul.f32 %v1637, 0.5
        %v1879 = vmul.f32 %v1643, 0.5
        %v1880 = vmul.f32 %v1647, 0.5
        %v1881 = vmul.f32 %v1653, 0.5
        %v1882 = vmul.f32 %v1657, 0.5
        %v1883 = vmul.f32 %v1663, 0.5
        %v1884 = vmul.f32 %v1667, 0.5
        %v1885 = vmul.f32 %v1673, 0.5
        %v1886 = vmul.f32 %v1677, 0.5
        %v1887 = vmul.f32 %v1683, 0.5
        %v1888 = vmul.f32 %v1687, 0.5
        %v1889 = vmul.f32 %v1693, 0.5
        %v1890 = vmul.f32 %v1697, 0.5
        %v1891 = vmul.f32 %v1703, 0.5
        %v1892 = vmul.f32 %v1707, 0.5
        %v1893 = vmul.f32 %v1713, 0.5
        %v1894 = vmul.f32 %v1717, 0.5
        %v1895 = vmul.f32 %v1723, 0.5
        %v1896 = vmul.f32 %v1727, 0.5
        %v1897 = vmul.f32 %v1733, 0.5
        %v1898 = vmul.f32 %v1737, 0.5
        %v1899 = vmul.f32 %v1743, 0.5
        %v1900 = vmul.f32 %v1747, 0.5
        %v1901 = vmul.f32 %v1753, 0.5
        %v1902 = vmul.f32 %v1757, 0.5
        %v1903 = vmul.f32 %v1763, 0.5
        %v1904 = vmul.f32 %v1767, 0.5
        %v1905 = vmul.f32 %v1773, 0.5
        %v1906 = vmul.f32 %v1777, 0.5
        %v1907 = vmul.f32 %v1875, 1.442695
        %v1908 = vpow.pop %v1907
        %v1909 = vmul.f32 %v1876, 1.442695
        %v1910 = vpow.pop %v1909
        %v1911 = vmul.f32 %v1877, 1.442695
        %v1912 = vpow.pop %v1911
        %v1913 = vmul.f32 %v1878, 1.442695
        %v1914 = vpow.pop %v1913
        %v1915 = vmul.f32 %v1879, 1.442695
        %v1916 = vpow.pop %v1915
        %v1917 = vmul.f32 %v1880, 1.442695
        %v1918 = vpow.pop %v1917
        %v1919 = vmul.f32 %v1881, 1.442695
        %v1920 = vpow.pop %v1919
        %v1921 = vmul.f32 %v1882, 1.442695
        %v1922 = vpow.pop %v1921
        %v1923 = vmul.f32 %v1883, 1.442695
        %v1924 = vpow.pop %v1923
        %v1925 = vmul.f32 %v1884, 1.442695
        %v1926 = vpow.pop %v1925
        %v1927 = vmul.f32 %v1885, 1.442695
        %v1928 = vpow.pop %v1927
        %v1929 = vmul.f32 %v1886, 1.442695
        %v1930 = vpow.pop %v1929
        %v1931 = vmul.f32 %v1887, 1.442695
        %v1932 = vpow.pop %v1931
        %v1933 = vmul.f32 %v1888, 1.442695
        %v1934 = vpow.pop %v1933
        %v1935 = vmul.f32 %v1889, 1.442695
        %v1936 = vpow.pop %v1935
        %v1937 = vmul.f32 %v1890, 1.442695
        %v1938 = vpow.pop %v1937
        %v1939 = vmul.f32 %v1891, 1.442695
        %v1940 = vpow.pop %v1939
        %v1941 = vmul.f32 %v1892, 1.442695
        %v1942 = vpow.pop %v1941
        %v1943 = vmul.f32 %v1893, 1.442695
        %v1944 = vpow.pop %v1943
        %v1945 = vmul.f32 %v1894, 1.442695
        %v1946 = vpow.pop %v1945
        %v1947 = vmul.f32 %v1895, 1.442695
        %v1948 = vpow.pop %v1947
        %v1949 = vmul.f32 %v1896, 1.442695
        %v1950 = vpow.pop %v1949
        %v1951 = vmul.f32 %v1897, 1.442695
        %v1952 = vpow.pop %v1951
        %v1953 = vmul.f32 %v1898, 1.442695
        %v1954 = vpow.pop %v1953
        %v1955 = vmul.f32 %v1899, 1.442695
        %v1956 = vpow.pop %v1955
        %v1957 = vmul.f32 %v1900, 1.442695
        %v1958 = vpow.pop %v1957
        %v1959 = vmul.f32 %v1901, 1.442695
        %v1960 = vpow.pop %v1959
        %v1961 = vmul.f32 %v1902, 1.442695
        %v1962 = vpow.pop %v1961
        %v1963 = vmul.f32 %v1903, 1.442695
        %v1964 = vpow.pop %v1963
        %v1965 = vmul.f32 %v1904, 1.442695
        %v1966 = vpow.pop %v1965
        %v1967 = vmul.f32 %v1905, 1.442695
        %v1968 = vpow.pop %v1967
        %v1969 = vmul.f32 %v1906, 1.442695
        %v1970 = vpow.pop %v1969
        %v1971 = vmul.f32 %v1843, %v1908
        %v1972 = vmul.f32 %v1844, %v1910
        %v1973 = vmul.f32 %v1845, %v1912
        %v1974 = vmul.f32 %v1846, %v1914
        %v1975 = vmul.f32 %v1847, %v1916
        %v1976 = vmul.f32 %v1848, %v1918
        %v1977 = vmul.f32 %v1849, %v1920
        %v1978 = vmul.f32 %v1850, %v1922
        %v1979 = vmul.f32 %v1851, %v1924
        %v1980 = vmul.f32 %v1852, %v1926
        %v1981 = vmul.f32 %v1853, %v1928
        %v1982 = vmul.f32 %v1854, %v1930
        %v1983 = vmul.f32 %v1855, %v1932
        %v1984 = vmul.f32 %v1856, %v1934
        %v1985 = vmul.f32 %v1857, %v1936
        %v1986 = vmul.f32 %v1858, %v1938
        %v1987 = vmul.f32 %v1859, %v1940
        %v1988 = vmul.f32 %v1860, %v1942
        %v1989 = vmul.f32 %v1861, %v1944
        %v1990 = vmul.f32 %v1862, %v1946
        %v1991 = vmul.f32 %v1863, %v1948
        %v1992 = vmul.f32 %v1864, %v1950
        %v1993 = vmul.f32 %v1865, %v1952
        %v1994 = vmul.f32 %v1866, %v1954
        %v1995 = vmul.f32 %v1867, %v1956
        %v1996 = vmul.f32 %v1868, %v1958
        %v1997 = vmul.f32 %v1869, %v1960
        %v1998 = vmul.f32 %v1870, %v1962
        %v1999 = vmul.f32 %v1871, %v1964
        %v2000 = vmul.f32 %v1872, %v1966
        %v2001 = vmul.f32 %v1873, %v1968
        %v2002 = vmul.f32 %v1874, %v1970
        %v2003 = vadd.f32 %v1621, %v1971
        %v2004 = vadd.f32 %v1625, %v1972
        %v2005 = vadd.f32 %v1631, %v1973
        %v2006 = vadd.f32 %v1635, %v1974
        %v2007 = vadd.f32 %v1641, %v1975
        %v2008 = vadd.f32 %v1645, %v1976
        %v2009 = vadd.f32 %v1651, %v1977
        %v2010 = vadd.f32 %v1655, %v1978
        %v2011 = vadd.f32 %v1661, %v1979
        %v2012 = vadd.f32 %v1665, %v1980
        %v2013 = vadd.f32 %v1671, %v1981
        %v2014 = vadd.f32 %v1675, %v1982
        %v2015 = vadd.f32 %v1681, %v1983
        %v2016 = vadd.f32 %v1685, %v1984
        %v2017 = vadd.f32 %v1691, %v1985
        %v2018 = vadd.f32 %v1695, %v1986
        %v2019 = vadd.f32 %v1701, %v1987
        %v2020 = vadd.f32 %v1705, %v1988
        %v2021 = vadd.f32 %v1711, %v1989
        %v2022 = vadd.f32 %v1715, %v1990
        %v2023 = vadd.f32 %v1721, %v1991
        %v2024 = vadd.f32 %v1725, %v1992
        %v2025 = vadd.f32 %v1731, %v1993
        %v2026 = vadd.f32 %v1735, %v1994
        %v2027 = vadd.f32 %v1741, %v1995
        %v2028 = vadd.f32 %v1745, %v1996
        %v2029 = vadd.f32 %v1751, %v1997
        %v2030 = vadd.f32 %v1755, %v1998
        %v2031 = vadd.f32 %v1761, %v1999
        %v2032 = vadd.f32 %v1765, %v2000
        %v2033 = vadd.f32 %v1771, %v2001
        %v2034 = vadd.f32 %v1775, %v2002
        %v2035 = vpack.c.bf16 %v2004, %v2003
        %v2036 = vpack.c.bf16 %v2006, %v2005
        %v2037 = vpack.c.bf16 %v2008, %v2007
        %v2038 = vpack.c.bf16 %v2010, %v2009
        %v2039 = vpack.c.bf16 %v2012, %v2011
        %v2040 = vpack.c.bf16 %v2014, %v2013
        %v2041 = vpack.c.bf16 %v2016, %v2015
        %v2042 = vpack.c.bf16 %v2018, %v2017
        %v2043 = vpack.c.bf16 %v2020, %v2019
        %v2044 = vpack.c.bf16 %v2022, %v2021
        %v2045 = vpack.c.bf16 %v2024, %v2023
        %v2046 = vpack.c.bf16 %v2026, %v2025
        %v2047 = vpack.c.bf16 %v2028, %v2027
        %v2048 = vpack.c.bf16 %v2030, %v2029
        %v2049 = vpack.c.bf16 %v2032, %v2031
        %v2050 = vpack.c.bf16 %v2034, %v2033
        %s2051 = scalar_lea.vmem [#allocation5], 192
        %v2052 = vld [vmem:[%s2051] sm:$0xf]
        %v2053 = vld [vmem:[%s2051 + $0x4] sm:$0xf]
        %v2054 = vld [vmem:[%s2051 + $0x8] sm:$0xf]
        %v2055 = vld [vmem:[%s2051 + $0xc] sm:$0xf]
        %v2056 = vld [vmem:[%s2051 + $0x10] sm:$0xf]
        %v2057 = vld [vmem:[%s2051 + $0x14] sm:$0xf]
        %v2058 = vld [vmem:[%s2051 + $0x18] sm:$0xf]
        %v2059 = vld [vmem:[%s2051 + $0x1c] sm:$0xf]
        %v2060 = vld [vmem:[%s2051 + $0x20] sm:$0xf]
        %v2061 = vld [vmem:[%s2051 + $0x24] sm:$0xf]
        %v2062 = vld [vmem:[%s2051 + $0x28] sm:$0xf]
        %v2063 = vld [vmem:[%s2051 + $0x2c] sm:$0xf]
        %v2064 = vld [vmem:[%s2051 + $0x30] sm:$0xf]
        %v2065 = vld [vmem:[%s2051 + $0x34] sm:$0xf]
        %v2066 = vld [vmem:[%s2051 + $0x38] sm:$0xf]
        %v2067 = vld [vmem:[%s2051 + $0x3c] sm:$0xf]
        %s2068 = scalar_lea.vmem %s2, 3
        %v2069 = vld [vmem:[%s2068] sm:$0x1]
        %v2071 = vlaneseq
        %v2072 = vshrl.u32 %v2071, 7
        %v2073 = vsub.s32 0, %v2072
        %v2074 = vrot.slane %v2069, %v2073
        %v2092 = vunpack.c.l.b16 %v2052
        %v2093 = vunpack.c.l.b16 %v2053
        %v2094 = vunpack.c.l.b16 %v2054
        %v2095 = vunpack.c.l.b16 %v2055
        %v2096 = vunpack.c.l.b16 %v2056
        %v2097 = vunpack.c.l.b16 %v2057
        %v2098 = vunpack.c.l.b16 %v2058
        %v2099 = vunpack.c.l.b16 %v2059
        %v2100 = vunpack.c.l.b16 %v2060
        %v2101 = vunpack.c.l.b16 %v2061
        %v2102 = vunpack.c.l.b16 %v2062
        %v2103 = vunpack.c.l.b16 %v2063
        %v2104 = vunpack.c.l.b16 %v2064
        %v2105 = vunpack.c.l.b16 %v2065
        %v2106 = vunpack.c.l.b16 %v2066
        %v2107 = vunpack.c.l.b16 %v2067
        %v2108 = vpack.c.b16 %v2093, %v2092
        %v2109 = vpack.c.b16 %v2095, %v2094
        %v2110 = vpack.c.b16 %v2097, %v2096
        %v2111 = vpack.c.b16 %v2099, %v2098
        %v2112 = vpack.c.b16 %v2101, %v2100
        %v2113 = vpack.c.b16 %v2103, %v2102
        %v2114 = vpack.c.b16 %v2105, %v2104
        %v2115 = vpack.c.b16 %v2107, %v2106
        %2124 = vmatprep.subr.bf16.mxu0 0
        %2125 = vmatpush1.bf16.msra.mxu0 %v2108
        %2126 = vmatprep.subr.bf16.mxu0 0
        %2127 = vmatpush1.bf16.msra.mxu0 %v2109
        %2128 = vmatprep.subr.bf16.mxu0 0
        %2129 = vmatpush1.bf16.msra.mxu0 %v2110
        %2130 = vmatprep.subr.bf16.mxu0 0
        %2131 = vmatpush1.bf16.msra.mxu0 %v2111
        %2132 = vmatprep.subr.bf16.mxu0 0
        %2133 = vmatpush1.bf16.msra.mxu0 %v2112
        %2134 = vmatprep.subr.bf16.mxu0 0
        %2135 = vmatpush1.bf16.msra.mxu0 %v2113
        %2136 = vmatprep.subr.bf16.mxu0 0
        %2137 = vmatpush1.bf16.msra.mxu0 %v2114
        %2138 = vmatprep.subr.bf16.mxu0 0
        %2139 = vmatpush1.bf16.msra.mxu0 %v2115
        %2140 = vmatprep.subr.bf16.mxu0 0
        %2141 = vmatpush1.bf16.msra.mxu0 0
        %2142 = vmatprep.subr.bf16.mxu0 0
        %2143 = vmatpush1.bf16.msra.mxu0 0
        %2144 = vmatprep.subr.bf16.mxu0 0
        %2145 = vmatpush1.bf16.msra.mxu0 0
        %2146 = vmatprep.subr.bf16.mxu0 0
        %2147 = vmatpush1.bf16.msra.mxu0 0
        %2148 = vmatprep.subr.bf16.mxu0 0
        %2149 = vmatpush1.bf16.msra.mxu0 0
        %2150 = vmatprep.subr.bf16.mxu0 0
        %2151 = vmatpush1.bf16.msra.mxu0 0
        %2152 = vmatprep.subr.bf16.mxu0 0
        %2153 = vmatpush1.bf16.msra.mxu0 0
        %2154 = vmatprep.subr.bf16.mxu0 0
        %2155 = vmatpush1.bf16.msra.mxu0 0
        %2156 = vmatprep.mubr.bf16.mxu0 0
        %2157 = vmatmul.mubr.bf16.gmra.mrb[0].mxu0 %v2035
        %v2158 = vpop.f32.mrb[0].mxu0
        %v2159 = vadd.f32 %v2074, %v2158
        %v2160 = vpop.f32.mrb[0].mxu0
        %v2161 = vpop.f32.mrb[0].mxu0
        %v2162 = vadd.f32 %v2074, %v2161
        %v2163 = vpop.f32.mrb[0].mxu0
        %2164 = vmatprep.mubr.bf16.mxu0 0
        %2165 = vmatmul.mubr.bf16.gmra.mrb[0].mxu0 %v2036
        %v2166 = vpop.f32.mrb[0].mxu0
        %v2167 = vadd.f32 %v2074, %v2166
        %v2168 = vpop.f32.mrb[0].mxu0
        %v2169 = vpop.f32.mrb[0].mxu0
        %v2170 = vadd.f32 %v2074, %v2169
        %v2171 = vpop.f32.mrb[0].mxu0
        %2172 = vmatprep.mubr.bf16.mxu0 0
        %2173 = vmatmul.mubr.bf16.gmra.mrb[0].mxu0 %v2037
        %v2174 = vpop.f32.mrb[0].mxu0
        %v2175 = vadd.f32 %v2074, %v2174
        %v2176 = vpop.f32.mrb[0].mxu0
        %v2177 = vpop.f32.mrb[0].mxu0
        %v2178 = vadd.f32 %v2074, %v2177
        %v2179 = vpop.f32.mrb[0].mxu0
        %2180 = vmatprep.mubr.bf16.mxu0 0
        %2181 = vmatmul.mubr.bf16.gmra.mrb[0].mxu0 %v2038
        %v2182 = vpop.f32.mrb[0].mxu0
        %v2183 = vadd.f32 %v2074, %v2182
        %v2184 = vpop.f32.mrb[0].mxu0
        %v2185 = vpop.f32.mrb[0].mxu0
        %v2186 = vadd.f32 %v2074, %v2185
        %v2187 = vpop.f32.mrb[0].mxu0
        %2188 = vmatprep.mubr.bf16.mxu0 0
        %2189 = vmatmul.mubr.bf16.gmra.mrb[0].mxu0 %v2039
        %v2190 = vpop.f32.mrb[0].mxu0
        %v2191 = vadd.f32 %v2074, %v2190
        %v2192 = vpop.f32.mrb[0].mxu0
        %v2193 = vpop.f32.mrb[0].mxu0
        %v2194 = vadd.f32 %v2074, %v2193
        %v2195 = vpop.f32.mrb[0].mxu0
        %2196 = vmatprep.mubr.bf16.mxu0 0
        %2197 = vmatmul.mubr.bf16.gmra.mrb[0].mxu0 %v2040
        %v2198 = vpop.f32.mrb[0].mxu0
        %v2199 = vadd.f32 %v2074, %v2198
        %v2200 = vpop.f32.mrb[0].mxu0
        %v2201 = vpop.f32.mrb[0].mxu0
        %v2202 = vadd.f32 %v2074, %v2201
        %v2203 = vpop.f32.mrb[0].mxu0
        %2204 = vmatprep.mubr.bf16.mxu0 0
        %2205 = vmatmul.mubr.bf16.gmra.mrb[0].mxu0 %v2041
        %v2206 = vpop.f32.mrb[0].mxu0
        %v2207 = vadd.f32 %v2074, %v2206
        %v2208 = vpop.f32.mrb[0].mxu0
        %v2209 = vpop.f32.mrb[0].mxu0
        %v2210 = vadd.f32 %v2074, %v2209
        %v2211 = vpop.f32.mrb[0].mxu0
        %2212 = vmatprep.mubr.bf16.mxu0 0
        %2213 = vmatmul.mubr.bf16.gmra.mrb[0].mxu0 %v2042
        %v2214 = vpop.f32.mrb[0].mxu0
        %v2215 = vadd.f32 %v2074, %v2214
        %v2216 = vpop.f32.mrb[0].mxu0
        %v2217 = vpop.f32.mrb[0].mxu0
        %v2218 = vadd.f32 %v2074, %v2217
        %v2219 = vpop.f32.mrb[0].mxu0
        %2220 = vmatprep.mubr.bf16.mxu0 0
        %2221 = vmatmul.mubr.bf16.gmra.mrb[0].mxu0 %v2043
        %v2222 = vpop.f32.mrb[0].mxu0
        %v2223 = vadd.f32 %v2074, %v2222
        %v2224 = vpop.f32.mrb[0].mxu0
        %v2225 = vpop.f32.mrb[0].mxu0
        %v2226 = vadd.f32 %v2074, %v2225
        %v2227 = vpop.f32.mrb[0].mxu0
        %2228 = vmatprep.mubr.bf16.mxu0 0
        %2229 = vmatmul.mubr.bf16.gmra.mrb[0].mxu0 %v2044
        %v2230 = vpop.f32.mrb[0].mxu0
        %v2231 = vadd.f32 %v2074, %v2230
        %v2232 = vpop.f32.mrb[0].mxu0
        %v2233 = vpop.f32.mrb[0].mxu0
        %v2234 = vadd.f32 %v2074, %v2233
        %v2235 = vpop.f32.mrb[0].mxu0
        %2236 = vmatprep.mubr.bf16.mxu0 0
        %2237 = vmatmul.mubr.bf16.gmra.mrb[0].mxu0 %v2045
        %v2238 = vpop.f32.mrb[0].mxu0
        %v2239 = vadd.f32 %v2074, %v2238
        %v2240 = vpop.f32.mrb[0].mxu0
        %v2241 = vpop.f32.mrb[0].mxu0
        %v2242 = vadd.f32 %v2074, %v2241
        %v2243 = vpop.f32.mrb[0].mxu0
        %2244 = vmatprep.mubr.bf16.mxu0 0
        %2245 = vmatmul.mubr.bf16.gmra.mrb[0].mxu0 %v2046
        %v2246 = vpop.f32.mrb[0].mxu0
        %v2247 = vadd.f32 %v2074, %v2246
        %v2248 = vpop.f32.mrb[0].mxu0
        %v2249 = vpop.f32.mrb[0].mxu0
        %v2250 = vadd.f32 %v2074, %v2249
        %v2251 = vpop.f32.mrb[0].mxu0
        %2252 = vmatprep.mubr.bf16.mxu0 0
        %2253 = vmatmul.mubr.bf16.gmra.mrb[0].mxu0 %v2047
        %v2254 = vpop.f32.mrb[0].mxu0
        %v2255 = vadd.f32 %v2074, %v2254
        %v2256 = vpop.f32.mrb[0].mxu0
        %v2257 = vpop.f32.mrb[0].mxu0
        %v2258 = vadd.f32 %v2074, %v2257
        %v2259 = vpop.f32.mrb[0].mxu0
        %2260 = vmatprep.mubr.bf16.mxu0 0
        %2261 = vmatmul.mubr.bf16.gmra.mrb[0].mxu0 %v2048
        %v2262 = vpop.f32.mrb[0].mxu0
        %v2263 = vadd.f32 %v2074, %v2262
        %v2264 = vpop.f32.mrb[0].mxu0
        %v2265 = vpop.f32.mrb[0].mxu0
        %v2266 = vadd.f32 %v2074, %v2265
        %v2267 = vpop.f32.mrb[0].mxu0
        %2268 = vmatprep.mubr.bf16.mxu0 0
        %2269 = vmatmul.mubr.bf16.gmra.mrb[0].mxu0 %v2049
        %v2270 = vpop.f32.mrb[0].mxu0
        %v2271 = vadd.f32 %v2074, %v2270
        %v2272 = vpop.f32.mrb[0].mxu0
        %v2273 = vpop.f32.mrb[0].mxu0
        %v2274 = vadd.f32 %v2074, %v2273
        %v2275 = vpop.f32.mrb[0].mxu0
        %2276 = vmatprep.mubr.bf16.mxu0 0
        %2277 = vmatmul.mubr.bf16.gmra.mrb[0].mxu0 %v2050
        %v2278 = vpop.f32.mrb[0].mxu0
        %v2279 = vadd.f32 %v2074, %v2278
        %v2280 = vpop.f32.mrb[0].mxu0
        %v2281 = vpop.f32.mrb[0].mxu0
        %v2282 = vadd.f32 %v2074, %v2281
        %v2283 = vpop.f32.mrb[0].mxu0
        %2284 = vdwg.mxu0
        %vm2285 = vcmp.gt.f32.partialorder %v2159, 0.0
        %vm2286 = vcmp.gt.f32.partialorder %v2162, 0.0
        %vm2287 = vcmp.gt.f32.partialorder %v2167, 0.0
        %vm2288 = vcmp.gt.f32.partialorder %v2170, 0.0
        %vm2289 = vcmp.gt.f32.partialorder %v2175, 0.0
        %vm2290 = vcmp.gt.f32.partialorder %v2178, 0.0
        %vm2291 = vcmp.gt.f32.partialorder %v2183, 0.0
        %vm2292 = vcmp.gt.f32.partialorder %v2186, 0.0
        %vm2293 = vcmp.gt.f32.partialorder %v2191, 0.0
        %vm2294 = vcmp.gt.f32.partialorder %v2194, 0.0
        %vm2295 = vcmp.gt.f32.partialorder %v2199, 0.0
        %vm2296 = vcmp.gt.f32.partialorder %v2202, 0.0
        %vm2297 = vcmp.gt.f32.partialorder %v2207, 0.0
        %vm2298 = vcmp.gt.f32.partialorder %v2210, 0.0
        %vm2299 = vcmp.gt.f32.partialorder %v2215, 0.0
        %vm2300 = vcmp.gt.f32.partialorder %v2218, 0.0
        %vm2301 = vcmp.gt.f32.partialorder %v2223, 0.0
        %vm2302 = vcmp.gt.f32.partialorder %v2226, 0.0
        %vm2303 = vcmp.gt.f32.partialorder %v2231, 0.0
        %vm2304 = vcmp.gt.f32.partialorder %v2234, 0.0
        %vm2305 = vcmp.gt.f32.partialorder %v2239, 0.0
        %vm2306 = vcmp.gt.f32.partialorder %v2242, 0.0
        %vm2307 = vcmp.gt.f32.partialorder %v2247, 0.0
        %vm2308 = vcmp.gt.f32.partialorder %v2250, 0.0
        %vm2309 = vcmp.gt.f32.partialorder %v2255, 0.0
        %vm2310 = vcmp.gt.f32.partialorder %v2258, 0.0
        %vm2311 = vcmp.gt.f32.partialorder %v2263, 0.0
        %vm2312 = vcmp.gt.f32.partialorder %v2266, 0.0
        %vm2313 = vcmp.gt.f32.partialorder %v2271, 0.0
        %vm2314 = vcmp.gt.f32.partialorder %v2274, 0.0
        %vm2315 = vcmp.gt.f32.partialorder %v2279, 0.0
        %vm2316 = vcmp.gt.f32.partialorder %v2282, 0.0
        %v2317 = vmul.f32 %v2159, 0.01
        %v2318 = vmul.f32 %v2162, 0.01
        %v2319 = vmul.f32 %v2167, 0.01
        %v2320 = vmul.f32 %v2170, 0.01
        %v2321 = vmul.f32 %v2175, 0.01
        %v2322 = vmul.f32 %v2178, 0.01
        %v2323 = vmul.f32 %v2183, 0.01
        %v2324 = vmul.f32 %v2186, 0.01
        %v2325 = vmul.f32 %v2191, 0.01
        %v2326 = vmul.f32 %v2194, 0.01
        %v2327 = vmul.f32 %v2199, 0.01
        %v2328 = vmul.f32 %v2202, 0.01
        %v2329 = vmul.f32 %v2207, 0.01
        %v2330 = vmul.f32 %v2210, 0.01
        %v2331 = vmul.f32 %v2215, 0.01
        %v2332 = vmul.f32 %v2218, 0.01
        %v2333 = vmul.f32 %v2223, 0.01
        %v2334 = vmul.f32 %v2226, 0.01
        %v2335 = vmul.f32 %v2231, 0.01
        %v2336 = vmul.f32 %v2234, 0.01
        %v2337 = vmul.f32 %v2239, 0.01
        %v2338 = vmul.f32 %v2242, 0.01
        %v2339 = vmul.f32 %v2247, 0.01
        %v2340 = vmul.f32 %v2250, 0.01
        %v2341 = vmul.f32 %v2255, 0.01
        %v2342 = vmul.f32 %v2258, 0.01
        %v2343 = vmul.f32 %v2263, 0.01
        %v2344 = vmul.f32 %v2266, 0.01
        %v2345 = vmul.f32 %v2271, 0.01
        %v2346 = vmul.f32 %v2274, 0.01
        %v2347 = vmul.f32 %v2279, 0.01
        %v2348 = vmul.f32 %v2282, 0.01
        %v2349 = vsel %vm2285, %v2159, %v2317
        %v2350 = vsel %vm2286, %v2162, %v2318
        %v2351 = vsel %vm2287, %v2167, %v2319
        %v2352 = vsel %vm2288, %v2170, %v2320
        %v2353 = vsel %vm2289, %v2175, %v2321
        %v2354 = vsel %vm2290, %v2178, %v2322
        %v2355 = vsel %vm2291, %v2183, %v2323
        %v2356 = vsel %vm2292, %v2186, %v2324
        %v2357 = vsel %vm2293, %v2191, %v2325
        %v2358 = vsel %vm2294, %v2194, %v2326
        %v2359 = vsel %vm2295, %v2199, %v2327
        %v2360 = vsel %vm2296, %v2202, %v2328
        %v2361 = vsel %vm2297, %v2207, %v2329
        %v2362 = vsel %vm2298, %v2210, %v2330
        %v2363 = vsel %vm2299, %v2215, %v2331
        %v2364 = vsel %vm2300, %v2218, %v2332
        %v2365 = vsel %vm2301, %v2223, %v2333
        %v2366 = vsel %vm2302, %v2226, %v2334
        %v2367 = vsel %vm2303, %v2231, %v2335
        %v2368 = vsel %vm2304, %v2234, %v2336
        %v2369 = vsel %vm2305, %v2239, %v2337
        %v2370 = vsel %vm2306, %v2242, %v2338
        %v2371 = vsel %vm2307, %v2247, %v2339
        %v2372 = vsel %vm2308, %v2250, %v2340
        %v2373 = vsel %vm2309, %v2255, %v2341
        %v2374 = vsel %vm2310, %v2258, %v2342
        %v2375 = vsel %vm2311, %v2263, %v2343
        %v2376 = vsel %vm2312, %v2266, %v2344
        %v2377 = vsel %vm2313, %v2271, %v2345
        %v2378 = vsel %vm2314, %v2274, %v2346
        %v2379 = vsel %vm2315, %v2279, %v2347
        %v2380 = vsel %vm2316, %v2282, %v2348
        %v2381 = vpack.c.bf16 %v2350, %v2349
        %v2382 = vpack.c.bf16 %v2352, %v2351
        %v2383 = vpack.c.bf16 %v2354, %v2353
        %v2384 = vpack.c.bf16 %v2356, %v2355
        %v2385 = vpack.c.bf16 %v2358, %v2357
        %v2386 = vpack.c.bf16 %v2360, %v2359
        %v2387 = vpack.c.bf16 %v2362, %v2361
        %v2388 = vpack.c.bf16 %v2364, %v2363
        %v2389 = vpack.c.bf16 %v2366, %v2365
        %v2390 = vpack.c.bf16 %v2368, %v2367
        %v2391 = vpack.c.bf16 %v2370, %v2369
        %v2392 = vpack.c.bf16 %v2372, %v2371
        %v2393 = vpack.c.bf16 %v2374, %v2373
        %v2394 = vpack.c.bf16 %v2376, %v2375
        %v2395 = vpack.c.bf16 %v2378, %v2377
        %v2396 = vpack.c.bf16 %v2380, %v2379
        %s2397 = scalar_lea.vmem [#allocation5], 256
        %v2398 = vld [vmem:[%s2397] sm:$0xf]
        %v2399 = vld [vmem:[%s2397 + $0x4] sm:$0xf]
        %v2400 = vld [vmem:[%s2397 + $0x8] sm:$0xf]
        %v2401 = vld [vmem:[%s2397 + $0xc] sm:$0xf]
        %v2402 = vld [vmem:[%s2397 + $0x10] sm:$0xf]
        %v2403 = vld [vmem:[%s2397 + $0x14] sm:$0xf]
        %v2404 = vld [vmem:[%s2397 + $0x18] sm:$0xf]
        %v2405 = vld [vmem:[%s2397 + $0x1c] sm:$0xf]
        %v2406 = vld [vmem:[%s2397 + $0x20] sm:$0xf]
        %v2407 = vld [vmem:[%s2397 + $0x24] sm:$0xf]
        %v2408 = vld [vmem:[%s2397 + $0x28] sm:$0xf]
        %v2409 = vld [vmem:[%s2397 + $0x2c] sm:$0xf]
        %v2410 = vld [vmem:[%s2397 + $0x30] sm:$0xf]
        %v2411 = vld [vmem:[%s2397 + $0x34] sm:$0xf]
        %v2412 = vld [vmem:[%s2397 + $0x38] sm:$0xf]
        %v2413 = vld [vmem:[%s2397 + $0x3c] sm:$0xf]
        %s2414 = scalar_lea.vmem %s2, 4
        %v2415 = vld [vmem:[%s2414] sm:$0x1]
        %v2417 = vlaneseq
        %v2418 = vshrl.u32 %v2417, 7
        %v2419 = vsub.s32 0, %v2418
        %v2420 = vrot.slane %v2415, %v2419
        %v2438 = vunpack.c.l.b16 %v2398
        %v2439 = vunpack.c.l.b16 %v2399
        %v2440 = vunpack.c.l.b16 %v2400
        %v2441 = vunpack.c.l.b16 %v2401
        %v2442 = vunpack.c.l.b16 %v2402
        %v2443 = vunpack.c.l.b16 %v2403
        %v2444 = vunpack.c.l.b16 %v2404
        %v2445 = vunpack.c.l.b16 %v2405
        %v2446 = vunpack.c.l.b16 %v2406
        %v2447 = vunpack.c.l.b16 %v2407
        %v2448 = vunpack.c.l.b16 %v2408
        %v2449 = vunpack.c.l.b16 %v2409
        %v2450 = vunpack.c.l.b16 %v2410
        %v2451 = vunpack.c.l.b16 %v2411
        %v2452 = vunpack.c.l.b16 %v2412
        %v2453 = vunpack.c.l.b16 %v2413
        %v2454 = vpack.c.b16 %v2439, %v2438
        %v2455 = vpack.c.b16 %v2441, %v2440
        %v2456 = vpack.c.b16 %v2443, %v2442
        %v2457 = vpack.c.b16 %v2445, %v2444
        %v2458 = vpack.c.b16 %v2447, %v2446
        %v2459 = vpack.c.b16 %v2449, %v2448
        %v2460 = vpack.c.b16 %v2451, %v2450
        %v2461 = vpack.c.b16 %v2453, %v2452
        %2470 = vmatprep.subr.bf16.mxu0 0
        %2471 = vmatpush1.bf16.msra.mxu0 %v2454
        %2472 = vmatprep.subr.bf16.mxu0 0
        %2473 = vmatpush1.bf16.msra.mxu0 %v2455
        %2474 = vmatprep.subr.bf16.mxu0 0
        %2475 = vmatpush1.bf16.msra.mxu0 %v2456
        %2476 = vmatprep.subr.bf16.mxu0 0
        %2477 = vmatpush1.bf16.msra.mxu0 %v2457
        %2478 = vmatprep.subr.bf16.mxu0 0
        %2479 = vmatpush1.bf16.msra.mxu0 %v2458
        %2480 = vmatprep.subr.bf16.mxu0 0
        %2481 = vmatpush1.bf16.msra.mxu0 %v2459
        %2482 = vmatprep.subr.bf16.mxu0 0
        %2483 = vmatpush1.bf16.msra.mxu0 %v2460
        %2484 = vmatprep.subr.bf16.mxu0 0
        %2485 = vmatpush1.bf16.msra.mxu0 %v2461
        %2486 = vmatprep.subr.bf16.mxu0 0
        %2487 = vmatpush1.bf16.msra.mxu0 0
        %2488 = vmatprep.subr.bf16.mxu0 0
        %2489 = vmatpush1.bf16.msra.mxu0 0
        %2490 = vmatprep.subr.bf16.mxu0 0
        %2491 = vmatpush1.bf16.msra.mxu0 0
        %2492 = vmatprep.subr.bf16.mxu0 0
        %2493 = vmatpush1.bf16.msra.mxu0 0
        %2494 = vmatprep.subr.bf16.mxu0 0
        %2495 = vmatpush1.bf16.msra.mxu0 0
        %2496 = vmatprep.subr.bf16.mxu0 0
        %2497 = vmatpush1.bf16.msra.mxu0 0
        %2498 = vmatprep.subr.bf16.mxu0 0
        %2499 = vmatpush1.bf16.msra.mxu0 0
        %2500 = vmatprep.subr.bf16.mxu0 0
        %2501 = vmatpush1.bf16.msra.mxu0 0
        %2502 = vmatprep.mubr.bf16.mxu0 0
        %2503 = vmatmul.mubr.bf16.gmra.mrb[0].mxu0 %v2381
        %v2504 = vpop.f32.mrb[0].mxu0
        %v2505 = vadd.f32 %v2420, %v2504
        %v2506 = vpop.f32.mrb[0].mxu0
        %v2507 = vpop.f32.mrb[0].mxu0
        %v2508 = vadd.f32 %v2420, %v2507
        %v2509 = vpop.f32.mrb[0].mxu0
        %2510 = vmatprep.mubr.bf16.mxu0 0
        %2511 = vmatmul.mubr.bf16.gmra.mrb[0].mxu0 %v2382
        %v2512 = vpop.f32.mrb[0].mxu0
        %v2513 = vadd.f32 %v2420, %v2512
        %v2514 = vpop.f32.mrb[0].mxu0
        %v2515 = vpop.f32.mrb[0].mxu0
        %v2516 = vadd.f32 %v2420, %v2515
        %v2517 = vpop.f32.mrb[0].mxu0
        %2518 = vmatprep.mubr.bf16.mxu0 0
        %2519 = vmatmul.mubr.bf16.gmra.mrb[0].mxu0 %v2383
        %v2520 = vpop.f32.mrb[0].mxu0
        %v2521 = vadd.f32 %v2420, %v2520
        %v2522 = vpop.f32.mrb[0].mxu0
        %v2523 = vpop.f32.mrb[0].mxu0
        %v2524 = vadd.f32 %v2420, %v2523
        %v2525 = vpop.f32.mrb[0].mxu0
        %2526 = vmatprep.mubr.bf16.mxu0 0
        %2527 = vmatmul.mubr.bf16.gmra.mrb[0].mxu0 %v2384
        %v2528 = vpop.f32.mrb[0].mxu0
        %v2529 = vadd.f32 %v2420, %v2528
        %v2530 = vpop.f32.mrb[0].mxu0
        %v2531 = vpop.f32.mrb[0].mxu0
        %v2532 = vadd.f32 %v2420, %v2531
        %v2533 = vpop.f32.mrb[0].mxu0
        %2534 = vmatprep.mubr.bf16.mxu0 0
        %2535 = vmatmul.mubr.bf16.gmra.mrb[0].mxu0 %v2385
        %v2536 = vpop.f32.mrb[0].mxu0
        %v2537 = vadd.f32 %v2420, %v2536
        %v2538 = vpop.f32.mrb[0].mxu0
        %v2539 = vpop.f32.mrb[0].mxu0
        %v2540 = vadd.f32 %v2420, %v2539
        %v2541 = vpop.f32.mrb[0].mxu0
        %2542 = vmatprep.mubr.bf16.mxu0 0
        %2543 = vmatmul.mubr.bf16.gmra.mrb[0].mxu0 %v2386
        %v2544 = vpop.f32.mrb[0].mxu0
        %v2545 = vadd.f32 %v2420, %v2544
        %v2546 = vpop.f32.mrb[0].mxu0
        %v2547 = vpop.f32.mrb[0].mxu0
        %v2548 = vadd.f32 %v2420, %v2547
        %v2549 = vpop.f32.mrb[0].mxu0
        %2550 = vmatprep.mubr.bf16.mxu0 0
        %2551 = vmatmul.mubr.bf16.gmra.mrb[0].mxu0 %v2387
        %v2552 = vpop.f32.mrb[0].mxu0
        %v2553 = vadd.f32 %v2420, %v2552
        %v2554 = vpop.f32.mrb[0].mxu0
        %v2555 = vpop.f32.mrb[0].mxu0
        %v2556 = vadd.f32 %v2420, %v2555
        %v2557 = vpop.f32.mrb[0].mxu0
        %2558 = vmatprep.mubr.bf16.mxu0 0
        %2559 = vmatmul.mubr.bf16.gmra.mrb[0].mxu0 %v2388
        %v2560 = vpop.f32.mrb[0].mxu0
        %v2561 = vadd.f32 %v2420, %v2560
        %v2562 = vpop.f32.mrb[0].mxu0
        %v2563 = vpop.f32.mrb[0].mxu0
        %v2564 = vadd.f32 %v2420, %v2563
        %v2565 = vpop.f32.mrb[0].mxu0
        %2566 = vmatprep.mubr.bf16.mxu0 0
        %2567 = vmatmul.mubr.bf16.gmra.mrb[0].mxu0 %v2389
        %v2568 = vpop.f32.mrb[0].mxu0
        %v2569 = vadd.f32 %v2420, %v2568
        %v2570 = vpop.f32.mrb[0].mxu0
        %v2571 = vpop.f32.mrb[0].mxu0
        %v2572 = vadd.f32 %v2420, %v2571
        %v2573 = vpop.f32.mrb[0].mxu0
        %2574 = vmatprep.mubr.bf16.mxu0 0
        %2575 = vmatmul.mubr.bf16.gmra.mrb[0].mxu0 %v2390
        %v2576 = vpop.f32.mrb[0].mxu0
        %v2577 = vadd.f32 %v2420, %v2576
        %v2578 = vpop.f32.mrb[0].mxu0
        %v2579 = vpop.f32.mrb[0].mxu0
        %v2580 = vadd.f32 %v2420, %v2579
        %v2581 = vpop.f32.mrb[0].mxu0
        %2582 = vmatprep.mubr.bf16.mxu0 0
        %2583 = vmatmul.mubr.bf16.gmra.mrb[0].mxu0 %v2391
        %v2584 = vpop.f32.mrb[0].mxu0
        %v2585 = vadd.f32 %v2420, %v2584
        %v2586 = vpop.f32.mrb[0].mxu0
        %v2587 = vpop.f32.mrb[0].mxu0
        %v2588 = vadd.f32 %v2420, %v2587
        %v2589 = vpop.f32.mrb[0].mxu0
        %2590 = vmatprep.mubr.bf16.mxu0 0
        %2591 = vmatmul.mubr.bf16.gmra.mrb[0].mxu0 %v2392
        %v2592 = vpop.f32.mrb[0].mxu0
        %v2593 = vadd.f32 %v2420, %v2592
        %v2594 = vpop.f32.mrb[0].mxu0
        %v2595 = vpop.f32.mrb[0].mxu0
        %v2596 = vadd.f32 %v2420, %v2595
        %v2597 = vpop.f32.mrb[0].mxu0
        %2598 = vmatprep.mubr.bf16.mxu0 0
        %2599 = vmatmul.mubr.bf16.gmra.mrb[0].mxu0 %v2393
        %v2600 = vpop.f32.mrb[0].mxu0
        %v2601 = vadd.f32 %v2420, %v2600
        %v2602 = vpop.f32.mrb[0].mxu0
        %v2603 = vpop.f32.mrb[0].mxu0
        %v2604 = vadd.f32 %v2420, %v2603
        %v2605 = vpop.f32.mrb[0].mxu0
        %2606 = vmatprep.mubr.bf16.mxu0 0
        %2607 = vmatmul.mubr.bf16.gmra.mrb[0].mxu0 %v2394
        %v2608 = vpop.f32.mrb[0].mxu0
        %v2609 = vadd.f32 %v2420, %v2608
        %v2610 = vpop.f32.mrb[0].mxu0
        %v2611 = vpop.f32.mrb[0].mxu0
        %v2612 = vadd.f32 %v2420, %v2611
        %v2613 = vpop.f32.mrb[0].mxu0
        %2614 = vmatprep.mubr.bf16.mxu0 0
        %2615 = vmatmul.mubr.bf16.gmra.mrb[0].mxu0 %v2395
        %v2616 = vpop.f32.mrb[0].mxu0
        %v2617 = vadd.f32 %v2420, %v2616
        %v2618 = vpop.f32.mrb[0].mxu0
        %v2619 = vpop.f32.mrb[0].mxu0
        %v2620 = vadd.f32 %v2420, %v2619
        %v2621 = vpop.f32.mrb[0].mxu0
        %2622 = vmatprep.mubr.bf16.mxu0 0
        %2623 = vmatmul.mubr.bf16.gmra.mrb[0].mxu0 %v2396
        %v2624 = vpop.f32.mrb[0].mxu0
        %v2625 = vadd.f32 %v2420, %v2624
        %v2626 = vpop.f32.mrb[0].mxu0
        %v2627 = vpop.f32.mrb[0].mxu0
        %v2628 = vadd.f32 %v2420, %v2627
        %v2629 = vpop.f32.mrb[0].mxu0
        %2630 = vdwg.mxu0
        %vm2631 = vcmp.gt.f32.partialorder %v2505, 0.0
        %vm2632 = vcmp.gt.f32.partialorder %v2508, 0.0
        %vm2633 = vcmp.gt.f32.partialorder %v2513, 0.0
        %vm2634 = vcmp.gt.f32.partialorder %v2516, 0.0
        %vm2635 = vcmp.gt.f32.partialorder %v2521, 0.0
        %vm2636 = vcmp.gt.f32.partialorder %v2524, 0.0
        %vm2637 = vcmp.gt.f32.partialorder %v2529, 0.0
        %vm2638 = vcmp.gt.f32.partialorder %v2532, 0.0
        %vm2639 = vcmp.gt.f32.partialorder %v2537, 0.0
        %vm2640 = vcmp.gt.f32.partialorder %v2540, 0.0
        %vm2641 = vcmp.gt.f32.partialorder %v2545, 0.0
        %vm2642 = vcmp.gt.f32.partialorder %v2548, 0.0
        %vm2643 = vcmp.gt.f32.partialorder %v2553, 0.0
        %vm2644 = vcmp.gt.f32.partialorder %v2556, 0.0
        %vm2645 = vcmp.gt.f32.partialorder %v2561, 0.0
        %vm2646 = vcmp.gt.f32.partialorder %v2564, 0.0
        %vm2647 = vcmp.gt.f32.partialorder %v2569, 0.0
        %vm2648 = vcmp.gt.f32.partialorder %v2572, 0.0
        %vm2649 = vcmp.gt.f32.partialorder %v2577, 0.0
        %vm2650 = vcmp.gt.f32.partialorder %v2580, 0.0
        %vm2651 = vcmp.gt.f32.partialorder %v2585, 0.0
        %vm2652 = vcmp.gt.f32.partialorder %v2588, 0.0
        %vm2653 = vcmp.gt.f32.partialorder %v2593, 0.0
        %vm2654 = vcmp.gt.f32.partialorder %v2596, 0.0
        %vm2655 = vcmp.gt.f32.partialorder %v2601, 0.0
        %vm2656 = vcmp.gt.f32.partialorder %v2604, 0.0
        %vm2657 = vcmp.gt.f32.partialorder %v2609, 0.0
        %vm2658 = vcmp.gt.f32.partialorder %v2612, 0.0
        %vm2659 = vcmp.gt.f32.partialorder %v2617, 0.0
        %vm2660 = vcmp.gt.f32.partialorder %v2620, 0.0
        %vm2661 = vcmp.gt.f32.partialorder %v2625, 0.0
        %vm2662 = vcmp.gt.f32.partialorder %v2628, 0.0
        %v2663 = vmul.f32 %v2505, 0.01
        %v2664 = vmul.f32 %v2508, 0.01
        %v2665 = vmul.f32 %v2513, 0.01
        %v2666 = vmul.f32 %v2516, 0.01
        %v2667 = vmul.f32 %v2521, 0.01
        %v2668 = vmul.f32 %v2524, 0.01
        %v2669 = vmul.f32 %v2529, 0.01
        %v2670 = vmul.f32 %v2532, 0.01
        %v2671 = vmul.f32 %v2537, 0.01
        %v2672 = vmul.f32 %v2540, 0.01
        %v2673 = vmul.f32 %v2545, 0.01
        %v2674 = vmul.f32 %v2548, 0.01
        %v2675 = vmul.f32 %v2553, 0.01
        %v2676 = vmul.f32 %v2556, 0.01
        %v2677 = vmul.f32 %v2561, 0.01
        %v2678 = vmul.f32 %v2564, 0.01
        %v2679 = vmul.f32 %v2569, 0.01
        %v2680 = vmul.f32 %v2572, 0.01
        %v2681 = vmul.f32 %v2577, 0.01
        %v2682 = vmul.f32 %v2580, 0.01
        %v2683 = vmul.f32 %v2585, 0.01
        %v2684 = vmul.f32 %v2588, 0.01
        %v2685 = vmul.f32 %v2593, 0.01
        %v2686 = vmul.f32 %v2596, 0.01
        %v2687 = vmul.f32 %v2601, 0.01
        %v2688 = vmul.f32 %v2604, 0.01
        %v2689 = vmul.f32 %v2609, 0.01
        %v2690 = vmul.f32 %v2612, 0.01
        %v2691 = vmul.f32 %v2617, 0.01
        %v2692 = vmul.f32 %v2620, 0.01
        %v2693 = vmul.f32 %v2625, 0.01
        %v2694 = vmul.f32 %v2628, 0.01
        %v2695 = vsel %vm2631, %v2505, %v2663
        %v2696 = vsel %vm2632, %v2508, %v2664
        %v2697 = vsel %vm2633, %v2513, %v2665
        %v2698 = vsel %vm2634, %v2516, %v2666
        %v2699 = vsel %vm2635, %v2521, %v2667
        %v2700 = vsel %vm2636, %v2524, %v2668
        %v2701 = vsel %vm2637, %v2529, %v2669
        %v2702 = vsel %vm2638, %v2532, %v2670
        %v2703 = vsel %vm2639, %v2537, %v2671
        %v2704 = vsel %vm2640, %v2540, %v2672
        %v2705 = vsel %vm2641, %v2545, %v2673
        %v2706 = vsel %vm2642, %v2548, %v2674
        %v2707 = vsel %vm2643, %v2553, %v2675
        %v2708 = vsel %vm2644, %v2556, %v2676
        %v2709 = vsel %vm2645, %v2561, %v2677
        %v2710 = vsel %vm2646, %v2564, %v2678
        %v2711 = vsel %vm2647, %v2569, %v2679
        %v2712 = vsel %vm2648, %v2572, %v2680
        %v2713 = vsel %vm2649, %v2577, %v2681
        %v2714 = vsel %vm2650, %v2580, %v2682
        %v2715 = vsel %vm2651, %v2585, %v2683
        %v2716 = vsel %vm2652, %v2588, %v2684
        %v2717 = vsel %vm2653, %v2593, %v2685
        %v2718 = vsel %vm2654, %v2596, %v2686
        %v2719 = vsel %vm2655, %v2601, %v2687
        %v2720 = vsel %vm2656, %v2604, %v2688
        %v2721 = vsel %vm2657, %v2609, %v2689
        %v2722 = vsel %vm2658, %v2612, %v2690
        %v2723 = vsel %vm2659, %v2617, %v2691
        %v2724 = vsel %vm2660, %v2620, %v2692
        %v2725 = vsel %vm2661, %v2625, %v2693
        %v2726 = vsel %vm2662, %v2628, %v2694
        %v2727 = vpack.c.bf16 %v2696, %v2695
        %v2728 = vpack.c.bf16 %v2698, %v2697
        %v2729 = vpack.c.bf16 %v2700, %v2699
        %v2730 = vpack.c.bf16 %v2702, %v2701
        %v2731 = vpack.c.bf16 %v2704, %v2703
        %v2732 = vpack.c.bf16 %v2706, %v2705
        %v2733 = vpack.c.bf16 %v2708, %v2707
        %v2734 = vpack.c.bf16 %v2710, %v2709
        %v2735 = vpack.c.bf16 %v2712, %v2711
        %v2736 = vpack.c.bf16 %v2714, %v2713
        %v2737 = vpack.c.bf16 %v2716, %v2715
        %v2738 = vpack.c.bf16 %v2718, %v2717
        %v2739 = vpack.c.bf16 %v2720, %v2719
        %v2740 = vpack.c.bf16 %v2722, %v2721
        %v2741 = vpack.c.bf16 %v2724, %v2723
        %v2742 = vpack.c.bf16 %v2726, %v2725
        %s2743 = scalar_lea.vmem [#allocation5], 320
        %v2744 = vld [vmem:[%s2743] sm:$0xf]
        %v2745 = vld [vmem:[%s2743 + $0x4] sm:$0xf]
        %v2746 = vld [vmem:[%s2743 + $0x8] sm:$0xf]
        %v2747 = vld [vmem:[%s2743 + $0xc] sm:$0xf]
        %v2748 = vld [vmem:[%s2743 + $0x10] sm:$0xf]
        %v2749 = vld [vmem:[%s2743 + $0x14] sm:$0xf]
        %v2750 = vld [vmem:[%s2743 + $0x18] sm:$0xf]
        %v2751 = vld [vmem:[%s2743 + $0x1c] sm:$0xf]
        %v2752 = vld [vmem:[%s2743 + $0x20] sm:$0xf]
        %v2753 = vld [vmem:[%s2743 + $0x24] sm:$0xf]
        %v2754 = vld [vmem:[%s2743 + $0x28] sm:$0xf]
        %v2755 = vld [vmem:[%s2743 + $0x2c] sm:$0xf]
        %v2756 = vld [vmem:[%s2743 + $0x30] sm:$0xf]
        %v2757 = vld [vmem:[%s2743 + $0x34] sm:$0xf]
        %v2758 = vld [vmem:[%s2743 + $0x38] sm:$0xf]
        %v2759 = vld [vmem:[%s2743 + $0x3c] sm:$0xf]
        %s2760 = scalar_lea.vmem %s2, 5
        %v2761 = vld [vmem:[%s2760] sm:$0x1]
        %v2763 = vlaneseq
        %v2764 = vshrl.u32 %v2763, 7
        %v2765 = vsub.s32 0, %v2764
        %v2766 = vrot.slane %v2761, %v2765
        %v2784 = vunpack.c.l.b16 %v2744
        %v2785 = vunpack.c.l.b16 %v2745
        %v2786 = vunpack.c.l.b16 %v2746
        %v2787 = vunpack.c.l.b16 %v2747
        %v2788 = vunpack.c.l.b16 %v2748
        %v2789 = vunpack.c.l.b16 %v2749
        %v2790 = vunpack.c.l.b16 %v2750
        %v2791 = vunpack.c.l.b16 %v2751
        %v2792 = vunpack.c.l.b16 %v2752
        %v2793 = vunpack.c.l.b16 %v2753
        %v2794 = vunpack.c.l.b16 %v2754
        %v2795 = vunpack.c.l.b16 %v2755
        %v2796 = vunpack.c.l.b16 %v2756
        %v2797 = vunpack.c.l.b16 %v2757
        %v2798 = vunpack.c.l.b16 %v2758
        %v2799 = vunpack.c.l.b16 %v2759
        %v2800 = vpack.c.b16 %v2785, %v2784
        %v2801 = vpack.c.b16 %v2787, %v2786
        %v2802 = vpack.c.b16 %v2789, %v2788
        %v2803 = vpack.c.b16 %v2791, %v2790
        %v2804 = vpack.c.b16 %v2793, %v2792
        %v2805 = vpack.c.b16 %v2795, %v2794
        %v2806 = vpack.c.b16 %v2797, %v2796
        %v2807 = vpack.c.b16 %v2799, %v2798
        %2816 = vmatprep.subr.bf16.mxu0 0
        %2817 = vmatpush1.bf16.msra.mxu0 %v2800
        %2818 = vmatprep.subr.bf16.mxu0 0
        %2819 = vmatpush1.bf16.msra.mxu0 %v2801
        %2820 = vmatprep.subr.bf16.mxu0 0
        %2821 = vmatpush1.bf16.msra.mxu0 %v2802
        %2822 = vmatprep.subr.bf16.mxu0 0
        %2823 = vmatpush1.bf16.msra.mxu0 %v2803
        %2824 = vmatprep.subr.bf16.mxu0 0
        %2825 = vmatpush1.bf16.msra.mxu0 %v2804
        %2826 = vmatprep.subr.bf16.mxu0 0
        %2827 = vmatpush1.bf16.msra.mxu0 %v2805
        %2828 = vmatprep.subr.bf16.mxu0 0
        %2829 = vmatpush1.bf16.msra.mxu0 %v2806
        %2830 = vmatprep.subr.bf16.mxu0 0
        %2831 = vmatpush1.bf16.msra.mxu0 %v2807
        %2832 = vmatprep.subr.bf16.mxu0 0
        %2833 = vmatpush1.bf16.msra.mxu0 0
        %2834 = vmatprep.subr.bf16.mxu0 0
        %2835 = vmatpush1.bf16.msra.mxu0 0
        %2836 = vmatprep.subr.bf16.mxu0 0
        %2837 = vmatpush1.bf16.msra.mxu0 0
        %2838 = vmatprep.subr.bf16.mxu0 0
        %2839 = vmatpush1.bf16.msra.mxu0 0
        %2840 = vmatprep.subr.bf16.mxu0 0
        %2841 = vmatpush1.bf16.msra.mxu0 0
        %2842 = vmatprep.subr.bf16.mxu0 0
        %2843 = vmatpush1.bf16.msra.mxu0 0
        %2844 = vmatprep.subr.bf16.mxu0 0
        %2845 = vmatpush1.bf16.msra.mxu0 0
        %2846 = vmatprep.subr.bf16.mxu0 0
        %2847 = vmatpush1.bf16.msra.mxu0 0
        %2848 = vmatprep.mubr.bf16.mxu0 0
        %2849 = vmatmul.mubr.bf16.gmra.mrb[0].mxu0 %v2727
        %v2850 = vpop.f32.mrb[0].mxu0
        %v2851 = vadd.f32 %v2766, %v2850
        %v2852 = vpop.f32.mrb[0].mxu0
        %v2853 = vpop.f32.mrb[0].mxu0
        %v2854 = vadd.f32 %v2766, %v2853
        %v2855 = vpop.f32.mrb[0].mxu0
        %2856 = vmatprep.mubr.bf16.mxu0 0
        %2857 = vmatmul.mubr.bf16.gmra.mrb[0].mxu0 %v2728
        %v2858 = vpop.f32.mrb[0].mxu0
        %v2859 = vadd.f32 %v2766, %v2858
        %v2860 = vpop.f32.mrb[0].mxu0
        %v2861 = vpop.f32.mrb[0].mxu0
        %v2862 = vadd.f32 %v2766, %v2861
        %v2863 = vpop.f32.mrb[0].mxu0
        %2864 = vmatprep.mubr.bf16.mxu0 0
        %2865 = vmatmul.mubr.bf16.gmra.mrb[0].mxu0 %v2729
        %v2866 = vpop.f32.mrb[0].mxu0
        %v2867 = vadd.f32 %v2766, %v2866
        %v2868 = vpop.f32.mrb[0].mxu0
        %v2869 = vpop.f32.mrb[0].mxu0
        %v2870 = vadd.f32 %v2766, %v2869
        %v2871 = vpop.f32.mrb[0].mxu0
        %2872 = vmatprep.mubr.bf16.mxu0 0
        %2873 = vmatmul.mubr.bf16.gmra.mrb[0].mxu0 %v2730
        %v2874 = vpop.f32.mrb[0].mxu0
        %v2875 = vadd.f32 %v2766, %v2874
        %v2876 = vpop.f32.mrb[0].mxu0
        %v2877 = vpop.f32.mrb[0].mxu0
        %v2878 = vadd.f32 %v2766, %v2877
        %v2879 = vpop.f32.mrb[0].mxu0
        %2880 = vmatprep.mubr.bf16.mxu0 0
        %2881 = vmatmul.mubr.bf16.gmra.mrb[0].mxu0 %v2731
        %v2882 = vpop.f32.mrb[0].mxu0
        %v2883 = vadd.f32 %v2766, %v2882
        %v2884 = vpop.f32.mrb[0].mxu0
        %v2885 = vpop.f32.mrb[0].mxu0
        %v2886 = vadd.f32 %v2766, %v2885
        %v2887 = vpop.f32.mrb[0].mxu0
        %2888 = vmatprep.mubr.bf16.mxu0 0
        %2889 = vmatmul.mubr.bf16.gmra.mrb[0].mxu0 %v2732
        %v2890 = vpop.f32.mrb[0].mxu0
        %v2891 = vadd.f32 %v2766, %v2890
        %v2892 = vpop.f32.mrb[0].mxu0
        %v2893 = vpop.f32.mrb[0].mxu0
        %v2894 = vadd.f32 %v2766, %v2893
        %v2895 = vpop.f32.mrb[0].mxu0
        %2896 = vmatprep.mubr.bf16.mxu0 0
        %2897 = vmatmul.mubr.bf16.gmra.mrb[0].mxu0 %v2733
        %v2898 = vpop.f32.mrb[0].mxu0
        %v2899 = vadd.f32 %v2766, %v2898
        %v2900 = vpop.f32.mrb[0].mxu0
        %v2901 = vpop.f32.mrb[0].mxu0
        %v2902 = vadd.f32 %v2766, %v2901
        %v2903 = vpop.f32.mrb[0].mxu0
        %2904 = vmatprep.mubr.bf16.mxu0 0
        %2905 = vmatmul.mubr.bf16.gmra.mrb[0].mxu0 %v2734
        %v2906 = vpop.f32.mrb[0].mxu0
        %v2907 = vadd.f32 %v2766, %v2906
        %v2908 = vpop.f32.mrb[0].mxu0
        %v2909 = vpop.f32.mrb[0].mxu0
        %v2910 = vadd.f32 %v2766, %v2909
        %v2911 = vpop.f32.mrb[0].mxu0
        %2912 = vmatprep.mubr.bf16.mxu0 0
        %2913 = vmatmul.mubr.bf16.gmra.mrb[0].mxu0 %v2735
        %v2914 = vpop.f32.mrb[0].mxu0
        %v2915 = vadd.f32 %v2766, %v2914
        %v2916 = vpop.f32.mrb[0].mxu0
        %v2917 = vpop.f32.mrb[0].mxu0
        %v2918 = vadd.f32 %v2766, %v2917
        %v2919 = vpop.f32.mrb[0].mxu0
        %2920 = vmatprep.mubr.bf16.mxu0 0
        %2921 = vmatmul.mubr.bf16.gmra.mrb[0].mxu0 %v2736
        %v2922 = vpop.f32.mrb[0].mxu0
        %v2923 = vadd.f32 %v2766, %v2922
        %v2924 = vpop.f32.mrb[0].mxu0
        %v2925 = vpop.f32.mrb[0].mxu0
        %v2926 = vadd.f32 %v2766, %v2925
        %v2927 = vpop.f32.mrb[0].mxu0
        %2928 = vmatprep.mubr.bf16.mxu0 0
        %2929 = vmatmul.mubr.bf16.gmra.mrb[0].mxu0 %v2737
        %v2930 = vpop.f32.mrb[0].mxu0
        %v2931 = vadd.f32 %v2766, %v2930
        %v2932 = vpop.f32.mrb[0].mxu0
        %v2933 = vpop.f32.mrb[0].mxu0
        %v2934 = vadd.f32 %v2766, %v2933
        %v2935 = vpop.f32.mrb[0].mxu0
        %2936 = vmatprep.mubr.bf16.mxu0 0
        %2937 = vmatmul.mubr.bf16.gmra.mrb[0].mxu0 %v2738
        %v2938 = vpop.f32.mrb[0].mxu0
        %v2939 = vadd.f32 %v2766, %v2938
        %v2940 = vpop.f32.mrb[0].mxu0
        %v2941 = vpop.f32.mrb[0].mxu0
        %v2942 = vadd.f32 %v2766, %v2941
        %v2943 = vpop.f32.mrb[0].mxu0
        %2944 = vmatprep.mubr.bf16.mxu0 0
        %2945 = vmatmul.mubr.bf16.gmra.mrb[0].mxu0 %v2739
        %v2946 = vpop.f32.mrb[0].mxu0
        %v2947 = vadd.f32 %v2766, %v2946
        %v2948 = vpop.f32.mrb[0].mxu0
        %v2949 = vpop.f32.mrb[0].mxu0
        %v2950 = vadd.f32 %v2766, %v2949
        %v2951 = vpop.f32.mrb[0].mxu0
        %2952 = vmatprep.mubr.bf16.mxu0 0
        %2953 = vmatmul.mubr.bf16.gmra.mrb[0].mxu0 %v2740
        %v2954 = vpop.f32.mrb[0].mxu0
        %v2955 = vadd.f32 %v2766, %v2954
        %v2956 = vpop.f32.mrb[0].mxu0
        %v2957 = vpop.f32.mrb[0].mxu0
        %v2958 = vadd.f32 %v2766, %v2957
        %v2959 = vpop.f32.mrb[0].mxu0
        %2960 = vmatprep.mubr.bf16.mxu0 0
        %2961 = vmatmul.mubr.bf16.gmra.mrb[0].mxu0 %v2741
        %v2962 = vpop.f32.mrb[0].mxu0
        %v2963 = vadd.f32 %v2766, %v2962
        %v2964 = vpop.f32.mrb[0].mxu0
        %v2965 = vpop.f32.mrb[0].mxu0
        %v2966 = vadd.f32 %v2766, %v2965
        %v2967 = vpop.f32.mrb[0].mxu0
        %2968 = vmatprep.mubr.bf16.mxu0 0
        %2969 = vmatmul.mubr.bf16.gmra.mrb[0].mxu0 %v2742
        %v2970 = vpop.f32.mrb[0].mxu0
        %v2971 = vadd.f32 %v2766, %v2970
        %v2972 = vpop.f32.mrb[0].mxu0
        %v2973 = vpop.f32.mrb[0].mxu0
        %v2974 = vadd.f32 %v2766, %v2973
        %v2975 = vpop.f32.mrb[0].mxu0
        %2976 = vdwg.mxu0
        %vm2977 = vcmp.gt.f32.partialorder %v2851, 0.0
        %vm2978 = vcmp.gt.f32.partialorder %v2854, 0.0
        %vm2979 = vcmp.gt.f32.partialorder %v2859, 0.0
        %vm2980 = vcmp.gt.f32.partialorder %v2862, 0.0
        %vm2981 = vcmp.gt.f32.partialorder %v2867, 0.0
        %vm2982 = vcmp.gt.f32.partialorder %v2870, 0.0
        %vm2983 = vcmp.gt.f32.partialorder %v2875, 0.0
        %vm2984 = vcmp.gt.f32.partialorder %v2878, 0.0
        %vm2985 = vcmp.gt.f32.partialorder %v2883, 0.0
        %vm2986 = vcmp.gt.f32.partialorder %v2886, 0.0
        %vm2987 = vcmp.gt.f32.partialorder %v2891, 0.0
        %vm2988 = vcmp.gt.f32.partialorder %v2894, 0.0
        %vm2989 = vcmp.gt.f32.partialorder %v2899, 0.0
        %vm2990 = vcmp.gt.f32.partialorder %v2902, 0.0
        %vm2991 = vcmp.gt.f32.partialorder %v2907, 0.0
        %vm2992 = vcmp.gt.f32.partialorder %v2910, 0.0
        %vm2993 = vcmp.gt.f32.partialorder %v2915, 0.0
        %vm2994 = vcmp.gt.f32.partialorder %v2918, 0.0
        %vm2995 = vcmp.gt.f32.partialorder %v2923, 0.0
        %vm2996 = vcmp.gt.f32.partialorder %v2926, 0.0
        %vm2997 = vcmp.gt.f32.partialorder %v2931, 0.0
        %vm2998 = vcmp.gt.f32.partialorder %v2934, 0.0
        %vm2999 = vcmp.gt.f32.partialorder %v2939, 0.0
        %vm3000 = vcmp.gt.f32.partialorder %v2942, 0.0
        %vm3001 = vcmp.gt.f32.partialorder %v2947, 0.0
        %vm3002 = vcmp.gt.f32.partialorder %v2950, 0.0
        %vm3003 = vcmp.gt.f32.partialorder %v2955, 0.0
        %vm3004 = vcmp.gt.f32.partialorder %v2958, 0.0
        %vm3005 = vcmp.gt.f32.partialorder %v2963, 0.0
        %vm3006 = vcmp.gt.f32.partialorder %v2966, 0.0
        %vm3007 = vcmp.gt.f32.partialorder %v2971, 0.0
        %vm3008 = vcmp.gt.f32.partialorder %v2974, 0.0
        %v3009 = vmul.f32 %v2851, 0.01
        %v3010 = vmul.f32 %v2854, 0.01
        %v3011 = vmul.f32 %v2859, 0.01
        %v3012 = vmul.f32 %v2862, 0.01
        %v3013 = vmul.f32 %v2867, 0.01
        %v3014 = vmul.f32 %v2870, 0.01
        %v3015 = vmul.f32 %v2875, 0.01
        %v3016 = vmul.f32 %v2878, 0.01
        %v3017 = vmul.f32 %v2883, 0.01
        %v3018 = vmul.f32 %v2886, 0.01
        %v3019 = vmul.f32 %v2891, 0.01
        %v3020 = vmul.f32 %v2894, 0.01
        %v3021 = vmul.f32 %v2899, 0.01
        %v3022 = vmul.f32 %v2902, 0.01
        %v3023 = vmul.f32 %v2907, 0.01
        %v3024 = vmul.f32 %v2910, 0.01
        %v3025 = vmul.f32 %v2915, 0.01
        %v3026 = vmul.f32 %v2918, 0.01
        %v3027 = vmul.f32 %v2923, 0.01
        %v3028 = vmul.f32 %v2926, 0.01
        %v3029 = vmul.f32 %v2931, 0.01
        %v3030 = vmul.f32 %v2934, 0.01
        %v3031 = vmul.f32 %v2939, 0.01
        %v3032 = vmul.f32 %v2942, 0.01
        %v3033 = vmul.f32 %v2947, 0.01
        %v3034 = vmul.f32 %v2950, 0.01
        %v3035 = vmul.f32 %v2955, 0.01
        %v3036 = vmul.f32 %v2958, 0.01
        %v3037 = vmul.f32 %v2963, 0.01
        %v3038 = vmul.f32 %v2966, 0.01
        %v3039 = vmul.f32 %v2971, 0.01
        %v3040 = vmul.f32 %v2974, 0.01
        %v3041 = vsel %vm2977, %v2851, %v3009
        %v3042 = vsel %vm2978, %v2854, %v3010
        %v3043 = vsel %vm2979, %v2859, %v3011
        %v3044 = vsel %vm2980, %v2862, %v3012
        %v3045 = vsel %vm2981, %v2867, %v3013
        %v3046 = vsel %vm2982, %v2870, %v3014
        %v3047 = vsel %vm2983, %v2875, %v3015
        %v3048 = vsel %vm2984, %v2878, %v3016
        %v3049 = vsel %vm2985, %v2883, %v3017
        %v3050 = vsel %vm2986, %v2886, %v3018
        %v3051 = vsel %vm2987, %v2891, %v3019
        %v3052 = vsel %vm2988, %v2894, %v3020
        %v3053 = vsel %vm2989, %v2899, %v3021
        %v3054 = vsel %vm2990, %v2902, %v3022
        %v3055 = vsel %vm2991, %v2907, %v3023
        %v3056 = vsel %vm2992, %v2910, %v3024
        %v3057 = vsel %vm2993, %v2915, %v3025
        %v3058 = vsel %vm2994, %v2918, %v3026
        %v3059 = vsel %vm2995, %v2923, %v3027
        %v3060 = vsel %vm2996, %v2926, %v3028
        %v3061 = vsel %vm2997, %v2931, %v3029
        %v3062 = vsel %vm2998, %v2934, %v3030
        %v3063 = vsel %vm2999, %v2939, %v3031
        %v3064 = vsel %vm3000, %v2942, %v3032
        %v3065 = vsel %vm3001, %v2947, %v3033
        %v3066 = vsel %vm3002, %v2950, %v3034
        %v3067 = vsel %vm3003, %v2955, %v3035
        %v3068 = vsel %vm3004, %v2958, %v3036
        %v3069 = vsel %vm3005, %v2963, %v3037
        %v3070 = vsel %vm3006, %v2966, %v3038
        %v3071 = vsel %vm3007, %v2971, %v3039
        %v3072 = vsel %vm3008, %v2974, %v3040
        %v3073 = vpack.c.bf16 %v3042, %v3041
        %v3074 = vpack.c.bf16 %v3044, %v3043
        %v3075 = vpack.c.bf16 %v3046, %v3045
        %v3076 = vpack.c.bf16 %v3048, %v3047
        %v3077 = vpack.c.bf16 %v3050, %v3049
        %v3078 = vpack.c.bf16 %v3052, %v3051
        %v3079 = vpack.c.bf16 %v3054, %v3053
        %v3080 = vpack.c.bf16 %v3056, %v3055
        %v3081 = vpack.c.bf16 %v3058, %v3057
        %v3082 = vpack.c.bf16 %v3060, %v3059
        %v3083 = vpack.c.bf16 %v3062, %v3061
        %v3084 = vpack.c.bf16 %v3064, %v3063
        %v3085 = vpack.c.bf16 %v3066, %v3065
        %v3086 = vpack.c.bf16 %v3068, %v3067
        %v3087 = vpack.c.bf16 %v3070, %v3069
        %v3088 = vpack.c.bf16 %v3072, %v3071
        %s3089 = scalar_lea.vmem [#allocation5], 384
        %v3090 = vld [vmem:[%s3089] sm:$0xf]
        %v3091 = vld [vmem:[%s3089 + $0x4] sm:$0xf]
        %v3092 = vld [vmem:[%s3089 + $0x8] sm:$0xf]
        %v3093 = vld [vmem:[%s3089 + $0xc] sm:$0xf]
        %v3094 = vld [vmem:[%s3089 + $0x10] sm:$0xf]
        %v3095 = vld [vmem:[%s3089 + $0x14] sm:$0xf]
        %v3096 = vld [vmem:[%s3089 + $0x18] sm:$0xf]
        %v3097 = vld [vmem:[%s3089 + $0x1c] sm:$0xf]
        %v3098 = vld [vmem:[%s3089 + $0x20] sm:$0xf]
        %v3099 = vld [vmem:[%s3089 + $0x24] sm:$0xf]
        %v3100 = vld [vmem:[%s3089 + $0x28] sm:$0xf]
        %v3101 = vld [vmem:[%s3089 + $0x2c] sm:$0xf]
        %v3102 = vld [vmem:[%s3089 + $0x30] sm:$0xf]
        %v3103 = vld [vmem:[%s3089 + $0x34] sm:$0xf]
        %v3104 = vld [vmem:[%s3089 + $0x38] sm:$0xf]
        %v3105 = vld [vmem:[%s3089 + $0x3c] sm:$0xf]
        %s3106 = scalar_lea.vmem %s2, 6
        %v3107 = vld [vmem:[%s3106] sm:$0x1]
        %v3109 = vlaneseq
        %v3110 = vshrl.u32 %v3109, 7
        %v3111 = vsub.s32 0, %v3110
        %v3112 = vrot.slane %v3107, %v3111
        %v3130 = vunpack.c.l.b16 %v3090
        %v3131 = vunpack.c.l.b16 %v3091
        %v3132 = vunpack.c.l.b16 %v3092
        %v3133 = vunpack.c.l.b16 %v3093
        %v3134 = vunpack.c.l.b16 %v3094
        %v3135 = vunpack.c.l.b16 %v3095
        %v3136 = vunpack.c.l.b16 %v3096
        %v3137 = vunpack.c.l.b16 %v3097
        %v3138 = vunpack.c.l.b16 %v3098
        %v3139 = vunpack.c.l.b16 %v3099
        %v3140 = vunpack.c.l.b16 %v3100
        %v3141 = vunpack.c.l.b16 %v3101
        %v3142 = vunpack.c.l.b16 %v3102
        %v3143 = vunpack.c.l.b16 %v3103
        %v3144 = vunpack.c.l.b16 %v3104
        %v3145 = vunpack.c.l.b16 %v3105
        %v3146 = vpack.c.b16 %v3131, %v3130
        %v3147 = vpack.c.b16 %v3133, %v3132
        %v3148 = vpack.c.b16 %v3135, %v3134
        %v3149 = vpack.c.b16 %v3137, %v3136
        %v3150 = vpack.c.b16 %v3139, %v3138
        %v3151 = vpack.c.b16 %v3141, %v3140
        %v3152 = vpack.c.b16 %v3143, %v3142
        %v3153 = vpack.c.b16 %v3145, %v3144
        %3162 = vmatprep.subr.bf16.mxu0 0
        %3163 = vmatpush1.bf16.msra.mxu0 %v3146
        %3164 = vmatprep.subr.bf16.mxu0 0
        %3165 = vmatpush1.bf16.msra.mxu0 %v3147
        %3166 = vmatprep.subr.bf16.mxu0 0
        %3167 = vmatpush1.bf16.msra.mxu0 %v3148
        %3168 = vmatprep.subr.bf16.mxu0 0
        %3169 = vmatpush1.bf16.msra.mxu0 %v3149
        %3170 = vmatprep.subr.bf16.mxu0 0
        %3171 = vmatpush1.bf16.msra.mxu0 %v3150
        %3172 = vmatprep.subr.bf16.mxu0 0
        %3173 = vmatpush1.bf16.msra.mxu0 %v3151
        %3174 = vmatprep.subr.bf16.mxu0 0
        %3175 = vmatpush1.bf16.msra.mxu0 %v3152
        %3176 = vmatprep.subr.bf16.mxu0 0
        %3177 = vmatpush1.bf16.msra.mxu0 %v3153
        %3178 = vmatprep.subr.bf16.mxu0 0
        %3179 = vmatpush1.bf16.msra.mxu0 0
        %3180 = vmatprep.subr.bf16.mxu0 0
        %3181 = vmatpush1.bf16.msra.mxu0 0
        %3182 = vmatprep.subr.bf16.mxu0 0
        %3183 = vmatpush1.bf16.msra.mxu0 0
        %3184 = vmatprep.subr.bf16.mxu0 0
        %3185 = vmatpush1.bf16.msra.mxu0 0
        %3186 = vmatprep.subr.bf16.mxu0 0
        %3187 = vmatpush1.bf16.msra.mxu0 0
        %3188 = vmatprep.subr.bf16.mxu0 0
        %3189 = vmatpush1.bf16.msra.mxu0 0
        %3190 = vmatprep.subr.bf16.mxu0 0
        %3191 = vmatpush1.bf16.msra.mxu0 0
        %3192 = vmatprep.subr.bf16.mxu0 0
        %3193 = vmatpush1.bf16.msra.mxu0 0
        %3194 = vmatprep.mubr.bf16.mxu0 0
        %3195 = vmatmul.mubr.bf16.gmra.mrb[0].mxu0 %v3073
        %v3196 = vpop.f32.mrb[0].mxu0
        %v3197 = vadd.f32 %v3112, %v3196
        %v3198 = vpop.f32.mrb[0].mxu0
        %v3199 = vpop.f32.mrb[0].mxu0
        %v3200 = vadd.f32 %v3112, %v3199
        %v3201 = vpop.f32.mrb[0].mxu0
        %3202 = vmatprep.mubr.bf16.mxu0 0
        %3203 = vmatmul.mubr.bf16.gmra.mrb[0].mxu0 %v3074
        %v3204 = vpop.f32.mrb[0].mxu0
        %v3205 = vadd.f32 %v3112, %v3204
        %v3206 = vpop.f32.mrb[0].mxu0
        %v3207 = vpop.f32.mrb[0].mxu0
        %v3208 = vadd.f32 %v3112, %v3207
        %v3209 = vpop.f32.mrb[0].mxu0
        %3210 = vmatprep.mubr.bf16.mxu0 0
        %3211 = vmatmul.mubr.bf16.gmra.mrb[0].mxu0 %v3075
        %v3212 = vpop.f32.mrb[0].mxu0
        %v3213 = vadd.f32 %v3112, %v3212
        %v3214 = vpop.f32.mrb[0].mxu0
        %v3215 = vpop.f32.mrb[0].mxu0
        %v3216 = vadd.f32 %v3112, %v3215
        %v3217 = vpop.f32.mrb[0].mxu0
        %3218 = vmatprep.mubr.bf16.mxu0 0
        %3219 = vmatmul.mubr.bf16.gmra.mrb[0].mxu0 %v3076
        %v3220 = vpop.f32.mrb[0].mxu0
        %v3221 = vadd.f32 %v3112, %v3220
        %v3222 = vpop.f32.mrb[0].mxu0
        %v3223 = vpop.f32.mrb[0].mxu0
        %v3224 = vadd.f32 %v3112, %v3223
        %v3225 = vpop.f32.mrb[0].mxu0
        %3226 = vmatprep.mubr.bf16.mxu0 0
        %3227 = vmatmul.mubr.bf16.gmra.mrb[0].mxu0 %v3077
        %v3228 = vpop.f32.mrb[0].mxu0
        %v3229 = vadd.f32 %v3112, %v3228
        %v3230 = vpop.f32.mrb[0].mxu0
        %v3231 = vpop.f32.mrb[0].mxu0
        %v3232 = vadd.f32 %v3112, %v3231
        %v3233 = vpop.f32.mrb[0].mxu0
        %3234 = vmatprep.mubr.bf16.mxu0 0
        %3235 = vmatmul.mubr.bf16.gmra.mrb[0].mxu0 %v3078
        %v3236 = vpop.f32.mrb[0].mxu0
        %v3237 = vadd.f32 %v3112, %v3236
        %v3238 = vpop.f32.mrb[0].mxu0
        %v3239 = vpop.f32.mrb[0].mxu0
        %v3240 = vadd.f32 %v3112, %v3239
        %v3241 = vpop.f32.mrb[0].mxu0
        %3242 = vmatprep.mubr.bf16.mxu0 0
        %3243 = vmatmul.mubr.bf16.gmra.mrb[0].mxu0 %v3079
        %v3244 = vpop.f32.mrb[0].mxu0
        %v3245 = vadd.f32 %v3112, %v3244
        %v3246 = vpop.f32.mrb[0].mxu0
        %v3247 = vpop.f32.mrb[0].mxu0
        %v3248 = vadd.f32 %v3112, %v3247
        %v3249 = vpop.f32.mrb[0].mxu0
        %3250 = vmatprep.mubr.bf16.mxu0 0
        %3251 = vmatmul.mubr.bf16.gmra.mrb[0].mxu0 %v3080
        %v3252 = vpop.f32.mrb[0].mxu0
        %v3253 = vadd.f32 %v3112, %v3252
        %v3254 = vpop.f32.mrb[0].mxu0
        %v3255 = vpop.f32.mrb[0].mxu0
        %v3256 = vadd.f32 %v3112, %v3255
        %v3257 = vpop.f32.mrb[0].mxu0
        %3258 = vmatprep.mubr.bf16.mxu0 0
        %3259 = vmatmul.mubr.bf16.gmra.mrb[0].mxu0 %v3081
        %v3260 = vpop.f32.mrb[0].mxu0
        %v3261 = vadd.f32 %v3112, %v3260
        %v3262 = vpop.f32.mrb[0].mxu0
        %v3263 = vpop.f32.mrb[0].mxu0
        %v3264 = vadd.f32 %v3112, %v3263
        %v3265 = vpop.f32.mrb[0].mxu0
        %3266 = vmatprep.mubr.bf16.mxu0 0
        %3267 = vmatmul.mubr.bf16.gmra.mrb[0].mxu0 %v3082
        %v3268 = vpop.f32.mrb[0].mxu0
        %v3269 = vadd.f32 %v3112, %v3268
        %v3270 = vpop.f32.mrb[0].mxu0
        %v3271 = vpop.f32.mrb[0].mxu0
        %v3272 = vadd.f32 %v3112, %v3271
        %v3273 = vpop.f32.mrb[0].mxu0
        %3274 = vmatprep.mubr.bf16.mxu0 0
        %3275 = vmatmul.mubr.bf16.gmra.mrb[0].mxu0 %v3083
        %v3276 = vpop.f32.mrb[0].mxu0
        %v3277 = vadd.f32 %v3112, %v3276
        %v3278 = vpop.f32.mrb[0].mxu0
        %v3279 = vpop.f32.mrb[0].mxu0
        %v3280 = vadd.f32 %v3112, %v3279
        %v3281 = vpop.f32.mrb[0].mxu0
        %3282 = vmatprep.mubr.bf16.mxu0 0
        %3283 = vmatmul.mubr.bf16.gmra.mrb[0].mxu0 %v3084
        %v3284 = vpop.f32.mrb[0].mxu0
        %v3285 = vadd.f32 %v3112, %v3284
        %v3286 = vpop.f32.mrb[0].mxu0
        %v3287 = vpop.f32.mrb[0].mxu0
        %v3288 = vadd.f32 %v3112, %v3287
        %v3289 = vpop.f32.mrb[0].mxu0
        %3290 = vmatprep.mubr.bf16.mxu0 0
        %3291 = vmatmul.mubr.bf16.gmra.mrb[0].mxu0 %v3085
        %v3292 = vpop.f32.mrb[0].mxu0
        %v3293 = vadd.f32 %v3112, %v3292
        %v3294 = vpop.f32.mrb[0].mxu0
        %v3295 = vpop.f32.mrb[0].mxu0
        %v3296 = vadd.f32 %v3112, %v3295
        %v3297 = vpop.f32.mrb[0].mxu0
        %3298 = vmatprep.mubr.bf16.mxu0 0
        %3299 = vmatmul.mubr.bf16.gmra.mrb[0].mxu0 %v3086
        %v3300 = vpop.f32.mrb[0].mxu0
        %v3301 = vadd.f32 %v3112, %v3300
        %v3302 = vpop.f32.mrb[0].mxu0
        %v3303 = vpop.f32.mrb[0].mxu0
        %v3304 = vadd.f32 %v3112, %v3303
        %v3305 = vpop.f32.mrb[0].mxu0
        %3306 = vmatprep.mubr.bf16.mxu0 0
        %3307 = vmatmul.mubr.bf16.gmra.mrb[0].mxu0 %v3087
        %v3308 = vpop.f32.mrb[0].mxu0
        %v3309 = vadd.f32 %v3112, %v3308
        %v3310 = vpop.f32.mrb[0].mxu0
        %v3311 = vpop.f32.mrb[0].mxu0
        %v3312 = vadd.f32 %v3112, %v3311
        %v3313 = vpop.f32.mrb[0].mxu0
        %3314 = vmatprep.mubr.bf16.mxu0 0
        %3315 = vmatmul.mubr.bf16.gmra.mrb[0].mxu0 %v3088
        %v3316 = vpop.f32.mrb[0].mxu0
        %v3317 = vadd.f32 %v3112, %v3316
        %v3318 = vpop.f32.mrb[0].mxu0
        %v3319 = vpop.f32.mrb[0].mxu0
        %v3320 = vadd.f32 %v3112, %v3319
        %v3321 = vpop.f32.mrb[0].mxu0
        %3322 = vdwg.mxu0
        %3323 = vst [vmem:[%s309] sm:$0xff] %v3197
        %3324 = vst [vmem:[%s309 + $0x8] sm:$0xff] %v3200
        %3325 = vst [vmem:[%s309 + $0x10] sm:$0xff] %v3205
        %3326 = vst [vmem:[%s309 + $0x18] sm:$0xff] %v3208
        %3327 = vst [vmem:[%s309 + $0x20] sm:$0xff] %v3213
        %3328 = vst [vmem:[%s309 + $0x28] sm:$0xff] %v3216
        %3329 = vst [vmem:[%s309 + $0x30] sm:$0xff] %v3221
        %3330 = vst [vmem:[%s309 + $0x38] sm:$0xff] %v3224
        %3331 = vst [vmem:[%s309 + $0x40] sm:$0xff] %v3229
        %3332 = vst [vmem:[%s309 + $0x48] sm:$0xff] %v3232
        %3333 = vst [vmem:[%s309 + $0x50] sm:$0xff] %v3237
        %3334 = vst [vmem:[%s309 + $0x58] sm:$0xff] %v3240
        %3335 = vst [vmem:[%s309 + $0x60] sm:$0xff] %v3245
        %3336 = vst [vmem:[%s309 + $0x68] sm:$0xff] %v3248
        %3337 = vst [vmem:[%s309 + $0x70] sm:$0xff] %v3253
        %3338 = vst [vmem:[%s309 + $0x78] sm:$0xff] %v3256
        %3339 = vst [vmem:[%s309 + $0x80] sm:$0xff] %v3261
        %3340 = vst [vmem:[%s309 + $0x88] sm:$0xff] %v3264
        %3341 = vst [vmem:[%s309 + $0x90] sm:$0xff] %v3269
        %3342 = vst [vmem:[%s309 + $0x98] sm:$0xff] %v3272
        %3343 = vst [vmem:[%s309 + $0xa0] sm:$0xff] %v3277
        %3344 = vst [vmem:[%s309 + $0xa8] sm:$0xff] %v3280
        %3345 = vst [vmem:[%s309 + $0xb0] sm:$0xff] %v3285
        %3346 = vst [vmem:[%s309 + $0xb8] sm:$0xff] %v3288
        %3347 = vst [vmem:[%s309 + $0xc0] sm:$0xff] %v3293
        %3348 = vst [vmem:[%s309 + $0xc8] sm:$0xff] %v3296
        %3349 = vst [vmem:[%s309 + $0xd0] sm:$0xff] %v3301
        %3350 = vst [vmem:[%s309 + $0xd8] sm:$0xff] %v3304
        %3351 = vst [vmem:[%s309 + $0xe0] sm:$0xff] %v3309
        %3352 = vst [vmem:[%s309 + $0xe8] sm:$0xff] %v3312
        %3353 = vst [vmem:[%s309 + $0xf0] sm:$0xff] %v3317
        %3354 = vst [vmem:[%s309 + $0xf8] sm:$0xff] %v3320
        %s3355 = sand.u32 %s146, 1
        %s3356 = scalar_lea.sflag [#allocation4], %s3355
        %s3357 = sand.u32 %s146, 1
        %s3358 = smul.addr %s3357, 512
        %s3359 = scalar_lea.vmem [#allocation8], %s3358
        %s3360 = sand.u32 %s172, 1
        %s3361 = scalar_lea.sflag [#allocation10], %s3360
        %s3362 = sand.u32 %s172, 1
        %s3363 = smul.addr %s3362, 256
        %s3364 = scalar_lea.vmem [#allocation9], %s3363
        // Predicated region
        $region53: #{tpu_custom_call.1} parent=39 // pred_check
          %p3365 = pneg %p156
        $region54: #{tpu_custom_call.1} parent=39 // pred_check_branch
          %3367 = sbr.rel (%p3365) target = $region56
        $region55: #{tpu_custom_call.1} parent=39 // pred_region
          %s3368 = smul.u32 32, %s28
          %s3370 = ssub.s32 8192, 8192
          %3371 = vsyncadd %s3356, %s3370
          %s3372 = smul.addr %s3368, 2
          %s3373 = smul.addr %s3372, 128
          %s3374 = scalar_lea.hbm %s5, %s3373
          %s3375 = sshll.u32 %s3359, 4
          %s3376 = int_to_ptr.vmem [resolvable:$true] %s3375
          %3381 = dma.vmem_to_hbm [thread:$0]  %s3376, 8192, %s3374, %s3356, 256, 256, 16
        $region56: #{tpu_custom_call.1} parent=39 // pred_fallthru
          _
        // Predicated region
        $region57: #{tpu_custom_call.1} parent=39 // pred_check
          %p3382 = pneg %p182
        $region58: #{tpu_custom_call.1} parent=39 // pred_check_branch
          %3384 = sbr.rel (%p3382) target = $region60
        $region59: #{tpu_custom_call.1} parent=39 // pred_region
          %s3385 = smul.u32 32, %s28
          %s3387 = ssub.s32 4096, 4096
          %3388 = vsyncadd %s3361, %s3387
          %s3389 = smul.addr %s3385, 128
          %s3390 = scalar_lea.hbm %s6, %s3389
          %s3391 = sshll.u32 %s3364, 4
          %s3392 = int_to_ptr.vmem [resolvable:$true] %s3391
          %3397 = dma.vmem_to_hbm [thread:$0]  %s3392, 4096, %s3390, %s3361, 128, 128, 8
        $region60: #{tpu_custom_call.1} parent=39 // pred_fallthru
          _
      $region40: #{tpu_custom_call.1} parent=5 // pred_fallthru
        _
      %p3398 = scmp.le.s32.totalorder 2, %s23
      // Predicated region
      $region61: #{tpu_custom_call.1} parent=5 // pred_check
        %p3399 = pneg %p3398
      $region62: #{tpu_custom_call.1} parent=5 // pred_check_branch
        %3401 = sbr.rel (%p3399) target = $region64
      $region63: #{tpu_custom_call.1} parent=5 // pred_region
        %s3402 = ssub.s32 %s23, 2
        // Predicated region
        $region65: #{tpu_custom_call.1} parent=63 // pred_check
          %p3403 = pneg %p162
        $region66: #{tpu_custom_call.1} parent=63 // pred_check_branch
          %3405 = sbr.rel (%p3403) target = $region68
        $region67: #{tpu_custom_call.1} parent=63 // pred_region
          %s3406 = sand.u32 %s147, 1
          %s3407 = scalar_lea.sflag [#allocation4], %s3406
          %s3408 = sand.u32 %s147, 1
          %s3409 = smul.addr %s3408, 512
          %s3410 = scalar_lea.vmem [#allocation8], %s3409
          %3411 = dma.done %s3407, 8192
        $region68: #{tpu_custom_call.1} parent=63 // pred_fallthru
          _
        // Predicated region
        $region69: #{tpu_custom_call.1} parent=63 // pred_check
          %p3412 = pneg %p188
        $region70: #{tpu_custom_call.1} parent=63 // pred_check_branch
          %3414 = sbr.rel (%p3412) target = $region72
        $region71: #{tpu_custom_call.1} parent=63 // pred_region
          %s3415 = sand.u32 %s173, 1
          %s3416 = scalar_lea.sflag [#allocation10], %s3415
          %s3417 = sand.u32 %s173, 1
          %s3418 = smul.addr %s3417, 256
          %s3419 = scalar_lea.vmem [#allocation9], %s3418
          %3420 = dma.done %s3416, 4096
        $region72: #{tpu_custom_call.1} parent=63 // pred_fallthru
          _
      $region64: #{tpu_custom_call.1} parent=5 // pred_fallthru
        _
    $region6: #{tpu_custom_call.1} parent=1 // loop_footer
      %s27 = sadd.s32 1, %s23
    $region7: #{tpu_custom_call.1} parent=1 // loop_footer_branch
      %22 = sbr.rel target = $region3
    $region8: #{tpu_custom_call.1} parent=1 // loop_exit
      _
    %3421 = vsyncpa [#allocation3], 1
    %s3422 = scalar_lea.sflag [#allocation3], 1
    %3423 = vsyncpa %s3422, 1
    %3424 = vsyncpa [#allocation6], 1
    %3425 = vsyncpa [#allocation4], 1
    %s3426 = scalar_lea.sflag [#allocation4], 1
    %3427 = vsyncpa %s3426, 1
    %3428 = vsyncpa [#allocation10], 1
    %s3429 = scalar_lea.sflag [#allocation10], 1
    %3430 = vsyncpa %s3429, 1

</llo_original>
